<compile_context>
chip_gen: v6e
topology: v6e:2x2x1
jax: 0.10.0
libtpu: 0.0.40
codegen_flags: <defaults>
</compile_context>

<pallas_src>
import math
import jax
import jax.numpy as jnp
from jax.experimental import pallas as pl
from jax.experimental.pallas import tpu as pltpu


def psp_kernel(a_ref, v_ref,
               vw1_ref, vw2_ref, vwfc_ref,
               aw1_ref, aw2_ref, awfc_ref,
               lng_ref, lnb_ref, thr_ref,
               fuse_ref, vpsp_ref, apsp_ref):
    f32 = jnp.float32
    bb, ta, da = a_ref.shape
    _, tv, dv = v_ref.shape

    thr = thr_ref[0]                        # scalar threshold, read from SMEM
    a3 = a_ref[...]                         # (bb, ta, da)
    v3 = v_ref[...]                         # (bb, tv, dv)
    a = a3.reshape(bb * ta, da)             # pack batch into the MXU M dim
    v = v3.reshape(bb * tv, dv)

    relu = lambda x: jnp.maximum(x, 0.0)
    mm = lambda x, w: jnp.dot(x, w, preferred_element_type=f32)

    # Branch projections (weights pre-transposed to (in, out); v_w2 already
    # carries the folded 1/sqrt(hidden) attention scale).
    vb1 = relu(mm(v, vw1_ref[...]))         # (bb*tv, H)
    vb2 = relu(mm(v, vw2_ref[...]))         # (bb*tv, H), pre-scaled
    ab1 = relu(mm(a, aw1_ref[...]))         # (bb*ta, H)
    ab2 = relu(mm(a, aw2_ref[...]))         # (bb*ta, H)
    # TODO(synk): nn.Dropout(p=0.1) is identity at inference; not implemented.

    h = vb1.shape[-1]
    vb1_b = vb1.reshape(bb, tv, h)
    vb2_b = vb2.reshape(bb, tv, h)
    ab1_b = ab1.reshape(bb, ta, h)
    ab2_b = ab2.reshape(bb, ta, h)

    # Both attention maps via hidden-dim contractions (no .T anywhere).
    beta_va = relu(jnp.einsum('bvh,bah->bva', vb2_b, ab1_b,
                              preferred_element_type=f32))     # (bb, tv, ta)
    beta_av = relu(jnp.einsum('bah,bvh->bav', ab1_b, vb2_b,
                              preferred_element_type=f32))     # (bb, ta, tv)

    # Row normalisation; the +1e-8 keeps fully-thresholded rows at exactly 0
    # (same silent 0/eps behaviour as the torch reference).
    def row_norm(x):
        return x / (jnp.sum(x, axis=-1, keepdims=True) + 1e-8)

    bva = row_norm(beta_va)
    gva = row_norm(jnp.where(bva > thr, bva, 0.0))
    bav = row_norm(beta_av)
    gav = row_norm(jnp.where(bav > thr, bav, 0.0))

    a_pos = jnp.einsum('bva,bah->bvh', gva, ab2_b,
                       preferred_element_type=f32)              # (bb, tv, H)
    v_pos = jnp.einsum('bav,bvh->bah', gav, vb1_b,
                       preferred_element_type=f32)              # (bb, ta, H)

    v_psp = relu(mm((v3 + a_pos).reshape(bb * tv, dv), vwfc_ref[...]))
    a_psp = relu(mm((a3 + v_pos).reshape(bb * ta, da), awfc_ref[...]))

    g = lng_ref[0]          # (Dout,)
    b = lnb_ref[0]          # (Dout,)
    dout = g.shape[-1]

    def layer_norm(x):
        # single statistics pass: var = E[x^2] - E[x]^2
        mu = jnp.mean(x, axis=-1, keepdims=True)
        ms = jnp.mean(x * x, axis=-1, keepdims=True)
        var = ms - mu * mu
        return (x - mu) * jax.lax.rsqrt(var + 1e-6) * g + b

    v_out = layer_norm(v_psp).reshape(bb, tv, dout)
    a_out = layer_norm(a_psp).reshape(bb, ta, dout)

    vpsp_ref[...] = v_out
    apsp_ref[...] = a_out
    fuse_ref[...] = 0.5 * (v_out + a_out)


def psp_forward(a_fea, v_fea, thr_val, params, block_b=8):
    B, Ta, Da = a_fea.shape
    Bv, Tv, Dv = v_fea.shape
    assert B == Bv
    # fuse = 0.5*(v_out + a_out) requires matching segment counts.
    assert Ta == Tv, "PSP fuse output requires Ta == Tv"

    v_w1, v_w2, v_wfc = params["v_w1"], params["v_w2"], params["v_wfc"]
    a_w1, a_w2, a_wfc = params["a_w1"], params["a_w2"], params["a_wfc"]
    H = v_w2.shape[1]
    Dout = v_wfc.shape[1]

    # Fold the 1/sqrt(hidden) attention scale into the v_L2 weight (host side,
    # one elementwise scale on a (Dv,H) weight — not a per-activation op).
    v_w2s = v_w2 * jnp.float32(1.0 / math.sqrt(H))

    lng = params["ln_gamma"].reshape(1, Dout).astype(jnp.float32)
    lnb = params["ln_beta"].reshape(1, Dout).astype(jnp.float32)
    thr = jnp.asarray(thr_val, jnp.float32).reshape(1)

    # Pick the largest batch block <= block_b that divides B.
    block_b = max(1, min(block_b, B))
    while B % block_b:
        block_b -= 1
    nb = B // block_b

    def feat_spec(T, D):
        return pl.BlockSpec((block_b, T, D), lambda i: (i, 0, 0))

    def w_spec(w):
        return pl.BlockSpec(w.shape, lambda i: (0, 0))

    row_spec = pl.BlockSpec((1, Dout), lambda i: (0, 0))
    thr_spec = pl.BlockSpec(memory_space=pltpu.MemorySpace.SMEM)

    out_shape = (
        jax.ShapeDtypeStruct((B, Tv, Dout), jnp.float32),   # a_v_fuse
        jax.ShapeDtypeStruct((B, Tv, Dout), jnp.float32),   # v_psp
        jax.ShapeDtypeStruct((B, Ta, Dout), jnp.float32),   # a_psp
    )

    return pl.pallas_call(
        psp_kernel,
        out_shape=out_shape,
        grid_spec=pltpu.PrefetchScalarGridSpec(
            num_scalar_prefetch=0,
            grid=(nb,),
            in_specs=[feat_spec(Ta, Da), feat_spec(Tv, Dv),
                      w_spec(v_w1), w_spec(v_w2s), w_spec(v_wfc),
                      w_spec(a_w1), w_spec(a_w2), w_spec(a_wfc),
                      row_spec, row_spec, thr_spec],
            out_specs=[feat_spec(Tv, Dout), feat_spec(Tv, Dout),
                       feat_spec(Ta, Dout)],
        ),
        compiler_params=pltpu.CompilerParams(
            dimension_semantics=("parallel",)),
    )(a_fea, v_fea,
      v_w1, v_w2s, v_wfc,
      a_w1, a_w2, a_wfc,
      lng, lnb, thr)


# ----------------------- parameter init & JAX reference -----------------------

def xavier_uniform(key, out_dim, in_dim):
    bound = math.sqrt(6.0 / (in_dim + out_dim))
    # PyTorch Linear weight has shape (out, in); return its transpose (in, out)
    # so the kernel computes x @ W directly (same math as x @ weight.T).
    w = jax.random.uniform(key, (out_dim, in_dim), jnp.float32, -bound, bound)
    return w.T


def make_params(key, a_dim, v_dim, hidden_dim, out_dim):
    keys = jax.random.split(key, 6)
    return {
        "v_w1": xavier_uniform(keys[0], hidden_dim, v_dim),
        "v_w2": xavier_uniform(keys[1], hidden_dim, v_dim),
        "v_wfc": xavier_uniform(keys[2], out_dim, v_dim),
        "a_w1": xavier_uniform(keys[3], hidden_dim, a_dim),
        "a_w2": xavier_uniform(keys[4], hidden_dim, a_dim),
        "a_wfc": xavier_uniform(keys[5], out_dim, a_dim),
        "ln_gamma": jnp.ones((out_dim,), jnp.float32),
        "ln_beta": jnp.zeros((out_dim,), jnp.float32),
    }


def psp_reference(a_fea, v_fea, thr_val, params):
    relu = lambda x: jnp.maximum(x, 0.0)
    vb1 = relu(v_fea @ params["v_w1"])
    vb2 = relu(v_fea @ params["v_w2"])
    ab1 = relu(a_fea @ params["a_w1"])
    ab2 = relu(a_fea @ params["a_w2"])
    beta_va = relu(jnp.einsum("bvh,bah->bva", vb2, ab1)
                   / jnp.sqrt(jnp.float32(vb2.shape[2])))
    beta_av = jnp.swapaxes(beta_va, 1, 2)
    norm = lambda x: x / (jnp.sum(x, -1, keepdims=True) + 1e-8)
    bva = norm(beta_va)
    gva = norm(jnp.where(bva > thr_val, bva, 0.0))
    bav = norm(beta_av)
    gav = norm(jnp.where(bav > thr_val, bav, 0.0))
    v_psp = v_fea + jnp.einsum("bva,bah->bvh", gva, ab2)
    a_psp = a_fea + jnp.einsum("bav,bvh->bah", gav, vb1)
    v_psp = relu(v_psp @ params["v_wfc"])
    a_psp = relu(a_psp @ params["a_wfc"])

    def ln(x):
        mu = jnp.mean(x, -1, keepdims=True)
        var = jnp.mean((x - mu) ** 2, -1, keepdims=True)
        return (x - mu) / jnp.sqrt(var + 1e-6) * params["ln_gamma"] + params["ln_beta"]

    v_out, a_out = ln(v_psp), ln(a_psp)
    return 0.5 * (v_out + a_out), v_out, a_out


if __name__ == "__main__":
    # Small test, but batch-blocked: 16 samples, 8 segments, 32-dim features,
    # 8 samples per grid step -> grid=(2,) (even, so both v7x TCs get work).
    B, T, D = 16, 8, 32
    key = jax.random.PRNGKey(0)
    k_a, k_v, k_p = jax.random.split(key, 3)
    a_fea = jax.random.normal(k_a, (B, T, D), jnp.float32)
    v_fea = jax.random.normal(k_v, (B, T, D), jnp.float32)
    thr_val = 0.095
    params = make_params(k_p, D, D, D, D)

    fuse, v_psp, a_psp = psp_forward(a_fea, v_fea, thr_val, params, block_b=8)
    jax.block_until_ready((fuse, v_psp, a_psp))

    ref_fuse, ref_v, ref_a = psp_reference(a_fea, v_fea, thr_val, params)
    assert jnp.allclose(fuse, ref_fuse, atol=1e-4, rtol=1e-4)
    assert jnp.allclose(v_psp, ref_v, atol=1e-4, rtol=1e-4)
    assert jnp.allclose(a_psp, ref_a, atol=1e-4, rtol=1e-4)

    print("KERNEL_OK")
</pallas_src>

<mosaic_0001>
module attributes {stable_mosaic.version = 11 : i64} {
  func.func @psp_kernel(%arg0: i32, %arg1: memref<8x8x32xf32, #tpu.memory_space<vmem>>, %arg2: memref<8x8x32xf32, #tpu.memory_space<vmem>>, %arg3: memref<32x32xf32, #tpu.memory_space<vmem>>, %arg4: memref<32x32xf32, #tpu.memory_space<vmem>>, %arg5: memref<32x32xf32, #tpu.memory_space<vmem>>, %arg6: memref<32x32xf32, #tpu.memory_space<vmem>>, %arg7: memref<32x32xf32, #tpu.memory_space<vmem>>, %arg8: memref<32x32xf32, #tpu.memory_space<vmem>>, %arg9: memref<1x32xf32, #tpu.memory_space<vmem>>, %arg10: memref<1x32xf32, #tpu.memory_space<vmem>>, %arg11: memref<1xf32, #tpu.memory_space<smem>>, %arg12: memref<8x8x32xf32, #tpu.memory_space<vmem>>, %arg13: memref<8x8x32xf32, #tpu.memory_space<vmem>>, %arg14: memref<8x8x32xf32, #tpu.memory_space<vmem>>) attributes {dimension_semantics = [#tpu.dimension_semantics<parallel>], iteration_bounds = array<i64: 2>, scalar_prefetch = 0 : i64, scratch_operands = 0 : i64, tpu.core_type = #tpu.core_type<tc>, window_params = [{transform_indices = @transform_0, window_bounds = array<i64: 8, 8, 32>}, {transform_indices = @transform_1, window_bounds = array<i64: 8, 8, 32>}, {pipeline_mode = #tpu.pipeline_mode<synchronous>, transform_indices = @transform_2, window_bounds = array<i64: 32, 32>}, {pipeline_mode = #tpu.pipeline_mode<synchronous>, transform_indices = @transform_3, window_bounds = array<i64: 32, 32>}, {pipeline_mode = #tpu.pipeline_mode<synchronous>, transform_indices = @transform_4, window_bounds = array<i64: 32, 32>}, {pipeline_mode = #tpu.pipeline_mode<synchronous>, transform_indices = @transform_5, window_bounds = array<i64: 32, 32>}, {pipeline_mode = #tpu.pipeline_mode<synchronous>, transform_indices = @transform_6, window_bounds = array<i64: 32, 32>}, {pipeline_mode = #tpu.pipeline_mode<synchronous>, transform_indices = @transform_7, window_bounds = array<i64: 32, 32>}, {pipeline_mode = #tpu.pipeline_mode<synchronous>, transform_indices = @transform_8, window_bounds = array<i64: 1, 32>}, {pipeline_mode = #tpu.pipeline_mode<synchronous>, transform_indices = @transform_9, window_bounds = array<i64: 1, 32>}, {transform_indices = @transform_10, window_bounds = array<i64: 1>}, {transform_indices = @transform_11, window_bounds = array<i64: 8, 8, 32>}, {transform_indices = @transform_12, window_bounds = array<i64: 8, 8, 32>}, {transform_indices = @transform_13, window_bounds = array<i64: 8, 8, 32>}]} {
    %c0 = arith.constant 0 : index
    %0 = memref.load %arg11[%c0] : memref<1xf32, #tpu.memory_space<smem>>
    %c0_0 = arith.constant 0 : index
    %c0_1 = arith.constant 0 : index
    %c0_2 = arith.constant 0 : index
    %1 = vector.load %arg1[%c0_0, %c0_1, %c0_2] : memref<8x8x32xf32, #tpu.memory_space<vmem>>, vector<8x8x32xf32>
    %c0_3 = arith.constant 0 : index
    %c0_4 = arith.constant 0 : index
    %c0_5 = arith.constant 0 : index
    %2 = vector.load %arg2[%c0_3, %c0_4, %c0_5] : memref<8x8x32xf32, #tpu.memory_space<vmem>>, vector<8x8x32xf32>
    %3 = vector.shape_cast %1 : vector<8x8x32xf32> to vector<64x32xf32>
    %4 = vector.shape_cast %2 : vector<8x8x32xf32> to vector<64x32xf32>
    %c0_6 = arith.constant 0 : index
    %c0_7 = arith.constant 0 : index
    %5 = vector.load %arg3[%c0_6, %c0_7] : memref<32x32xf32, #tpu.memory_space<vmem>>, vector<32x32xf32>
    %cst = arith.constant dense<0.000000e+00> : vector<64x32xf32>
    %6 = tpu.matmul %4, %5, %cst {dimension_numbers = #tpu.dot_dimension_numbers<[1], [0], [0], [1], [0, 0, 1, 1], [], []>} : vector<64x32xf32>, vector<32x32xf32>, vector<64x32xf32> -> vector<64x32xf32>
    %cst_8 = arith.constant 0.000000e+00 : f32
    %7 = vector.broadcast %cst_8 : f32 to vector<64x32xf32>
    %8 = arith.maximumf %6, %7 : vector<64x32xf32>
    %c0_9 = arith.constant 0 : index
    %c0_10 = arith.constant 0 : index
    %9 = vector.load %arg4[%c0_9, %c0_10] : memref<32x32xf32, #tpu.memory_space<vmem>>, vector<32x32xf32>
    %cst_11 = arith.constant dense<0.000000e+00> : vector<64x32xf32>
    %10 = tpu.matmul %4, %9, %cst_11 {dimension_numbers = #tpu.dot_dimension_numbers<[1], [0], [0], [1], [0, 0, 1, 1], [], []>} : vector<64x32xf32>, vector<32x32xf32>, vector<64x32xf32> -> vector<64x32xf32>
    %cst_12 = arith.constant 0.000000e+00 : f32
    %11 = vector.broadcast %cst_12 : f32 to vector<64x32xf32>
    %12 = arith.maximumf %10, %11 : vector<64x32xf32>
    %c0_13 = arith.constant 0 : index
    %c0_14 = arith.constant 0 : index
    %13 = vector.load %arg6[%c0_13, %c0_14] : memref<32x32xf32, #tpu.memory_space<vmem>>, vector<32x32xf32>
    %cst_15 = arith.constant dense<0.000000e+00> : vector<64x32xf32>
    %14 = tpu.matmul %3, %13, %cst_15 {dimension_numbers = #tpu.dot_dimension_numbers<[1], [0], [0], [1], [0, 0, 1, 1], [], []>} : vector<64x32xf32>, vector<32x32xf32>, vector<64x32xf32> -> vector<64x32xf32>
    %cst_16 = arith.constant 0.000000e+00 : f32
    %15 = vector.broadcast %cst_16 : f32 to vector<64x32xf32>
    %16 = arith.maximumf %14, %15 : vector<64x32xf32>
    %c0_17 = arith.constant 0 : index
    %c0_18 = arith.constant 0 : index
    %17 = vector.load %arg7[%c0_17, %c0_18] : memref<32x32xf32, #tpu.memory_space<vmem>>, vector<32x32xf32>
    %cst_19 = arith.constant dense<0.000000e+00> : vector<64x32xf32>
    %18 = tpu.matmul %3, %17, %cst_19 {dimension_numbers = #tpu.dot_dimension_numbers<[1], [0], [0], [1], [0, 0, 1, 1], [], []>} : vector<64x32xf32>, vector<32x32xf32>, vector<64x32xf32> -> vector<64x32xf32>
    %cst_20 = arith.constant 0.000000e+00 : f32
    %19 = vector.broadcast %cst_20 : f32 to vector<64x32xf32>
    %20 = arith.maximumf %18, %19 : vector<64x32xf32>
    %21 = vector.shape_cast %8 : vector<64x32xf32> to vector<8x8x32xf32>
    %22 = vector.shape_cast %12 : vector<64x32xf32> to vector<8x8x32xf32>
    %23 = vector.shape_cast %16 : vector<64x32xf32> to vector<8x8x32xf32>
    %24 = vector.shape_cast %20 : vector<64x32xf32> to vector<8x8x32xf32>
    "tpu.trace_start"() <{level = 10 : i32, message = "bvh,bah->bva"}> : () -> ()
    %cst_21 = arith.constant dense<0.000000e+00> : vector<8x8x8xf32>
    %25 = tpu.matmul %22, %23, %cst_21 {dimension_numbers = #tpu.dot_dimension_numbers<[2], [2], [1], [1], [0, 0, 0, 1, 1, 1], [0], [0]>} : vector<8x8x32xf32>, vector<8x8x32xf32>, vector<8x8x8xf32> -> vector<8x8x8xf32>
    "tpu.trace_stop"() : () -> ()
    %cst_22 = arith.constant 0.000000e+00 : f32
    %26 = vector.broadcast %cst_22 : f32 to vector<8x8x8xf32>
    %27 = arith.maximumf %25, %26 : vector<8x8x8xf32>
    "tpu.trace_start"() <{level = 10 : i32, message = "bah,bvh->bav"}> : () -> ()
    %cst_23 = arith.constant dense<0.000000e+00> : vector<8x8x8xf32>
    %28 = tpu.matmul %23, %22, %cst_23 {dimension_numbers = #tpu.dot_dimension_numbers<[2], [2], [1], [1], [0, 0, 0, 1, 1, 1], [0], [0]>} : vector<8x8x32xf32>, vector<8x8x32xf32>, vector<8x8x8xf32> -> vector<8x8x8xf32>
    "tpu.trace_stop"() : () -> ()
    %cst_24 = arith.constant 0.000000e+00 : f32
    %29 = vector.broadcast %cst_24 : f32 to vector<8x8x8xf32>
    %30 = arith.maximumf %28, %29 : vector<8x8x8xf32>
    %cst_25 = arith.constant dense<0.000000e+00> : vector<8x8xf32>
    %31 = vector.multi_reduction <add>, %27, %cst_25 [2] : vector<8x8x8xf32> to vector<8x8xf32>
    %32 = vector.shape_cast %31 : vector<8x8xf32> to vector<8x8x1xf32>
    %cst_26 = arith.constant 9.99999993E-9 : f32
    %33 = vector.broadcast %cst_26 : f32 to vector<8x8x1xf32>
    %34 = arith.addf %32, %33 : vector<8x8x1xf32>
    %35 = vector.broadcast %34 : vector<8x8x1xf32> to vector<8x8x8xf32>
    %36 = arith.divf %27, %35 : vector<8x8x8xf32>
    %37 = vector.broadcast %0 : f32 to vector<8x8x8xf32>
    %38 = arith.cmpf ogt, %36, %37 : vector<8x8x8xf32>
    %cst_27 = arith.constant 0.000000e+00 : f32
    %39 = vector.broadcast %cst_27 : f32 to vector<8x8x8xf32>
    %40 = arith.select %38, %36, %39 : vector<8x8x8xi1>, vector<8x8x8xf32>
    %cst_28 = arith.constant dense<0.000000e+00> : vector<8x8xf32>
    %41 = vector.multi_reduction <add>, %40, %cst_28 [2] : vector<8x8x8xf32> to vector<8x8xf32>
    %42 = vector.shape_cast %41 : vector<8x8xf32> to vector<8x8x1xf32>
    %cst_29 = arith.constant 9.99999993E-9 : f32
    %43 = vector.broadcast %cst_29 : f32 to vector<8x8x1xf32>
    %44 = arith.addf %42, %43 : vector<8x8x1xf32>
    %45 = vector.broadcast %44 : vector<8x8x1xf32> to vector<8x8x8xf32>
    %46 = arith.divf %40, %45 : vector<8x8x8xf32>
    %cst_30 = arith.constant dense<0.000000e+00> : vector<8x8xf32>
    %47 = vector.multi_reduction <add>, %30, %cst_30 [2] : vector<8x8x8xf32> to vector<8x8xf32>
    %48 = vector.shape_cast %47 : vector<8x8xf32> to vector<8x8x1xf32>
    %cst_31 = arith.constant 9.99999993E-9 : f32
    %49 = vector.broadcast %cst_31 : f32 to vector<8x8x1xf32>
    %50 = arith.addf %48, %49 : vector<8x8x1xf32>
    %51 = vector.broadcast %50 : vector<8x8x1xf32> to vector<8x8x8xf32>
    %52 = arith.divf %30, %51 : vector<8x8x8xf32>
    %53 = vector.broadcast %0 : f32 to vector<8x8x8xf32>
    %54 = arith.cmpf ogt, %52, %53 : vector<8x8x8xf32>
    %cst_32 = arith.constant 0.000000e+00 : f32
    %55 = vector.broadcast %cst_32 : f32 to vector<8x8x8xf32>
    %56 = arith.select %54, %52, %55 : vector<8x8x8xi1>, vector<8x8x8xf32>
    %cst_33 = arith.constant dense<0.000000e+00> : vector<8x8xf32>
    %57 = vector.multi_reduction <add>, %56, %cst_33 [2] : vector<8x8x8xf32> to vector<8x8xf32>
    %58 = vector.shape_cast %57 : vector<8x8xf32> to vector<8x8x1xf32>
    %cst_34 = arith.constant 9.99999993E-9 : f32
    %59 = vector.broadcast %cst_34 : f32 to vector<8x8x1xf32>
    %60 = arith.addf %58, %59 : vector<8x8x1xf32>
    %61 = vector.broadcast %60 : vector<8x8x1xf32> to vector<8x8x8xf32>
    %62 = arith.divf %56, %61 : vector<8x8x8xf32>
    "tpu.trace_start"() <{level = 10 : i32, message = "bva,bah->bvh"}> : () -> ()
    %cst_35 = arith.constant dense<0.000000e+00> : vector<8x8x32xf32>
    %63 = tpu.matmul %46, %24, %cst_35 {dimension_numbers = #tpu.dot_dimension_numbers<[2], [1], [1], [2], [0, 0, 0, 1, 1, 2], [0], [0]>} : vector<8x8x8xf32>, vector<8x8x32xf32>, vector<8x8x32xf32> -> vector<8x8x32xf32>
    "tpu.trace_stop"() : () -> ()
    "tpu.trace_start"() <{level = 10 : i32, message = "bav,bvh->bah"}> : () -> ()
    %cst_36 = arith.constant dense<0.000000e+00> : vector<8x8x32xf32>
    %64 = tpu.matmul %62, %21, %cst_36 {dimension_numbers = #tpu.dot_dimension_numbers<[2], [1], [1], [2], [0, 0, 0, 1, 1, 2], [0], [0]>} : vector<8x8x8xf32>, vector<8x8x32xf32>, vector<8x8x32xf32> -> vector<8x8x32xf32>
    "tpu.trace_stop"() : () -> ()
    %65 = arith.addf %2, %63 : vector<8x8x32xf32>
    %66 = vector.shape_cast %65 : vector<8x8x32xf32> to vector<64x32xf32>
    %c0_37 = arith.constant 0 : index
    %c0_38 = arith.constant 0 : index
    %67 = vector.load %arg5[%c0_37, %c0_38] : memref<32x32xf32, #tpu.memory_space<vmem>>, vector<32x32xf32>
    %cst_39 = arith.constant dense<0.000000e+00> : vector<64x32xf32>
    %68 = tpu.matmul %66, %67, %cst_39 {dimension_numbers = #tpu.dot_dimension_numbers<[1], [0], [0], [1], [0, 0, 1, 1], [], []>} : vector<64x32xf32>, vector<32x32xf32>, vector<64x32xf32> -> vector<64x32xf32>
    %cst_40 = arith.constant 0.000000e+00 : f32
    %69 = vector.broadcast %cst_40 : f32 to vector<64x32xf32>
    %70 = arith.maximumf %68, %69 : vector<64x32xf32>
    %71 = arith.addf %1, %64 : vector<8x8x32xf32>
    %72 = vector.shape_cast %71 : vector<8x8x32xf32> to vector<64x32xf32>
    %c0_41 = arith.constant 0 : index
    %c0_42 = arith.constant 0 : index
    %73 = vector.load %arg8[%c0_41, %c0_42] : memref<32x32xf32, #tpu.memory_space<vmem>>, vector<32x32xf32>
    %cst_43 = arith.constant dense<0.000000e+00> : vector<64x32xf32>
    %74 = tpu.matmul %72, %73, %cst_43 {dimension_numbers = #tpu.dot_dimension_numbers<[1], [0], [0], [1], [0, 0, 1, 1], [], []>} : vector<64x32xf32>, vector<32x32xf32>, vector<64x32xf32> -> vector<64x32xf32>
    %cst_44 = arith.constant 0.000000e+00 : f32
    %75 = vector.broadcast %cst_44 : f32 to vector<64x32xf32>
    %76 = arith.maximumf %74, %75 : vector<64x32xf32>
    %c0_45 = arith.constant 0 : index
    %c0_46 = arith.constant 0 : index
    %77 = vector.load %arg9[%c0_45, %c0_46] : memref<1x32xf32, #tpu.memory_space<vmem>>, vector<1x32xf32>
    %78 = vector.shape_cast %77 : vector<1x32xf32> to vector<32xf32>
    %c0_47 = arith.constant 0 : index
    %c0_48 = arith.constant 0 : index
    %79 = vector.load %arg10[%c0_47, %c0_48] : memref<1x32xf32, #tpu.memory_space<vmem>>, vector<1x32xf32>
    %80 = vector.shape_cast %79 : vector<1x32xf32> to vector<32xf32>
    %cst_49 = arith.constant dense<0.000000e+00> : vector<64xf32>
    %81 = vector.multi_reduction <add>, %70, %cst_49 [1] : vector<64x32xf32> to vector<64xf32>
    %82 = vector.shape_cast %81 : vector<64xf32> to vector<64x1xf32>
    %cst_50 = arith.constant 3.200000e+01 : f32
    %83 = vector.broadcast %cst_50 : f32 to vector<64x1xf32>
    %84 = arith.divf %82, %83 : vector<64x1xf32>
    %85 = arith.mulf %70, %70 : vector<64x32xf32>
    %cst_51 = arith.constant dense<0.000000e+00> : vector<64xf32>
    %86 = vector.multi_reduction <add>, %85, %cst_51 [1] : vector<64x32xf32> to vector<64xf32>
    %87 = vector.shape_cast %86 : vector<64xf32> to vector<64x1xf32>
    %cst_52 = arith.constant 3.200000e+01 : f32
    %88 = vector.broadcast %cst_52 : f32 to vector<64x1xf32>
    %89 = arith.divf %87, %88 : vector<64x1xf32>
    %90 = arith.mulf %84, %84 : vector<64x1xf32>
    %91 = arith.subf %89, %90 : vector<64x1xf32>
    %92 = vector.broadcast %84 : vector<64x1xf32> to vector<64x32xf32>
    %93 = arith.subf %70, %92 : vector<64x32xf32>
    %cst_53 = arith.constant 9.99999997E-7 : f32
    %94 = vector.broadcast %cst_53 : f32 to vector<64x1xf32>
    %95 = arith.addf %91, %94 : vector<64x1xf32>
    %96 = math.rsqrt %95 : vector<64x1xf32>
    %97 = vector.broadcast %96 : vector<64x1xf32> to vector<64x32xf32>
    %98 = arith.mulf %93, %97 : vector<64x32xf32>
    %99 = vector.shape_cast %78 : vector<32xf32> to vector<1x32xf32>
    %100 = vector.broadcast %99 : vector<1x32xf32> to vector<64x32xf32>
    %101 = arith.mulf %98, %100 : vector<64x32xf32>
    %102 = vector.shape_cast %80 : vector<32xf32> to vector<1x32xf32>
    %103 = vector.broadcast %102 : vector<1x32xf32> to vector<64x32xf32>
    %104 = arith.addf %101, %103 : vector<64x32xf32>
    %105 = vector.shape_cast %104 : vector<64x32xf32> to vector<8x8x32xf32>
    %cst_54 = arith.constant dense<0.000000e+00> : vector<64xf32>
    %106 = vector.multi_reduction <add>, %76, %cst_54 [1] : vector<64x32xf32> to vector<64xf32>
    %107 = vector.shape_cast %106 : vector<64xf32> to vector<64x1xf32>
    %cst_55 = arith.constant 3.200000e+01 : f32
    %108 = vector.broadcast %cst_55 : f32 to vector<64x1xf32>
    %109 = arith.divf %107, %108 : vector<64x1xf32>
    %110 = arith.mulf %76, %76 : vector<64x32xf32>
    %cst_56 = arith.constant dense<0.000000e+00> : vector<64xf32>
    %111 = vector.multi_reduction <add>, %110, %cst_56 [1] : vector<64x32xf32> to vector<64xf32>
    %112 = vector.shape_cast %111 : vector<64xf32> to vector<64x1xf32>
    %cst_57 = arith.constant 3.200000e+01 : f32
    %113 = vector.broadcast %cst_57 : f32 to vector<64x1xf32>
    %114 = arith.divf %112, %113 : vector<64x1xf32>
    %115 = arith.mulf %109, %109 : vector<64x1xf32>
    %116 = arith.subf %114, %115 : vector<64x1xf32>
    %117 = vector.broadcast %109 : vector<64x1xf32> to vector<64x32xf32>
    %118 = arith.subf %76, %117 : vector<64x32xf32>
    %cst_58 = arith.constant 9.99999997E-7 : f32
    %119 = vector.broadcast %cst_58 : f32 to vector<64x1xf32>
    %120 = arith.addf %116, %119 : vector<64x1xf32>
    %121 = math.rsqrt %120 : vector<64x1xf32>
    %122 = vector.broadcast %121 : vector<64x1xf32> to vector<64x32xf32>
    %123 = arith.mulf %118, %122 : vector<64x32xf32>
    %124 = vector.shape_cast %78 : vector<32xf32> to vector<1x32xf32>
    %125 = vector.broadcast %124 : vector<1x32xf32> to vector<64x32xf32>
    %126 = arith.mulf %123, %125 : vector<64x32xf32>
    %127 = vector.shape_cast %80 : vector<32xf32> to vector<1x32xf32>
    %128 = vector.broadcast %127 : vector<1x32xf32> to vector<64x32xf32>
    %129 = arith.addf %126, %128 : vector<64x32xf32>
    %130 = vector.shape_cast %129 : vector<64x32xf32> to vector<8x8x32xf32>
    %c0_59 = arith.constant 0 : index
    %c0_60 = arith.constant 0 : index
    %c0_61 = arith.constant 0 : index
    %131 = vector.load %arg13[%c0_59, %c0_60, %c0_61] : memref<8x8x32xf32, #tpu.memory_space<vmem>>, vector<8x8x32xf32>
    tpu.vector_store %arg13[%c0_59, %c0_60, %c0_61], %105 {strides = array<i32>} : memref<8x8x32xf32, #tpu.memory_space<vmem>>, vector<8x8x32xf32>,
    %c0_62 = arith.constant 0 : index
    %c0_63 = arith.constant 0 : index
    %c0_64 = arith.constant 0 : index
    %132 = vector.load %arg14[%c0_62, %c0_63, %c0_64] : memref<8x8x32xf32, #tpu.memory_space<vmem>>, vector<8x8x32xf32>
    tpu.vector_store %arg14[%c0_62, %c0_63, %c0_64], %130 {strides = array<i32>} : memref<8x8x32xf32, #tpu.memory_space<vmem>>, vector<8x8x32xf32>,
    %133 = arith.addf %105, %130 : vector<8x8x32xf32>
    %cst_65 = arith.constant 5.000000e-01 : f32
    %134 = vector.broadcast %cst_65 : f32 to vector<8x8x32xf32>
    %135 = arith.mulf %134, %133 : vector<8x8x32xf32>
    %c0_66 = arith.constant 0 : index
    %c0_67 = arith.constant 0 : index
    %c0_68 = arith.constant 0 : index
    %136 = vector.load %arg12[%c0_66, %c0_67, %c0_68] : memref<8x8x32xf32, #tpu.memory_space<vmem>>, vector<8x8x32xf32>
    tpu.vector_store %arg12[%c0_66, %c0_67, %c0_68], %135 {strides = array<i32>} : memref<8x8x32xf32, #tpu.memory_space<vmem>>, vector<8x8x32xf32>,
    return
  }
  func.func @transform_0(%arg0: i32) -> (i32, i32, i32) {
    %c0_i32 = arith.constant 0 : i32
    %c0_i32_0 = arith.constant 0 : i32
    %c0_i32_1 = arith.constant 0 : i32
    return %arg0, %c0_i32, %c0_i32_0 : i32, i32, i32
  }
  func.func @transform_1(%arg0: i32) -> (i32, i32, i32) {
    %c0_i32 = arith.constant 0 : i32
    %c0_i32_0 = arith.constant 0 : i32
    %c0_i32_1 = arith.constant 0 : i32
    return %arg0, %c0_i32, %c0_i32_0 : i32, i32, i32
  }
  func.func @transform_2(%arg0: i32) -> (i32, i32) {
    %c0_i32 = arith.constant 0 : i32
    %c0_i32_0 = arith.constant 0 : i32
    %c0_i32_1 = arith.constant 0 : i32
    return %c0_i32, %c0_i32_0 : i32, i32
  }
  func.func @transform_3(%arg0: i32) -> (i32, i32) {
    %c0_i32 = arith.constant 0 : i32
    %c0_i32_0 = arith.constant 0 : i32
    %c0_i32_1 = arith.constant 0 : i32
    return %c0_i32, %c0_i32_0 : i32, i32
  }
  func.func @transform_4(%arg0: i32) -> (i32, i32) {
    %c0_i32 = arith.constant 0 : i32
    %c0_i32_0 = arith.constant 0 : i32
    %c0_i32_1 = arith.constant 0 : i32
    return %c0_i32, %c0_i32_0 : i32, i32
  }
  func.func @transform_5(%arg0: i32) -> (i32, i32) {
    %c0_i32 = arith.constant 0 : i32
    %c0_i32_0 = arith.constant 0 : i32
    %c0_i32_1 = arith.constant 0 : i32
    return %c0_i32, %c0_i32_0 : i32, i32
  }
  func.func @transform_6(%arg0: i32) -> (i32, i32) {
    %c0_i32 = arith.constant 0 : i32
    %c0_i32_0 = arith.constant 0 : i32
    %c0_i32_1 = arith.constant 0 : i32
    return %c0_i32, %c0_i32_0 : i32, i32
  }
  func.func @transform_7(%arg0: i32) -> (i32, i32) {
    %c0_i32 = arith.constant 0 : i32
    %c0_i32_0 = arith.constant 0 : i32
    %c0_i32_1 = arith.constant 0 : i32
    return %c0_i32, %c0_i32_0 : i32, i32
  }
  func.func @transform_8(%arg0: i32) -> (i32, i32) {
    %c0_i32 = arith.constant 0 : i32
    %c0_i32_0 = arith.constant 0 : i32
    %c0_i32_1 = arith.constant 0 : i32
    return %c0_i32, %c0_i32_0 : i32, i32
  }
  func.func @transform_9(%arg0: i32) -> (i32, i32) {
    %c0_i32 = arith.constant 0 : i32
    %c0_i32_0 = arith.constant 0 : i32
    %c0_i32_1 = arith.constant 0 : i32
    return %c0_i32, %c0_i32_0 : i32, i32
  }
  func.func @transform_10(%arg0: i32) -> i32 {
    %c0_i32 = arith.constant 0 : i32
    %c0_i32_0 = arith.constant 0 : i32
    return %c0_i32 : i32
  }
  func.func @transform_11(%arg0: i32) -> (i32, i32, i32) {
    %c0_i32 = arith.constant 0 : i32
    %c0_i32_0 = arith.constant 0 : i32
    %c0_i32_1 = arith.constant 0 : i32
    return %arg0, %c0_i32, %c0_i32_0 : i32, i32, i32
  }
  func.func @transform_12(%arg0: i32) -> (i32, i32, i32) {
    %c0_i32 = arith.constant 0 : i32
    %c0_i32_0 = arith.constant 0 : i32
    %c0_i32_1 = arith.constant 0 : i32
    return %arg0, %c0_i32, %c0_i32_0 : i32, i32, i32
  }
  func.func @transform_13(%arg0: i32) -> (i32, i32, i32) {
    %c0_i32 = arith.constant 0 : i32
    %c0_i32_0 = arith.constant 0 : i32
    %c0_i32_1 = arith.constant 0 : i32
    return %arg0, %c0_i32, %c0_i32_0 : i32, i32, i32
  }
}

</mosaic_0001>

<llo_original>
// kernel: tpu_custom_call.1
$region0: #{tpu_custom_call.1}
  #allocation0 [shape = 'u32[]', space=smem, size = 0x4, offset = 0x4, fixed_abs, tag = 'smem constant byte address 0x4 - core index']
  #allocation1 [shape = 'u32[144,128]{1,0:T(1,128)}', space=vmem, size = 0x12000, scoped, tag = 'internal scratch']
  #allocation2 [shape = 'f32[1]{0:T(128)S(6)}', space=smem, size = 0x200, scoped, tag = 'scoped memory for tpu_custom_call.1']
  %s0 = inlined_call_operand.hbm [shape: f32[16,8,32], index: 0, kind: input, shape index: {}]
  %s1 = inlined_call_operand.hbm [shape: f32[16,8,32], index: 1, kind: input, shape index: {}]
  %s2 = inlined_call_operand.hbm [shape: f32[32,32], index: 2, kind: input, shape index: {}]
  %s3 = inlined_call_operand.hbm [shape: f32[32,32], index: 3, kind: input, shape index: {}]
  %s4 = inlined_call_operand.hbm [shape: f32[32,32], index: 4, kind: input, shape index: {}]
  %s5 = inlined_call_operand.hbm [shape: f32[32,32], index: 5, kind: input, shape index: {}]
  %s6 = inlined_call_operand.hbm [shape: f32[32,32], index: 6, kind: input, shape index: {}]
  %s7 = inlined_call_operand.hbm [shape: f32[32,32], index: 7, kind: input, shape index: {}]
  %s8 = inlined_call_operand.vmem [shape: f32[1,32], index: 8, kind: input, shape index: {}]
  %s9 = inlined_call_operand.vmem [shape: f32[1,32], index: 9, kind: input, shape index: {}]
  %s10 = inlined_call_operand.<no memory space> [shape: f32[1], index: 10, kind: input, shape index: {}]
  %s11 = inlined_call_operand.hbm [shape: f32[16,8,32], index: 11, kind: output, shape index: {0}]
  %s12 = inlined_call_operand.hbm [shape: f32[16,8,32], index: 12, kind: output, shape index: {1}]
  %s13 = inlined_call_operand.hbm [shape: f32[16,8,32], index: 13, kind: output, shape index: {2}]
  %14 = xla_tuple %s11, %s12, %s13
  %s15 = sld [smem:[#allocation0]]
  $region125: #{tpu_custom_call.1} parent=0
    _
  %s17 = ssub.s32 1, %s15
  %s18 = scalar_select 0, %s17, %s15
  %19 = sst [smem:[#allocation2]] %s10
  $region1: #{tpu_custom_call.1} parent=0
    #allocation3 [shape = 'u8[65536]{0}', space=vmem, size = 0x10000, scoped, tag = 'input window, operand 0']
    #allocation4 [shape = 's32[2]{0}', space=sflag, size = 0x8, scoped, tag = 'scoped memory for tpu_custom_call.1']
    #allocation5 [shape = 's32[2]{0}', space=sflag, size = 0x8, scoped, tag = 'scoped memory for tpu_custom_call.1']
    #allocation6 [shape = 'u8[65536]{0}', space=vmem, size = 0x10000, scoped, tag = 'input window, operand 1']
    #allocation7 [shape = 's32[2]{0}', space=sflag, size = 0x8, scoped, tag = 'scoped memory for tpu_custom_call.1']
    #allocation8 [shape = 'u8[16384]{0}', space=vmem, size = 0x4000, scoped, tag = 'input window, operand 2, single buffered']
    #allocation9 [shape = 'u8[16384]{0}', space=vmem, size = 0x4000, scoped, tag = 'input window, operand 3, single buffered']
    #allocation10 [shape = 's32[1]{0}', space=sflag, size = 0x4, scoped, tag = 'scoped memory for tpu_custom_call.1']
    #allocation11 [shape = 'u8[16384]{0}', space=vmem, size = 0x4000, scoped, tag = 'input window, operand 4, single buffered']
    #allocation12 [shape = 'u8[16384]{0}', space=vmem, size = 0x4000, scoped, tag = 'input window, operand 5, single buffered']
    #allocation13 [shape = 's32[1]{0}', space=sflag, size = 0x4, scoped, tag = 'scoped memory for tpu_custom_call.1']
    #allocation14 [shape = 'u8[16384]{0}', space=vmem, size = 0x4000, scoped, tag = 'input window, operand 6, single buffered']
    #allocation15 [shape = 'u8[16384]{0}', space=vmem, size = 0x4000, scoped, tag = 'input window, operand 7, single buffered']
    #allocation16 [shape = 's32[1]{0}', space=sflag, size = 0x4, scoped, tag = 'scoped memory for tpu_custom_call.1']
    #allocation17 [shape = 'u8[65536]{0}', space=vmem, size = 0x10000, scoped, tag = 'output window, operand 0']
    #allocation18 [shape = 'u8[65536]{0}', space=vmem, size = 0x10000, scoped, tag = 'output window, operand 1']
    #allocation19 [shape = 's32[2]{0}', space=sflag, size = 0x8, scoped, tag = 'scoped memory for tpu_custom_call.1']
    #allocation20 [shape = 'u8[65536]{0}', space=vmem, size = 0x10000, scoped, tag = 'output window, operand 2']
    %20 = vsyncpa [#allocation4], 0
    %s21 = scalar_lea.sflag [#allocation4], 1
    %22 = vsyncpa %s21, 0
    %23 = vsyncpa [#allocation7], 0
    %s24 = scalar_lea.sflag [#allocation7], 1
    %25 = vsyncpa %s24, 0
    %26 = vsyncpa [#allocation10], 0
    %27 = vsyncpa [#allocation13], 0
    %28 = vsyncpa [#allocation16], 0
    %29 = vsyncpa [#allocation5], 0
    %s30 = scalar_lea.sflag [#allocation5], 1
    %31 = vsyncpa %s30, 0
    %32 = vsyncpa [#allocation19], 0
    %s33 = scalar_lea.sflag [#allocation19], 1
    %34 = vsyncpa %s33, 0
    loop: start=0, step=1, limit=4
    $region2: #{tpu_custom_call.1} parent=1 // loop_pre_header
      _
    $region3: #{tpu_custom_call.1} parent=1 // loop_header
      %s36 = sphi 0, %s40
      %p37 = scmp.ge.s32.totalorder %s36, 4
      %s46 = sphi 0, %s48
      %s49 = sphi 0, %s46
      %s50 = sphi 0, %s49
      %s66 = sphi 0, %s50
      %s72 = sphi 0, %s74
      %s75 = sphi 0, %s72
      %s76 = sphi 0, %s75
      %s92 = sphi 0, %s76
      %s96 = sphi 0, %s96
      %s98 = sphi 0, %s96
      %s99 = sphi 0, %s98
      %s113 = sphi 0, %s99
      %s117 = sphi 0, %s117
      %s119 = sphi 0, %s117
      %s120 = sphi 0, %s119
      %s134 = sphi 0, %s120
      %s138 = sphi 0, %s138
      %s140 = sphi 0, %s138
      %s141 = sphi 0, %s140
      %s155 = sphi 0, %s141
      %s159 = sphi 0, %s159
      %s161 = sphi 0, %s159
      %s162 = sphi 0, %s161
      %s176 = sphi 0, %s162
      %s180 = sphi 0, %s180
      %s182 = sphi 0, %s180
      %s183 = sphi 0, %s182
      %s197 = sphi 0, %s183
      %s201 = sphi 0, %s201
      %s203 = sphi 0, %s201
      %s204 = sphi 0, %s203
      %s218 = sphi 0, %s204
      %s222 = sphi 0, %s222
      %s224 = sphi 0, %s222
      %s225 = sphi 0, %s224
      %s239 = sphi 0, %s225
      %s243 = sphi 0, %s243
      %s245 = sphi 0, %s243
      %s246 = sphi 0, %s245
      %s260 = sphi 0, %s246
      %s264 = sphi 0, %s264
      %s266 = sphi 0, %s264
      %s267 = sphi 0, %s266
      %s281 = sphi 0, %s267
      %s287 = sphi 0, %s289
      %s290 = sphi 0, %s287
      %s291 = sphi 0, %s290
      %s307 = sphi 0, %s291
      %s313 = sphi 0, %s315
      %s316 = sphi 0, %s313
      %s317 = sphi 0, %s316
      %s333 = sphi 0, %s317
      %s339 = sphi 0, %s341
      %s342 = sphi 0, %s339
      %s343 = sphi 0, %s342
      %s359 = sphi 0, %s343
    $region4: #{tpu_custom_call.1} parent=1 // loop_header_branch
      %39 = sbr.rel (%p37) target = $region8
    $region5: #{tpu_custom_call.1} parent=1 // loop_body
      %s41 = ssub.s32 %s36, 1
      %s42 = ssub.s32 %s36, 2
      %s43 = sadd.s32 %s36, 1
      %s44 = ssub.s32 %s36, %s43
      %p45 = scmp.eq.s32.totalorder %s44, 0
      %s47 = sadd.s32 %s46, 1
      %s48 = scalar_select %p45, %s46, %s47
      %p51 = pneg %p45
      %p52 = scmp.eq.s32.totalorder %s36, 1
      %p53 = por %p51, %p52
      %p54 = scmp.ne.s32.totalorder %s46, %s49
      %p55 = scmp.eq.s32.totalorder %s36, 0
      %p56 = por %p54, %p55
      %p57 = scmp.ne.s32.totalorder %s46, %s49
      %p58 = scmp.eq.s32.totalorder %s41, 1
      %p59 = por %p57, %p58
      %p60 = scmp.ne.s32.totalorder %s49, %s50
      %p61 = scmp.eq.s32.totalorder %s41, 0
      %p62 = por %p60, %p61
      %p63 = scmp.ne.s32.totalorder %s49, %s50
      %p64 = scmp.eq.s32.totalorder %s42, 1
      %p65 = por %p63, %p64
      %p67 = scmp.ne.s32.totalorder %s50, %s66
      %p68 = scmp.eq.s32.totalorder %s42, 0
      %p69 = por %p67, %p68
      %s70 = ssub.s32 %s36, %s43
      %p71 = scmp.eq.s32.totalorder %s70, 0
      %s73 = sadd.s32 %s72, 1
      %s74 = scalar_select %p71, %s72, %s73
      %p77 = pneg %p71
      %p78 = scmp.eq.s32.totalorder %s36, 1
      %p79 = por %p77, %p78
      %p80 = scmp.ne.s32.totalorder %s72, %s75
      %p81 = scmp.eq.s32.totalorder %s36, 0
      %p82 = por %p80, %p81
      %p83 = scmp.ne.s32.totalorder %s72, %s75
      %p84 = scmp.eq.s32.totalorder %s41, 1
      %p85 = por %p83, %p84
      %p86 = scmp.ne.s32.totalorder %s75, %s76
      %p87 = scmp.eq.s32.totalorder %s41, 0
      %p88 = por %p86, %p87
      %p89 = scmp.ne.s32.totalorder %s75, %s76
      %p90 = scmp.eq.s32.totalorder %s42, 1
      %p91 = por %p89, %p90
      %p93 = scmp.ne.s32.totalorder %s76, %s92
      %p94 = scmp.eq.s32.totalorder %s42, 0
      %p95 = por %p93, %p94
      %s97 = sadd.s32 %s96, 1
      %p100 = scmp.eq.s32.totalorder %s36, 1
      %p101 = scmp.ne.s32.totalorder %s96, %s98
      %p102 = scmp.eq.s32.totalorder %s36, 0
      %p103 = por %p101, %p102
      %p104 = scmp.ne.s32.totalorder %s96, %s98
      %p105 = scmp.eq.s32.totalorder %s41, 1
      %p106 = por %p104, %p105
      %p107 = scmp.ne.s32.totalorder %s98, %s99
      %p108 = scmp.eq.s32.totalorder %s41, 0
      %p109 = por %p107, %p108
      %p110 = scmp.ne.s32.totalorder %s98, %s99
      %p111 = scmp.eq.s32.totalorder %s42, 1
      %p112 = por %p110, %p111
      %p114 = scmp.ne.s32.totalorder %s99, %s113
      %p115 = scmp.eq.s32.totalorder %s42, 0
      %p116 = por %p114, %p115
      %s118 = sadd.s32 %s117, 1
      %p121 = scmp.eq.s32.totalorder %s36, 1
      %p122 = scmp.ne.s32.totalorder %s117, %s119
      %p123 = scmp.eq.s32.totalorder %s36, 0
      %p124 = por %p122, %p123
      %p125 = scmp.ne.s32.totalorder %s117, %s119
      %p126 = scmp.eq.s32.totalorder %s41, 1
      %p127 = por %p125, %p126
      %p128 = scmp.ne.s32.totalorder %s119, %s120
      %p129 = scmp.eq.s32.totalorder %s41, 0
      %p130 = por %p128, %p129
      %p131 = scmp.ne.s32.totalorder %s119, %s120
      %p132 = scmp.eq.s32.totalorder %s42, 1
      %p133 = por %p131, %p132
      %p135 = scmp.ne.s32.totalorder %s120, %s134
      %p136 = scmp.eq.s32.totalorder %s42, 0
      %p137 = por %p135, %p136
      %s139 = sadd.s32 %s138, 1
      %p142 = scmp.eq.s32.totalorder %s36, 1
      %p143 = scmp.ne.s32.totalorder %s138, %s140
      %p144 = scmp.eq.s32.totalorder %s36, 0
      %p145 = por %p143, %p144
      %p146 = scmp.ne.s32.totalorder %s138, %s140
      %p147 = scmp.eq.s32.totalorder %s41, 1
      %p148 = por %p146, %p147
      %p149 = scmp.ne.s32.totalorder %s140, %s141
      %p150 = scmp.eq.s32.totalorder %s41, 0
      %p151 = por %p149, %p150
      %p152 = scmp.ne.s32.totalorder %s140, %s141
      %p153 = scmp.eq.s32.totalorder %s42, 1
      %p154 = por %p152, %p153
      %p156 = scmp.ne.s32.totalorder %s141, %s155
      %p157 = scmp.eq.s32.totalorder %s42, 0
      %p158 = por %p156, %p157
      %s160 = sadd.s32 %s159, 1
      %p163 = scmp.eq.s32.totalorder %s36, 1
      %p164 = scmp.ne.s32.totalorder %s159, %s161
      %p165 = scmp.eq.s32.totalorder %s36, 0
      %p166 = por %p164, %p165
      %p167 = scmp.ne.s32.totalorder %s159, %s161
      %p168 = scmp.eq.s32.totalorder %s41, 1
      %p169 = por %p167, %p168
      %p170 = scmp.ne.s32.totalorder %s161, %s162
      %p171 = scmp.eq.s32.totalorder %s41, 0
      %p172 = por %p170, %p171
      %p173 = scmp.ne.s32.totalorder %s161, %s162
      %p174 = scmp.eq.s32.totalorder %s42, 1
      %p175 = por %p173, %p174
      %p177 = scmp.ne.s32.totalorder %s162, %s176
      %p178 = scmp.eq.s32.totalorder %s42, 0
      %p179 = por %p177, %p178
      %s181 = sadd.s32 %s180, 1
      %p184 = scmp.eq.s32.totalorder %s36, 1
      %p185 = scmp.ne.s32.totalorder %s180, %s182
      %p186 = scmp.eq.s32.totalorder %s36, 0
      %p187 = por %p185, %p186
      %p188 = scmp.ne.s32.totalorder %s180, %s182
      %p189 = scmp.eq.s32.totalorder %s41, 1
      %p190 = por %p188, %p189
      %p191 = scmp.ne.s32.totalorder %s182, %s183
      %p192 = scmp.eq.s32.totalorder %s41, 0
      %p193 = por %p191, %p192
      %p194 = scmp.ne.s32.totalorder %s182, %s183
      %p195 = scmp.eq.s32.totalorder %s42, 1
      %p196 = por %p194, %p195
      %p198 = scmp.ne.s32.totalorder %s183, %s197
      %p199 = scmp.eq.s32.totalorder %s42, 0
      %p200 = por %p198, %p199
      %s202 = sadd.s32 %s201, 1
      %p205 = scmp.eq.s32.totalorder %s36, 1
      %p206 = scmp.ne.s32.totalorder %s201, %s203
      %p207 = scmp.eq.s32.totalorder %s36, 0
      %p208 = por %p206, %p207
      %p209 = scmp.ne.s32.totalorder %s201, %s203
      %p210 = scmp.eq.s32.totalorder %s41, 1
      %p211 = por %p209, %p210
      %p212 = scmp.ne.s32.totalorder %s203, %s204
      %p213 = scmp.eq.s32.totalorder %s41, 0
      %p214 = por %p212, %p213
      %p215 = scmp.ne.s32.totalorder %s203, %s204
      %p216 = scmp.eq.s32.totalorder %s42, 1
      %p217 = por %p215, %p216
      %p219 = scmp.ne.s32.totalorder %s204, %s218
      %p220 = scmp.eq.s32.totalorder %s42, 0
      %p221 = por %p219, %p220
      %s223 = sadd.s32 %s222, 1
      %p226 = scmp.eq.s32.totalorder %s36, 1
      %p227 = scmp.ne.s32.totalorder %s222, %s224
      %p228 = scmp.eq.s32.totalorder %s36, 0
      %p229 = por %p227, %p228
      %p230 = scmp.ne.s32.totalorder %s222, %s224
      %p231 = scmp.eq.s32.totalorder %s41, 1
      %p232 = por %p230, %p231
      %p233 = scmp.ne.s32.totalorder %s224, %s225
      %p234 = scmp.eq.s32.totalorder %s41, 0
      %p235 = por %p233, %p234
      %p236 = scmp.ne.s32.totalorder %s224, %s225
      %p237 = scmp.eq.s32.totalorder %s42, 1
      %p238 = por %p236, %p237
      %p240 = scmp.ne.s32.totalorder %s225, %s239
      %p241 = scmp.eq.s32.totalorder %s42, 0
      %p242 = por %p240, %p241
      %s244 = sadd.s32 %s243, 1
      %p247 = scmp.eq.s32.totalorder %s36, 1
      %p248 = scmp.ne.s32.totalorder %s243, %s245
      %p249 = scmp.eq.s32.totalorder %s36, 0
      %p250 = por %p248, %p249
      %p251 = scmp.ne.s32.totalorder %s243, %s245
      %p252 = scmp.eq.s32.totalorder %s41, 1
      %p253 = por %p251, %p252
      %p254 = scmp.ne.s32.totalorder %s245, %s246
      %p255 = scmp.eq.s32.totalorder %s41, 0
      %p256 = por %p254, %p255
      %p257 = scmp.ne.s32.totalorder %s245, %s246
      %p258 = scmp.eq.s32.totalorder %s42, 1
      %p259 = por %p257, %p258
      %p261 = scmp.ne.s32.totalorder %s246, %s260
      %p262 = scmp.eq.s32.totalorder %s42, 0
      %p263 = por %p261, %p262
      %s265 = sadd.s32 %s264, 1
      %p268 = scmp.eq.s32.totalorder %s36, 1
      %p269 = scmp.ne.s32.totalorder %s264, %s266
      %p270 = scmp.eq.s32.totalorder %s36, 0
      %p271 = por %p269, %p270
      %p272 = scmp.ne.s32.totalorder %s264, %s266
      %p273 = scmp.eq.s32.totalorder %s41, 1
      %p274 = por %p272, %p273
      %p275 = scmp.ne.s32.totalorder %s266, %s267
      %p276 = scmp.eq.s32.totalorder %s41, 0
      %p277 = por %p275, %p276
      %p278 = scmp.ne.s32.totalorder %s266, %s267
      %p279 = scmp.eq.s32.totalorder %s42, 1
      %p280 = por %p278, %p279
      %p282 = scmp.ne.s32.totalorder %s267, %s281
      %p283 = scmp.eq.s32.totalorder %s42, 0
      %p284 = por %p282, %p283
      %s285 = ssub.s32 %s36, %s43
      %p286 = scmp.eq.s32.totalorder %s285, 0
      %s288 = sadd.s32 %s287, 1
      %s289 = scalar_select %p286, %s287, %s288
      %p292 = pneg %p286
      %p293 = scmp.eq.s32.totalorder %s36, 1
      %p294 = por %p292, %p293
      %p295 = scmp.ne.s32.totalorder %s287, %s290
      %p296 = scmp.eq.s32.totalorder %s36, 0
      %p297 = por %p295, %p296
      %p298 = scmp.ne.s32.totalorder %s287, %s290
      %p299 = scmp.eq.s32.totalorder %s41, 1
      %p300 = por %p298, %p299
      %p301 = scmp.ne.s32.totalorder %s290, %s291
      %p302 = scmp.eq.s32.totalorder %s41, 0
      %p303 = por %p301, %p302
      %p304 = scmp.ne.s32.totalorder %s290, %s291
      %p305 = scmp.eq.s32.totalorder %s42, 1
      %p306 = por %p304, %p305
      %p308 = scmp.ne.s32.totalorder %s291, %s307
      %p309 = scmp.eq.s32.totalorder %s42, 0
      %p310 = por %p308, %p309
      %s311 = ssub.s32 %s36, %s43
      %p312 = scmp.eq.s32.totalorder %s311, 0
      %s314 = sadd.s32 %s313, 1
      %s315 = scalar_select %p312, %s313, %s314
      %p318 = pneg %p312
      %p319 = scmp.eq.s32.totalorder %s36, 1
      %p320 = por %p318, %p319
      %p321 = scmp.ne.s32.totalorder %s313, %s316
      %p322 = scmp.eq.s32.totalorder %s36, 0
      %p323 = por %p321, %p322
      %p324 = scmp.ne.s32.totalorder %s313, %s316
      %p325 = scmp.eq.s32.totalorder %s41, 1
      %p326 = por %p324, %p325
      %p327 = scmp.ne.s32.totalorder %s316, %s317
      %p328 = scmp.eq.s32.totalorder %s41, 0
      %p329 = por %p327, %p328
      %p330 = scmp.ne.s32.totalorder %s316, %s317
      %p331 = scmp.eq.s32.totalorder %s42, 1
      %p332 = por %p330, %p331
      %p334 = scmp.ne.s32.totalorder %s317, %s333
      %p335 = scmp.eq.s32.totalorder %s42, 0
      %p336 = por %p334, %p335
      %s337 = ssub.s32 %s36, %s43
      %p338 = scmp.eq.s32.totalorder %s337, 0
      %s340 = sadd.s32 %s339, 1
      %s341 = scalar_select %p338, %s339, %s340
      %p344 = pneg %p338
      %p345 = scmp.eq.s32.totalorder %s36, 1
      %p346 = por %p344, %p345
      %p347 = scmp.ne.s32.totalorder %s339, %s342
      %p348 = scmp.eq.s32.totalorder %s36, 0
      %p349 = por %p347, %p348
      %p350 = scmp.ne.s32.totalorder %s339, %s342
      %p351 = scmp.eq.s32.totalorder %s41, 1
      %p352 = por %p350, %p351
      %p353 = scmp.ne.s32.totalorder %s342, %s343
      %p354 = scmp.eq.s32.totalorder %s41, 0
      %p355 = por %p353, %p354
      %p356 = scmp.ne.s32.totalorder %s342, %s343
      %p357 = scmp.eq.s32.totalorder %s42, 1
      %p358 = por %p356, %p357
      %p360 = scmp.ne.s32.totalorder %s343, %s359
      %p361 = scmp.eq.s32.totalorder %s42, 0
      %p362 = por %p360, %p361
      %p363 = scmp.le.s32.totalorder 1, %s36
      %p364 = scmp.lt.s32.totalorder %s36, 3
      %p365 = pnand %p363, %p364
      %p366 = pneg %p365
      // Predicated region
      $region9: #{tpu_custom_call.1} parent=5 // pred_check
        _
      $region10: #{tpu_custom_call.1} parent=5 // pred_check_branch
        %368 = sbr.rel (%p365) target = $region12
      $region11: #{tpu_custom_call.1} parent=5 // pred_region
        %s369 = ssub.s32 %s36, 1
        // Predicated region
        $region13: #{tpu_custom_call.1} parent=11 // pred_check
          %p370 = pneg %p109
        $region14: #{tpu_custom_call.1} parent=11 // pred_check_branch
          %372 = sbr.rel (%p370) target = $region16
        $region15: #{tpu_custom_call.1} parent=11 // pred_region
          %s374 = ssub.s32 512, 512
          %375 = vsyncadd [#allocation7], %s374
          %s376 = sshll.u32 [#allocation8], 4
          %s377 = int_to_ptr.vmem [resolvable:$true] %s376
          %382 = dma.hbm_to_vmem [thread:$0]  %s2, 512, %s377, [#allocation7], 128, 128, 8
        $region16: #{tpu_custom_call.1} parent=11 // pred_fallthru
          _
        // Predicated region
        $region17: #{tpu_custom_call.1} parent=11 // pred_check
          %p383 = pneg %p130
        $region18: #{tpu_custom_call.1} parent=11 // pred_check_branch
          %385 = sbr.rel (%p383) target = $region20
        $region19: #{tpu_custom_call.1} parent=11 // pred_region
          %s387 = ssub.s32 512, 512
          %388 = vsyncadd [#allocation10], %s387
          %s389 = sshll.u32 [#allocation9], 4
          %s390 = int_to_ptr.vmem [resolvable:$true] %s389
          %395 = dma.hbm_to_vmem [thread:$0]  %s3, 512, %s390, [#allocation10], 128, 128, 8
        $region20: #{tpu_custom_call.1} parent=11 // pred_fallthru
          _
        // Predicated region
        $region21: #{tpu_custom_call.1} parent=11 // pred_check
          %p396 = pneg %p151
        $region22: #{tpu_custom_call.1} parent=11 // pred_check_branch
          %398 = sbr.rel (%p396) target = $region24
        $region23: #{tpu_custom_call.1} parent=11 // pred_region
          %s400 = ssub.s32 512, 512
          %401 = vsyncadd [#allocation10], %s400
          %s402 = sshll.u32 [#allocation11], 4
          %s403 = int_to_ptr.vmem [resolvable:$true] %s402
          %408 = dma.hbm_to_vmem [thread:$0]  %s4, 512, %s403, [#allocation10], 128, 128, 8
        $region24: #{tpu_custom_call.1} parent=11 // pred_fallthru
          _
        // Predicated region
        $region25: #{tpu_custom_call.1} parent=11 // pred_check
          %p409 = pneg %p172
        $region26: #{tpu_custom_call.1} parent=11 // pred_check_branch
          %411 = sbr.rel (%p409) target = $region28
        $region27: #{tpu_custom_call.1} parent=11 // pred_region
          %s413 = ssub.s32 512, 512
          %414 = vsyncadd [#allocation13], %s413
          %s415 = sshll.u32 [#allocation12], 4
          %s416 = int_to_ptr.vmem [resolvable:$true] %s415
          %421 = dma.hbm_to_vmem [thread:$0]  %s5, 512, %s416, [#allocation13], 128, 128, 8
        $region28: #{tpu_custom_call.1} parent=11 // pred_fallthru
          _
        // Predicated region
        $region29: #{tpu_custom_call.1} parent=11 // pred_check
          %p422 = pneg %p193
        $region30: #{tpu_custom_call.1} parent=11 // pred_check_branch
          %424 = sbr.rel (%p422) target = $region32
        $region31: #{tpu_custom_call.1} parent=11 // pred_region
          %s426 = ssub.s32 512, 512
          %427 = vsyncadd [#allocation13], %s426
          %s428 = sshll.u32 [#allocation14], 4
          %s429 = int_to_ptr.vmem [resolvable:$true] %s428
          %434 = dma.hbm_to_vmem [thread:$0]  %s6, 512, %s429, [#allocation13], 128, 128, 8
        $region32: #{tpu_custom_call.1} parent=11 // pred_fallthru
          _
        // Predicated region
        $region33: #{tpu_custom_call.1} parent=11 // pred_check
          %p435 = pneg %p214
        $region34: #{tpu_custom_call.1} parent=11 // pred_check_branch
          %437 = sbr.rel (%p435) target = $region36
        $region35: #{tpu_custom_call.1} parent=11 // pred_region
          %s439 = ssub.s32 512, 512
          %440 = vsyncadd [#allocation16], %s439
          %s441 = sshll.u32 [#allocation15], 4
          %s442 = int_to_ptr.vmem [resolvable:$true] %s441
          %447 = dma.hbm_to_vmem [thread:$0]  %s7, 512, %s442, [#allocation16], 128, 128, 8
        $region36: #{tpu_custom_call.1} parent=11 // pred_fallthru
          _
        // Predicated region
        $region37: #{tpu_custom_call.1} parent=11 // pred_check
          %p448 = pneg %p235
        $region38: #{tpu_custom_call.1} parent=11 // pred_check_branch
          %450 = sbr.rel (%p448) target = $region40
        $region39: #{tpu_custom_call.1} parent=11 // pred_region
          _
        $region40: #{tpu_custom_call.1} parent=11 // pred_fallthru
          _
        // Predicated region
        $region41: #{tpu_custom_call.1} parent=11 // pred_check
          %p451 = pneg %p256
        $region42: #{tpu_custom_call.1} parent=11 // pred_check_branch
          %453 = sbr.rel (%p451) target = $region44
        $region43: #{tpu_custom_call.1} parent=11 // pred_region
          _
        $region44: #{tpu_custom_call.1} parent=11 // pred_fallthru
          _
        // Predicated region
        $region45: #{tpu_custom_call.1} parent=11 // pred_check
          %p454 = pneg %p277
        $region46: #{tpu_custom_call.1} parent=11 // pred_check_branch
          %456 = sbr.rel (%p454) target = $region48
        $region47: #{tpu_custom_call.1} parent=11 // pred_region
          _
        $region48: #{tpu_custom_call.1} parent=11 // pred_fallthru
          _
      $region12: #{tpu_custom_call.1} parent=5 // pred_fallthru
        _
      %p457 = scmp.lt.s32.totalorder %s36, 2
      // Predicated region
      $region49: #{tpu_custom_call.1} parent=5 // pred_check
        %p458 = pneg %p457
      $region50: #{tpu_custom_call.1} parent=5 // pred_check_branch
        %460 = sbr.rel (%p458) target = $region52
      $region51: #{tpu_custom_call.1} parent=5 // pred_region
        // Predicated region
        $region53: #{tpu_custom_call.1} parent=51 // pred_check
          %p461 = pneg %p56
        $region54: #{tpu_custom_call.1} parent=51 // pred_check_branch
          %463 = sbr.rel (%p461) target = $region56
        $region55: #{tpu_custom_call.1} parent=51 // pred_region
          %s464 = sand.u32 %s46, 1
          %s465 = scalar_lea.sflag [#allocation4], %s464
          %s466 = sand.u32 %s46, 1
          %s467 = smul.addr %s466, 64
          %s468 = scalar_lea.vmem [#allocation3], %s467
          %s469 = smul.u32 8, %s36
          %s471 = ssub.s32 1024, 1024
          %472 = vsyncadd %s465, %s471
          %s473 = smul.addr %s469, 128
          %s474 = scalar_lea.hbm %s0, %s473
          %s475 = sshll.u32 %s468, 4
          %s476 = int_to_ptr.vmem [resolvable:$true] %s475
          %481 = dma.hbm_to_vmem [thread:$0]  %s474, 1024, %s476, %s465, 128, 128, 8
        $region56: #{tpu_custom_call.1} parent=51 // pred_fallthru
          _
        // Predicated region
        $region57: #{tpu_custom_call.1} parent=51 // pred_check
          %p482 = pneg %p82
        $region58: #{tpu_custom_call.1} parent=51 // pred_check_branch
          %484 = sbr.rel (%p482) target = $region60
        $region59: #{tpu_custom_call.1} parent=51 // pred_region
          %s485 = sand.u32 %s36, 1
          %s486 = scalar_lea.sflag [#allocation7], %s485
          %s487 = sand.u32 %s72, 1
          %s488 = smul.addr %s487, 64
          %s489 = scalar_lea.vmem [#allocation6], %s488
          %s490 = smul.u32 8, %s36
          %s492 = ssub.s32 1024, 1024
          %493 = vsyncadd %s486, %s492
          %s494 = smul.addr %s490, 128
          %s495 = scalar_lea.hbm %s1, %s494
          %s496 = sshll.u32 %s489, 4
          %s497 = int_to_ptr.vmem [resolvable:$true] %s496
          %502 = dma.hbm_to_vmem [thread:$0]  %s495, 1024, %s497, %s486, 128, 128, 8
        $region60: #{tpu_custom_call.1} parent=51 // pred_fallthru
          _
      $region52: #{tpu_custom_call.1} parent=5 // pred_fallthru
        _
      %p503 = scmp.le.s32.totalorder 1, %s36
      %p504 = scmp.lt.s32.totalorder %s36, 3
      %p505 = pnand %p503, %p504
      %p506 = pneg %p505
      // Predicated region
      $region61: #{tpu_custom_call.1} parent=5 // pred_check
        _
      $region62: #{tpu_custom_call.1} parent=5 // pred_check_branch
        %508 = sbr.rel (%p505) target = $region64
      $region63: #{tpu_custom_call.1} parent=5 // pred_region
        %s509 = ssub.s32 %s36, 1
        %s510 = sand.u32 %s49, 1
        %s511 = scalar_lea.sflag [#allocation4], %s510
        %s512 = sand.u32 %s49, 1
        %s513 = smul.addr %s512, 64
        %s514 = scalar_lea.vmem [#allocation3], %s513
        // Predicated region
        $region65: #{tpu_custom_call.1} parent=63 // pred_check
          %p515 = pneg %p62
        $region66: #{tpu_custom_call.1} parent=63 // pred_check_branch
          %517 = sbr.rel (%p515) target = $region68
        $region67: #{tpu_custom_call.1} parent=63 // pred_region
          %518 = dma.done %s511, 1024
        $region68: #{tpu_custom_call.1} parent=63 // pred_fallthru
          _
        %s519 = sand.u32 %s41, 1
        %s520 = scalar_lea.sflag [#allocation7], %s519
        %s521 = sand.u32 %s75, 1
        %s522 = smul.addr %s521, 64
        %s523 = scalar_lea.vmem [#allocation6], %s522
        // Predicated region
        $region69: #{tpu_custom_call.1} parent=63 // pred_check
          %p524 = pneg %p88
        $region70: #{tpu_custom_call.1} parent=63 // pred_check_branch
          %526 = sbr.rel (%p524) target = $region72
        $region71: #{tpu_custom_call.1} parent=63 // pred_region
          %527 = dma.done %s520, 1024
        $region72: #{tpu_custom_call.1} parent=63 // pred_fallthru
          _
        // Predicated region
        $region73: #{tpu_custom_call.1} parent=63 // pred_check
          %p528 = pneg %p109
        $region74: #{tpu_custom_call.1} parent=63 // pred_check_branch
          %530 = sbr.rel (%p528) target = $region76
        $region75: #{tpu_custom_call.1} parent=63 // pred_region
          %531 = dma.done [#allocation7], 512
        $region76: #{tpu_custom_call.1} parent=63 // pred_fallthru
          _
        // Predicated region
        $region77: #{tpu_custom_call.1} parent=63 // pred_check
          %p532 = pneg %p130
        $region78: #{tpu_custom_call.1} parent=63 // pred_check_branch
          %534 = sbr.rel (%p532) target = $region80
        $region79: #{tpu_custom_call.1} parent=63 // pred_region
          %535 = dma.done [#allocation10], 512
        $region80: #{tpu_custom_call.1} parent=63 // pred_fallthru
          _
        // Predicated region
        $region81: #{tpu_custom_call.1} parent=63 // pred_check
          %p536 = pneg %p151
        $region82: #{tpu_custom_call.1} parent=63 // pred_check_branch
          %538 = sbr.rel (%p536) target = $region84
        $region83: #{tpu_custom_call.1} parent=63 // pred_region
          %539 = dma.done [#allocation10], 512
        $region84: #{tpu_custom_call.1} parent=63 // pred_fallthru
          _
        // Predicated region
        $region85: #{tpu_custom_call.1} parent=63 // pred_check
          %p540 = pneg %p172
        $region86: #{tpu_custom_call.1} parent=63 // pred_check_branch
          %542 = sbr.rel (%p540) target = $region88
        $region87: #{tpu_custom_call.1} parent=63 // pred_region
          %543 = dma.done [#allocation13], 512
        $region88: #{tpu_custom_call.1} parent=63 // pred_fallthru
          _
        // Predicated region
        $region89: #{tpu_custom_call.1} parent=63 // pred_check
          %p544 = pneg %p193
        $region90: #{tpu_custom_call.1} parent=63 // pred_check_branch
          %546 = sbr.rel (%p544) target = $region92
        $region91: #{tpu_custom_call.1} parent=63 // pred_region
          %547 = dma.done [#allocation13], 512
        $region92: #{tpu_custom_call.1} parent=63 // pred_fallthru
          _
        // Predicated region
        $region93: #{tpu_custom_call.1} parent=63 // pred_check
          %p548 = pneg %p214
        $region94: #{tpu_custom_call.1} parent=63 // pred_check_branch
          %550 = sbr.rel (%p548) target = $region96
        $region95: #{tpu_custom_call.1} parent=63 // pred_region
          %551 = dma.done [#allocation16], 512
        $region96: #{tpu_custom_call.1} parent=63 // pred_fallthru
          _
        %s552 = sand.u32 %s49, 1
        %s553 = scalar_lea.sflag [#allocation4], %s552
        %s554 = sand.u32 %s49, 1
        %s555 = smul.addr %s554, 64
        %s556 = scalar_lea.vmem [#allocation3], %s555
        %p557 = pneg %p62
        %p558 = pneg %p59
        %s559 = sand.u32 %s41, 1
        %s560 = scalar_lea.sflag [#allocation7], %s559
        %s561 = sand.u32 %s75, 1
        %s562 = smul.addr %s561, 64
        %s563 = scalar_lea.vmem [#allocation6], %s562
        %p564 = pneg %p88
        %p565 = pneg %p85
        %p566 = pneg %p109
        %p567 = pneg %p106
        %p568 = pneg %p130
        %p569 = pneg %p127
        %p570 = pneg %p151
        %p571 = pneg %p148
        %p572 = pneg %p172
        %p573 = pneg %p169
        %p574 = pneg %p193
        %p575 = pneg %p190
        %p576 = pneg %p214
        %p577 = pneg %p211
        %p578 = pneg %p235
        %p579 = pneg %p232
        %p580 = pneg %p256
        %p581 = pneg %p253
        %p582 = pneg %p277
        %p583 = pneg %p274
        %p584 = pneg %p303
        %p585 = pneg %p300
        %s586 = sand.u32 %s290, 1
        %s587 = scalar_lea.sflag [#allocation5], %s586
        %s588 = sand.u32 %s290, 1
        %s589 = smul.addr %s588, 64
        %s590 = scalar_lea.vmem [#allocation17], %s589
        %p591 = pneg %p329
        %p592 = pneg %p326
        %s593 = sand.u32 %s41, 1
        %s594 = scalar_lea.sflag [#allocation19], %s593
        %s595 = sand.u32 %s316, 1
        %s596 = smul.addr %s595, 64
        %s597 = scalar_lea.vmem [#allocation18], %s596
        %p598 = pneg %p355
        %p599 = pneg %p352
        %s600 = sand.u32 %s41, 1
        %s601 = scalar_lea.sflag [#allocation19], %s600
        %s602 = sand.u32 %s342, 1
        %s603 = smul.addr %s602, 64
        %s604 = scalar_lea.vmem [#allocation20], %s603
        %s605 = smul.u32 8, %s41
        %s606 = smul.u32 8, %s41
        %s607 = smul.u32 8, %s41
        %s608 = smul.u32 8, %s41
        %s609 = smul.u32 8, %s41
        %s610 = sld [smem:[#allocation2]]
        %v611 = vld [vmem:[%s514] sm:$0xff]
        %v612 = vld [vmem:[%s514 + $0x8] sm:$0xff]
        %v613 = vld [vmem:[%s514 + $0x10] sm:$0xff]
        %v614 = vld [vmem:[%s514 + $0x18] sm:$0xff]
        %v615 = vld [vmem:[%s514 + $0x20] sm:$0xff]
        %v616 = vld [vmem:[%s514 + $0x28] sm:$0xff]
        %v617 = vld [vmem:[%s514 + $0x30] sm:$0xff]
        %v618 = vld [vmem:[%s514 + $0x38] sm:$0xff]
        %v619 = vld [vmem:[%s523] sm:$0xff]
        %v620 = vld [vmem:[%s523 + $0x8] sm:$0xff]
        %v621 = vld [vmem:[%s523 + $0x10] sm:$0xff]
        %v622 = vld [vmem:[%s523 + $0x18] sm:$0xff]
        %v623 = vld [vmem:[%s523 + $0x20] sm:$0xff]
        %v624 = vld [vmem:[%s523 + $0x28] sm:$0xff]
        %v625 = vld [vmem:[%s523 + $0x30] sm:$0xff]
        %v626 = vld [vmem:[%s523 + $0x38] sm:$0xff]
        %v627 = vld [vmem:[#allocation8] sm:$0xff]
        %v628 = vld [vmem:[#allocation8 + $0x8] sm:$0xff]
        %v629 = vld [vmem:[#allocation8 + $0x10] sm:$0xff]
        %v630 = vld [vmem:[#allocation8 + $0x18] sm:$0xff]
        %vm631 = vcmask 261120
        %v633 = vsel %vm631, %v619, 0
        %v636 = vsel %vm631, %v620, 0
        %v639 = vsel %vm631, %v621, 0
        %v642 = vsel %vm631, %v622, 0
        %v645 = vsel %vm631, %v623, 0
        %v648 = vsel %vm631, %v624, 0
        %v651 = vsel %vm631, %v625, 0
        %v654 = vsel %vm631, %v626, 0
        %656 = vmatprep.subr.mxu0 0.0
        %657 = vmatpush1.msra.mxu0 0.0
        %658 = vmatprep.subr.mxu0 0.0
        %659 = vmatpush1.msra.mxu0 0.0
        %660 = vmatprep.subr.mxu0 0.0
        %661 = vmatpush1.msra.mxu0 0.0
        %662 = vmatprep.subr.mxu0 0.0
        %663 = vmatpush1.msra.mxu0 0.0
        %664 = vmatprep.subr.mxu0 0.0
        %665 = vmatpush1.msra.mxu0 0.0
        %666 = vmatprep.subr.mxu0 0.0
        %667 = vmatpush1.msra.mxu0 0.0
        %668 = vmatprep.subr.mxu0 0.0
        %669 = vmatpush1.msra.mxu0 0.0
        %670 = vmatprep.subr.mxu0 0.0
        %671 = vmatpush1.msra.mxu0 0.0
        %672 = vmatprep.subr.mxu0 0.0
        %673 = vmatpush1.msra.mxu0 0.0
        %674 = vmatprep.subr.mxu0 0.0
        %675 = vmatpush1.msra.mxu0 0.0
        %676 = vmatprep.subr.mxu0 0.0
        %677 = vmatpush1.msra.mxu0 0.0
        %678 = vmatprep.subr.mxu0 0.0
        %679 = vmatpush1.msra.mxu0 0.0
        %680 = vmatprep.subr.mxu0 0.0
        %681 = vmatpush1.msra.mxu0 %v630
        %682 = vmatprep.subr.mxu0 0.0
        %683 = vmatpush1.msra.mxu0 %v629
        %684 = vmatprep.subr.mxu0 0.0
        %685 = vmatpush1.msra.mxu0 %v628
        %686 = vmatprep.subr.mxu0 0.0
        %687 = vmatpush1.msra.mxu0 %v627
        %688 = vmatprep.subr.mxu0 0.0
        %689 = vmatpush2.msra.mxu0 0.0
        %690 = vmatprep.subr.mxu0 0.0
        %691 = vmatpush2.msra.mxu0 0.0
        %692 = vmatprep.subr.mxu0 0.0
        %693 = vmatpush2.msra.mxu0 0.0
        %694 = vmatprep.subr.mxu0 0.0
        %695 = vmatpush2.msra.mxu0 0.0
        %696 = vmatprep.subr.mxu0 0.0
        %697 = vmatpush2.msra.mxu0 0.0
        %698 = vmatprep.subr.mxu0 0.0
        %699 = vmatpush2.msra.mxu0 0.0
        %700 = vmatprep.subr.mxu0 0.0
        %701 = vmatpush2.msra.mxu0 0.0
        %702 = vmatprep.subr.mxu0 0.0
        %703 = vmatpush2.msra.mxu0 0.0
        %704 = vmatprep.subr.mxu0 0.0
        %705 = vmatpush2.msra.mxu0 0.0
        %706 = vmatprep.subr.mxu0 0.0
        %707 = vmatpush2.msra.mxu0 0.0
        %708 = vmatprep.subr.mxu0 0.0
        %709 = vmatpush2.msra.mxu0 0.0
        %710 = vmatprep.subr.mxu0 0.0
        %711 = vmatpush2.msra.mxu0 0.0
        %712 = vmatprep.subr.mxu0 0.0
        %713 = vmatpush2.msra.mxu0 0.0
        %714 = vmatprep.subr.mxu0 0.0
        %715 = vmatpush2.msra.mxu0 0.0
        %716 = vmatprep.subr.mxu0 0.0
        %717 = vmatpush2.msra.mxu0 0.0
        %718 = vmatprep.subr.mxu0 0.0
        %719 = vmatpush2.msra.mxu0 0.0
        %720 = vmatprep.mubr.f32.mxu0 0.0
        %721 = vmatmul.mubr.f32.gmra.mxu0 %v633
        %v722 = vpop.f32.mrf.mxu0
        %v723 = vadd.f32 0.0, %v722
        %v724 = vpop.f32.mrf.mxu0
        %725 = vmatprep.mubr.f32.mxu0 0.0
        %726 = vmatmul.mubr.f32.gmra.mxu0 %v636
        %v727 = vpop.f32.mrf.mxu0
        %v728 = vadd.f32 0.0, %v727
        %v729 = vpop.f32.mrf.mxu0
        %730 = vmatprep.mubr.f32.mxu0 0.0
        %731 = vmatmul.mubr.f32.gmra.mxu0 %v639
        %v732 = vpop.f32.mrf.mxu0
        %v733 = vadd.f32 0.0, %v732
        %v734 = vpop.f32.mrf.mxu0
        %735 = vmatprep.mubr.f32.mxu0 0.0
        %736 = vmatmul.mubr.f32.gmra.mxu0 %v642
        %v737 = vpop.f32.mrf.mxu0
        %v738 = vadd.f32 0.0, %v737
        %v739 = vpop.f32.mrf.mxu0
        %740 = vmatprep.mubr.f32.mxu0 0.0
        %741 = vmatmul.mubr.f32.gmra.mxu0 %v645
        %v742 = vpop.f32.mrf.mxu0
        %v743 = vadd.f32 0.0, %v742
        %v744 = vpop.f32.mrf.mxu0
        %745 = vmatprep.mubr.f32.mxu0 0.0
        %746 = vmatmul.mubr.f32.gmra.mxu0 %v648
        %v747 = vpop.f32.mrf.mxu0
        %v748 = vadd.f32 0.0, %v747
        %v749 = vpop.f32.mrf.mxu0
        %750 = vmatprep.mubr.f32.mxu0 0.0
        %751 = vmatmul.mubr.f32.gmra.mxu0 %v651
        %v752 = vpop.f32.mrf.mxu0
        %v753 = vadd.f32 0.0, %v752
        %v754 = vpop.f32.mrf.mxu0
        %755 = vmatprep.mubr.f32.mxu0 0.0
        %756 = vmatmul.mubr.f32.gmra.mxu0 %v654
        %v757 = vpop.f32.mrf.mxu0
        %v758 = vadd.f32 0.0, %v757
        %v759 = vpop.f32.mrf.mxu0
        %760 = vdwg.mxu0
        %v761 = vmax.f32 %v723, 0.0
        %v762 = vmax.f32 %v728, 0.0
        %v763 = vmax.f32 %v733, 0.0
        %v764 = vmax.f32 %v738, 0.0
        %v765 = vmax.f32 %v743, 0.0
        %v766 = vmax.f32 %v748, 0.0
        %v767 = vmax.f32 %v753, 0.0
        %v768 = vmax.f32 %v758, 0.0
        %v769 = vld [vmem:[#allocation9] sm:$0xff]
        %v770 = vld [vmem:[#allocation9 + $0x8] sm:$0xff]
        %v771 = vld [vmem:[#allocation9 + $0x10] sm:$0xff]
        %v772 = vld [vmem:[#allocation9 + $0x18] sm:$0xff]
        %773 = vmatprep.subr.mxu0 0.0
        %774 = vmatpush1.msra.mxu0 0.0
        %775 = vmatprep.subr.mxu0 0.0
        %776 = vmatpush1.msra.mxu0 0.0
        %777 = vmatprep.subr.mxu0 0.0
        %778 = vmatpush1.msra.mxu0 0.0
        %779 = vmatprep.subr.mxu0 0.0
        %780 = vmatpush1.msra.mxu0 0.0
        %781 = vmatprep.subr.mxu0 0.0
        %782 = vmatpush1.msra.mxu0 0.0
        %783 = vmatprep.subr.mxu0 0.0
        %784 = vmatpush1.msra.mxu0 0.0
        %785 = vmatprep.subr.mxu0 0.0
        %786 = vmatpush1.msra.mxu0 0.0
        %787 = vmatprep.subr.mxu0 0.0
        %788 = vmatpush1.msra.mxu0 0.0
        %789 = vmatprep.subr.mxu0 0.0
        %790 = vmatpush1.msra.mxu0 0.0
        %791 = vmatprep.subr.mxu0 0.0
        %792 = vmatpush1.msra.mxu0 0.0
        %793 = vmatprep.subr.mxu0 0.0
        %794 = vmatpush1.msra.mxu0 0.0
        %795 = vmatprep.subr.mxu0 0.0
        %796 = vmatpush1.msra.mxu0 0.0
        %797 = vmatprep.subr.mxu0 0.0
        %798 = vmatpush1.msra.mxu0 %v772
        %799 = vmatprep.subr.mxu0 0.0
        %800 = vmatpush1.msra.mxu0 %v771
        %801 = vmatprep.subr.mxu0 0.0
        %802 = vmatpush1.msra.mxu0 %v770
        %803 = vmatprep.subr.mxu0 0.0
        %804 = vmatpush1.msra.mxu0 %v769
        %805 = vmatprep.subr.mxu0 0.0
        %806 = vmatpush2.msra.mxu0 0.0
        %807 = vmatprep.subr.mxu0 0.0
        %808 = vmatpush2.msra.mxu0 0.0
        %809 = vmatprep.subr.mxu0 0.0
        %810 = vmatpush2.msra.mxu0 0.0
        %811 = vmatprep.subr.mxu0 0.0
        %812 = vmatpush2.msra.mxu0 0.0
        %813 = vmatprep.subr.mxu0 0.0
        %814 = vmatpush2.msra.mxu0 0.0
        %815 = vmatprep.subr.mxu0 0.0
        %816 = vmatpush2.msra.mxu0 0.0
        %817 = vmatprep.subr.mxu0 0.0
        %818 = vmatpush2.msra.mxu0 0.0
        %819 = vmatprep.subr.mxu0 0.0
        %820 = vmatpush2.msra.mxu0 0.0
        %821 = vmatprep.subr.mxu0 0.0
        %822 = vmatpush2.msra.mxu0 0.0
        %823 = vmatprep.subr.mxu0 0.0
        %824 = vmatpush2.msra.mxu0 0.0
        %825 = vmatprep.subr.mxu0 0.0
        %826 = vmatpush2.msra.mxu0 0.0
        %827 = vmatprep.subr.mxu0 0.0
        %828 = vmatpush2.msra.mxu0 0.0
        %829 = vmatprep.subr.mxu0 0.0
        %830 = vmatpush2.msra.mxu0 0.0
        %831 = vmatprep.subr.mxu0 0.0
        %832 = vmatpush2.msra.mxu0 0.0
        %833 = vmatprep.subr.mxu0 0.0
        %834 = vmatpush2.msra.mxu0 0.0
        %835 = vmatprep.subr.mxu0 0.0
        %836 = vmatpush2.msra.mxu0 0.0
        %837 = vmatprep.mubr.f32.mxu0 0.0
        %838 = vmatmul.mubr.f32.gmra.mxu0 %v633
        %v839 = vpop.f32.mrf.mxu0
        %v840 = vadd.f32 0.0, %v839
        %v841 = vpop.f32.mrf.mxu0
        %842 = vmatprep.mubr.f32.mxu0 0.0
        %843 = vmatmul.mubr.f32.gmra.mxu0 %v636
        %v844 = vpop.f32.mrf.mxu0
        %v845 = vadd.f32 0.0, %v844
        %v846 = vpop.f32.mrf.mxu0
        %847 = vmatprep.mubr.f32.mxu0 0.0
        %848 = vmatmul.mubr.f32.gmra.mxu0 %v639
        %v849 = vpop.f32.mrf.mxu0
        %v850 = vadd.f32 0.0, %v849
        %v851 = vpop.f32.mrf.mxu0
        %852 = vmatprep.mubr.f32.mxu0 0.0
        %853 = vmatmul.mubr.f32.gmra.mxu0 %v642
        %v854 = vpop.f32.mrf.mxu0
        %v855 = vadd.f32 0.0, %v854
        %v856 = vpop.f32.mrf.mxu0
        %857 = vmatprep.mubr.f32.mxu0 0.0
        %858 = vmatmul.mubr.f32.gmra.mxu0 %v645
        %v859 = vpop.f32.mrf.mxu0
        %v860 = vadd.f32 0.0, %v859
        %v861 = vpop.f32.mrf.mxu0
        %862 = vmatprep.mubr.f32.mxu0 0.0
        %863 = vmatmul.mubr.f32.gmra.mxu0 %v648
        %v864 = vpop.f32.mrf.mxu0
        %v865 = vadd.f32 0.0, %v864
        %v866 = vpop.f32.mrf.mxu0
        %867 = vmatprep.mubr.f32.mxu0 0.0
        %868 = vmatmul.mubr.f32.gmra.mxu0 %v651
        %v869 = vpop.f32.mrf.mxu0
        %v870 = vadd.f32 0.0, %v869
        %v871 = vpop.f32.mrf.mxu0
        %872 = vmatprep.mubr.f32.mxu0 0.0
        %873 = vmatmul.mubr.f32.gmra.mxu0 %v654
        %v874 = vpop.f32.mrf.mxu0
        %v875 = vadd.f32 0.0, %v874
        %v876 = vpop.f32.mrf.mxu0
        %877 = vdwg.mxu0
        %v878 = vmax.f32 %v840, 0.0
        %v879 = vmax.f32 %v845, 0.0
        %v880 = vmax.f32 %v850, 0.0
        %v881 = vmax.f32 %v855, 0.0
        %v882 = vmax.f32 %v860, 0.0
        %v883 = vmax.f32 %v865, 0.0
        %v884 = vmax.f32 %v870, 0.0
        %v885 = vmax.f32 %v875, 0.0
        %v886 = vld [vmem:[#allocation12] sm:$0xff]
        %v887 = vld [vmem:[#allocation12 + $0x8] sm:$0xff]
        %v888 = vld [vmem:[#allocation12 + $0x10] sm:$0xff]
        %v889 = vld [vmem:[#allocation12 + $0x18] sm:$0xff]
        %v891 = vsel %vm631, %v611, 0
        %v894 = vsel %vm631, %v612, 0
        %v897 = vsel %vm631, %v613, 0
        %v900 = vsel %vm631, %v614, 0
        %v903 = vsel %vm631, %v615, 0
        %v906 = vsel %vm631, %v616, 0
        %v909 = vsel %vm631, %v617, 0
        %v912 = vsel %vm631, %v618, 0
        %914 = vmatprep.subr.mxu0 0.0
        %915 = vmatpush1.msra.mxu0 0.0
        %916 = vmatprep.subr.mxu0 0.0
        %917 = vmatpush1.msra.mxu0 0.0
        %918 = vmatprep.subr.mxu0 0.0
        %919 = vmatpush1.msra.mxu0 0.0
        %920 = vmatprep.subr.mxu0 0.0
        %921 = vmatpush1.msra.mxu0 0.0
        %922 = vmatprep.subr.mxu0 0.0
        %923 = vmatpush1.msra.mxu0 0.0
        %924 = vmatprep.subr.mxu0 0.0
        %925 = vmatpush1.msra.mxu0 0.0
        %926 = vmatprep.subr.mxu0 0.0
        %927 = vmatpush1.msra.mxu0 0.0
        %928 = vmatprep.subr.mxu0 0.0
        %929 = vmatpush1.msra.mxu0 0.0
        %930 = vmatprep.subr.mxu0 0.0
        %931 = vmatpush1.msra.mxu0 0.0
        %932 = vmatprep.subr.mxu0 0.0
        %933 = vmatpush1.msra.mxu0 0.0
        %934 = vmatprep.subr.mxu0 0.0
        %935 = vmatpush1.msra.mxu0 0.0
        %936 = vmatprep.subr.mxu0 0.0
        %937 = vmatpush1.msra.mxu0 0.0
        %938 = vmatprep.subr.mxu0 0.0
        %939 = vmatpush1.msra.mxu0 %v889
        %940 = vmatprep.subr.mxu0 0.0
        %941 = vmatpush1.msra.mxu0 %v888
        %942 = vmatprep.subr.mxu0 0.0
        %943 = vmatpush1.msra.mxu0 %v887
        %944 = vmatprep.subr.mxu0 0.0
        %945 = vmatpush1.msra.mxu0 %v886
        %946 = vmatprep.subr.mxu0 0.0
        %947 = vmatpush2.msra.mxu0 0.0
        %948 = vmatprep.subr.mxu0 0.0
        %949 = vmatpush2.msra.mxu0 0.0
        %950 = vmatprep.subr.mxu0 0.0
        %951 = vmatpush2.msra.mxu0 0.0
        %952 = vmatprep.subr.mxu0 0.0
        %953 = vmatpush2.msra.mxu0 0.0
        %954 = vmatprep.subr.mxu0 0.0
        %955 = vmatpush2.msra.mxu0 0.0
        %956 = vmatprep.subr.mxu0 0.0
        %957 = vmatpush2.msra.mxu0 0.0
        %958 = vmatprep.subr.mxu0 0.0
        %959 = vmatpush2.msra.mxu0 0.0
        %960 = vmatprep.subr.mxu0 0.0
        %961 = vmatpush2.msra.mxu0 0.0
        %962 = vmatprep.subr.mxu0 0.0
        %963 = vmatpush2.msra.mxu0 0.0
        %964 = vmatprep.subr.mxu0 0.0
        %965 = vmatpush2.msra.mxu0 0.0
        %966 = vmatprep.subr.mxu0 0.0
        %967 = vmatpush2.msra.mxu0 0.0
        %968 = vmatprep.subr.mxu0 0.0
        %969 = vmatpush2.msra.mxu0 0.0
        %970 = vmatprep.subr.mxu0 0.0
        %971 = vmatpush2.msra.mxu0 0.0
        %972 = vmatprep.subr.mxu0 0.0
        %973 = vmatpush2.msra.mxu0 0.0
        %974 = vmatprep.subr.mxu0 0.0
        %975 = vmatpush2.msra.mxu0 0.0
        %976 = vmatprep.subr.mxu0 0.0
        %977 = vmatpush2.msra.mxu0 0.0
        %978 = vmatprep.mubr.f32.mxu0 0.0
        %979 = vmatmul.mubr.f32.gmra.mxu0 %v891
        %v980 = vpop.f32.mrf.mxu0
        %v981 = vadd.f32 0.0, %v980
        %v982 = vpop.f32.mrf.mxu0
        %983 = vmatprep.mubr.f32.mxu0 0.0
        %984 = vmatmul.mubr.f32.gmra.mxu0 %v894
        %v985 = vpop.f32.mrf.mxu0
        %v986 = vadd.f32 0.0, %v985
        %v987 = vpop.f32.mrf.mxu0
        %988 = vmatprep.mubr.f32.mxu0 0.0
        %989 = vmatmul.mubr.f32.gmra.mxu0 %v897
        %v990 = vpop.f32.mrf.mxu0
        %v991 = vadd.f32 0.0, %v990
        %v992 = vpop.f32.mrf.mxu0
        %993 = vmatprep.mubr.f32.mxu0 0.0
        %994 = vmatmul.mubr.f32.gmra.mxu0 %v900
        %v995 = vpop.f32.mrf.mxu0
        %v996 = vadd.f32 0.0, %v995
        %v997 = vpop.f32.mrf.mxu0
        %998 = vmatprep.mubr.f32.mxu0 0.0
        %999 = vmatmul.mubr.f32.gmra.mxu0 %v903
        %v1000 = vpop.f32.mrf.mxu0
        %v1001 = vadd.f32 0.0, %v1000
        %v1002 = vpop.f32.mrf.mxu0
        %1003 = vmatprep.mubr.f32.mxu0 0.0
        %1004 = vmatmul.mubr.f32.gmra.mxu0 %v906
        %v1005 = vpop.f32.mrf.mxu0
        %v1006 = vadd.f32 0.0, %v1005
        %v1007 = vpop.f32.mrf.mxu0
        %1008 = vmatprep.mubr.f32.mxu0 0.0
        %1009 = vmatmul.mubr.f32.gmra.mxu0 %v909
        %v1010 = vpop.f32.mrf.mxu0
        %v1011 = vadd.f32 0.0, %v1010
        %v1012 = vpop.f32.mrf.mxu0
        %1013 = vmatprep.mubr.f32.mxu0 0.0
        %1014 = vmatmul.mubr.f32.gmra.mxu0 %v912
        %v1015 = vpop.f32.mrf.mxu0
        %v1016 = vadd.f32 0.0, %v1015
        %v1017 = vpop.f32.mrf.mxu0
        %1018 = vdwg.mxu0
        %v1019 = vmax.f32 %v981, 0.0
        %v1020 = vmax.f32 %v986, 0.0
        %v1021 = vmax.f32 %v991, 0.0
        %v1022 = vmax.f32 %v996, 0.0
        %v1023 = vmax.f32 %v1001, 0.0
        %v1024 = vmax.f32 %v1006, 0.0
        %v1025 = vmax.f32 %v1011, 0.0
        %v1026 = vmax.f32 %v1016, 0.0
        %v1027 = vld [vmem:[#allocation14] sm:$0xff]
        %v1028 = vld [vmem:[#allocation14 + $0x8] sm:$0xff]
        %v1029 = vld [vmem:[#allocation14 + $0x10] sm:$0xff]
        %v1030 = vld [vmem:[#allocation14 + $0x18] sm:$0xff]
        %1031 = vmatprep.subr.mxu0 0.0
        %1032 = vmatpush1.msra.mxu0 0.0
        %1033 = vmatprep.subr.mxu0 0.0
        %1034 = vmatpush1.msra.mxu0 0.0
        %1035 = vmatprep.subr.mxu0 0.0
        %1036 = vmatpush1.msra.mxu0 0.0
        %1037 = vmatprep.subr.mxu0 0.0
        %1038 = vmatpush1.msra.mxu0 0.0
        %1039 = vmatprep.subr.mxu0 0.0
        %1040 = vmatpush1.msra.mxu0 0.0
        %1041 = vmatprep.subr.mxu0 0.0
        %1042 = vmatpush1.msra.mxu0 0.0
        %1043 = vmatprep.subr.mxu0 0.0
        %1044 = vmatpush1.msra.mxu0 0.0
        %1045 = vmatprep.subr.mxu0 0.0
        %1046 = vmatpush1.msra.mxu0 0.0
        %1047 = vmatprep.subr.mxu0 0.0
        %1048 = vmatpush1.msra.mxu0 0.0
        %1049 = vmatprep.subr.mxu0 0.0
        %1050 = vmatpush1.msra.mxu0 0.0
        %1051 = vmatprep.subr.mxu0 0.0
        %1052 = vmatpush1.msra.mxu0 0.0
        %1053 = vmatprep.subr.mxu0 0.0
        %1054 = vmatpush1.msra.mxu0 0.0
        %1055 = vmatprep.subr.mxu0 0.0
        %1056 = vmatpush1.msra.mxu0 %v1030
        %1057 = vmatprep.subr.mxu0 0.0
        %1058 = vmatpush1.msra.mxu0 %v1029
        %1059 = vmatprep.subr.mxu0 0.0
        %1060 = vmatpush1.msra.mxu0 %v1028
        %1061 = vmatprep.subr.mxu0 0.0
        %1062 = vmatpush1.msra.mxu0 %v1027
        %1063 = vmatprep.subr.mxu0 0.0
        %1064 = vmatpush2.msra.mxu0 0.0
        %1065 = vmatprep.subr.mxu0 0.0
        %1066 = vmatpush2.msra.mxu0 0.0
        %1067 = vmatprep.subr.mxu0 0.0
        %1068 = vmatpush2.msra.mxu0 0.0
        %1069 = vmatprep.subr.mxu0 0.0
        %1070 = vmatpush2.msra.mxu0 0.0
        %1071 = vmatprep.subr.mxu0 0.0
        %1072 = vmatpush2.msra.mxu0 0.0
        %1073 = vmatprep.subr.mxu0 0.0
        %1074 = vmatpush2.msra.mxu0 0.0
        %1075 = vmatprep.subr.mxu0 0.0
        %1076 = vmatpush2.msra.mxu0 0.0
        %1077 = vmatprep.subr.mxu0 0.0
        %1078 = vmatpush2.msra.mxu0 0.0
        %1079 = vmatprep.subr.mxu0 0.0
        %1080 = vmatpush2.msra.mxu0 0.0
        %1081 = vmatprep.subr.mxu0 0.0
        %1082 = vmatpush2.msra.mxu0 0.0
        %1083 = vmatprep.subr.mxu0 0.0
        %1084 = vmatpush2.msra.mxu0 0.0
        %1085 = vmatprep.subr.mxu0 0.0
        %1086 = vmatpush2.msra.mxu0 0.0
        %1087 = vmatprep.subr.mxu0 0.0
        %1088 = vmatpush2.msra.mxu0 0.0
        %1089 = vmatprep.subr.mxu0 0.0
        %1090 = vmatpush2.msra.mxu0 0.0
        %1091 = vmatprep.subr.mxu0 0.0
        %1092 = vmatpush2.msra.mxu0 0.0
        %1093 = vmatprep.subr.mxu0 0.0
        %1094 = vmatpush2.msra.mxu0 0.0
        %1095 = vmatprep.mubr.f32.mxu0 0.0
        %1096 = vmatmul.mubr.f32.gmra.mxu0 %v891
        %v1097 = vpop.f32.mrf.mxu0
        %v1098 = vadd.f32 0.0, %v1097
        %v1099 = vpop.f32.mrf.mxu0
        %1100 = vmatprep.mubr.f32.mxu0 0.0
        %1101 = vmatmul.mubr.f32.gmra.mxu0 %v894
        %v1102 = vpop.f32.mrf.mxu0
        %v1103 = vadd.f32 0.0, %v1102
        %v1104 = vpop.f32.mrf.mxu0
        %1105 = vmatprep.mubr.f32.mxu0 0.0
        %1106 = vmatmul.mubr.f32.gmra.mxu0 %v897
        %v1107 = vpop.f32.mrf.mxu0
        %v1108 = vadd.f32 0.0, %v1107
        %v1109 = vpop.f32.mrf.mxu0
        %1110 = vmatprep.mubr.f32.mxu0 0.0
        %1111 = vmatmul.mubr.f32.gmra.mxu0 %v900
        %v1112 = vpop.f32.mrf.mxu0
        %v1113 = vadd.f32 0.0, %v1112
        %v1114 = vpop.f32.mrf.mxu0
        %1115 = vmatprep.mubr.f32.mxu0 0.0
        %1116 = vmatmul.mubr.f32.gmra.mxu0 %v903
        %v1117 = vpop.f32.mrf.mxu0
        %v1118 = vadd.f32 0.0, %v1117
        %v1119 = vpop.f32.mrf.mxu0
        %1120 = vmatprep.mubr.f32.mxu0 0.0
        %1121 = vmatmul.mubr.f32.gmra.mxu0 %v906
        %v1122 = vpop.f32.mrf.mxu0
        %v1123 = vadd.f32 0.0, %v1122
        %v1124 = vpop.f32.mrf.mxu0
        %1125 = vmatprep.mubr.f32.mxu0 0.0
        %1126 = vmatmul.mubr.f32.gmra.mxu0 %v909
        %v1127 = vpop.f32.mrf.mxu0
        %v1128 = vadd.f32 0.0, %v1127
        %v1129 = vpop.f32.mrf.mxu0
        %1130 = vmatprep.mubr.f32.mxu0 0.0
        %1131 = vmatmul.mubr.f32.gmra.mxu0 %v912
        %v1132 = vpop.f32.mrf.mxu0
        %v1133 = vadd.f32 0.0, %v1132
        %v1134 = vpop.f32.mrf.mxu0
        %1135 = vdwg.mxu0
        %v1136 = vmax.f32 %v1098, 0.0
        %v1137 = vmax.f32 %v1103, 0.0
        %v1138 = vmax.f32 %v1108, 0.0
        %v1139 = vmax.f32 %v1113, 0.0
        %v1140 = vmax.f32 %v1118, 0.0
        %v1141 = vmax.f32 %v1123, 0.0
        %v1142 = vmax.f32 %v1128, 0.0
        %v1143 = vmax.f32 %v1133, 0.0
        %v1145 = vsel %vm631, %v878, 0
        %v1148 = vsel %vm631, %v1019, 0
        %1150 = vmatprep.subr.mxu0 0.0
        %1151 = vmatpush1.xpose.msra.mxu0 0.0
        %1152 = vmatprep.subr.mxu0 0.0
        %1153 = vmatpush1.xpose.msra.mxu0 0.0
        %1154 = vmatprep.subr.mxu0 0.0
        %1155 = vmatpush1.xpose.msra.mxu0 0.0
        %1156 = vmatprep.subr.mxu0 0.0
        %1157 = vmatpush1.xpose.msra.mxu0 0.0
        %1158 = vmatprep.subr.mxu0 0.0
        %1159 = vmatpush1.xpose.msra.mxu0 0.0
        %1160 = vmatprep.subr.mxu0 0.0
        %1161 = vmatpush1.xpose.msra.mxu0 0.0
        %1162 = vmatprep.subr.mxu0 0.0
        %1163 = vmatpush1.xpose.msra.mxu0 0.0
        %1164 = vmatprep.subr.mxu0 0.0
        %1165 = vmatpush1.xpose.msra.mxu0 0.0
        %1166 = vmatprep.subr.mxu0 0.0
        %1167 = vmatpush1.xpose.msra.mxu0 0.0
        %1168 = vmatprep.subr.mxu0 0.0
        %1169 = vmatpush1.xpose.msra.mxu0 0.0
        %1170 = vmatprep.subr.mxu0 0.0
        %1171 = vmatpush1.xpose.msra.mxu0 0.0
        %1172 = vmatprep.subr.mxu0 0.0
        %1173 = vmatpush1.xpose.msra.mxu0 0.0
        %1174 = vmatprep.subr.mxu0 0.0
        %1175 = vmatpush1.xpose.msra.mxu0 0.0
        %1176 = vmatprep.subr.mxu0 0.0
        %1177 = vmatpush1.xpose.msra.mxu0 0.0
        %1178 = vmatprep.subr.mxu0 0.0
        %1179 = vmatpush1.xpose.msra.mxu0 0.0
        %1180 = vmatprep.subr.mxu0 0.0
        %1181 = vmatpush1.xpose.msra.mxu0 %v1148
        %1182 = vmatprep.subr.mxu0 0.0
        %1183 = vmatpush2.xpose.msra.mxu0 0.0
        %1184 = vmatprep.subr.mxu0 0.0
        %1185 = vmatpush2.xpose.msra.mxu0 0.0
        %1186 = vmatprep.subr.mxu0 0.0
        %1187 = vmatpush2.xpose.msra.mxu0 0.0
        %1188 = vmatprep.subr.mxu0 0.0
        %1189 = vmatpush2.xpose.msra.mxu0 0.0
        %1190 = vmatprep.subr.mxu0 0.0
        %1191 = vmatpush2.xpose.msra.mxu0 0.0
        %1192 = vmatprep.subr.mxu0 0.0
        %1193 = vmatpush2.xpose.msra.mxu0 0.0
        %1194 = vmatprep.subr.mxu0 0.0
        %1195 = vmatpush2.xpose.msra.mxu0 0.0
        %1196 = vmatprep.subr.mxu0 0.0
        %1197 = vmatpush2.xpose.msra.mxu0 0.0
        %1198 = vmatprep.subr.mxu0 0.0
        %1199 = vmatpush2.xpose.msra.mxu0 0.0
        %1200 = vmatprep.subr.mxu0 0.0
        %1201 = vmatpush2.xpose.msra.mxu0 0.0
        %1202 = vmatprep.subr.mxu0 0.0
        %1203 = vmatpush2.xpose.msra.mxu0 0.0
        %1204 = vmatprep.subr.mxu0 0.0
        %1205 = vmatpush2.xpose.msra.mxu0 0.0
        %1206 = vmatprep.subr.mxu0 0.0
        %1207 = vmatpush2.xpose.msra.mxu0 0.0
        %1208 = vmatprep.subr.mxu0 0.0
        %1209 = vmatpush2.xpose.msra.mxu0 0.0
        %1210 = vmatprep.subr.mxu0 0.0
        %1211 = vmatpush2.xpose.msra.mxu0 0.0
        %1212 = vmatprep.subr.mxu0 0.0
        %1213 = vmatpush2.xpose.msra.mxu0 0.0
        %1214 = vmatprep.mubr.f32.mxu0 0.0
        %1215 = vmatmul.mubr.f32.gmra.mxu0 %v1145
        %v1216 = vpop.f32.mrf.mxu0
        %v1217 = vadd.f32 0.0, %v1216
        %v1218 = vpop.f32.mrf.mxu0
        %1219 = vdwg.mxu0
        %v1221 = vsel %vm631, %v879, 0
        %v1224 = vsel %vm631, %v1020, 0
        %1226 = vmatprep.subr.mxu0 0.0
        %1227 = vmatpush1.xpose.msra.mxu0 0.0
        %1228 = vmatprep.subr.mxu0 0.0
        %1229 = vmatpush1.xpose.msra.mxu0 0.0
        %1230 = vmatprep.subr.mxu0 0.0
        %1231 = vmatpush1.xpose.msra.mxu0 0.0
        %1232 = vmatprep.subr.mxu0 0.0
        %1233 = vmatpush1.xpose.msra.mxu0 0.0
        %1234 = vmatprep.subr.mxu0 0.0
        %1235 = vmatpush1.xpose.msra.mxu0 0.0
        %1236 = vmatprep.subr.mxu0 0.0
        %1237 = vmatpush1.xpose.msra.mxu0 0.0
        %1238 = vmatprep.subr.mxu0 0.0
        %1239 = vmatpush1.xpose.msra.mxu0 0.0
        %1240 = vmatprep.subr.mxu0 0.0
        %1241 = vmatpush1.xpose.msra.mxu0 0.0
        %1242 = vmatprep.subr.mxu0 0.0
        %1243 = vmatpush1.xpose.msra.mxu0 0.0
        %1244 = vmatprep.subr.mxu0 0.0
        %1245 = vmatpush1.xpose.msra.mxu0 0.0
        %1246 = vmatprep.subr.mxu0 0.0
        %1247 = vmatpush1.xpose.msra.mxu0 0.0
        %1248 = vmatprep.subr.mxu0 0.0
        %1249 = vmatpush1.xpose.msra.mxu0 0.0
        %1250 = vmatprep.subr.mxu0 0.0
        %1251 = vmatpush1.xpose.msra.mxu0 0.0
        %1252 = vmatprep.subr.mxu0 0.0
        %1253 = vmatpush1.xpose.msra.mxu0 0.0
        %1254 = vmatprep.subr.mxu0 0.0
        %1255 = vmatpush1.xpose.msra.mxu0 0.0
        %1256 = vmatprep.subr.mxu0 0.0
        %1257 = vmatpush1.xpose.msra.mxu0 %v1224
        %1258 = vmatprep.subr.mxu0 0.0
        %1259 = vmatpush2.xpose.msra.mxu0 0.0
        %1260 = vmatprep.subr.mxu0 0.0
        %1261 = vmatpush2.xpose.msra.mxu0 0.0
        %1262 = vmatprep.subr.mxu0 0.0
        %1263 = vmatpush2.xpose.msra.mxu0 0.0
        %1264 = vmatprep.subr.mxu0 0.0
        %1265 = vmatpush2.xpose.msra.mxu0 0.0
        %1266 = vmatprep.subr.mxu0 0.0
        %1267 = vmatpush2.xpose.msra.mxu0 0.0
        %1268 = vmatprep.subr.mxu0 0.0
        %1269 = vmatpush2.xpose.msra.mxu0 0.0
        %1270 = vmatprep.subr.mxu0 0.0
        %1271 = vmatpush2.xpose.msra.mxu0 0.0
        %1272 = vmatprep.subr.mxu0 0.0
        %1273 = vmatpush2.xpose.msra.mxu0 0.0
        %1274 = vmatprep.subr.mxu0 0.0
        %1275 = vmatpush2.xpose.msra.mxu0 0.0
        %1276 = vmatprep.subr.mxu0 0.0
        %1277 = vmatpush2.xpose.msra.mxu0 0.0
        %1278 = vmatprep.subr.mxu0 0.0
        %1279 = vmatpush2.xpose.msra.mxu0 0.0
        %1280 = vmatprep.subr.mxu0 0.0
        %1281 = vmatpush2.xpose.msra.mxu0 0.0
        %1282 = vmatprep.subr.mxu0 0.0
        %1283 = vmatpush2.xpose.msra.mxu0 0.0
        %1284 = vmatprep.subr.mxu0 0.0
        %1285 = vmatpush2.xpose.msra.mxu0 0.0
        %1286 = vmatprep.subr.mxu0 0.0
        %1287 = vmatpush2.xpose.msra.mxu0 0.0
        %1288 = vmatprep.subr.mxu0 0.0
        %1289 = vmatpush2.xpose.msra.mxu0 0.0
        %1290 = vmatprep.mubr.f32.mxu0 0.0
        %1291 = vmatmul.mubr.f32.gmra.mxu0 %v1221
        %v1292 = vpop.f32.mrf.mxu0
        %v1293 = vadd.f32 0.0, %v1292
        %v1294 = vpop.f32.mrf.mxu0
        %1295 = vdwg.mxu0
        %v1297 = vsel %vm631, %v880, 0
        %v1300 = vsel %vm631, %v1021, 0
        %1302 = vmatprep.subr.mxu0 0.0
        %1303 = vmatpush1.xpose.msra.mxu0 0.0
        %1304 = vmatprep.subr.mxu0 0.0
        %1305 = vmatpush1.xpose.msra.mxu0 0.0
        %1306 = vmatprep.subr.mxu0 0.0
        %1307 = vmatpush1.xpose.msra.mxu0 0.0
        %1308 = vmatprep.subr.mxu0 0.0
        %1309 = vmatpush1.xpose.msra.mxu0 0.0
        %1310 = vmatprep.subr.mxu0 0.0
        %1311 = vmatpush1.xpose.msra.mxu0 0.0
        %1312 = vmatprep.subr.mxu0 0.0
        %1313 = vmatpush1.xpose.msra.mxu0 0.0
        %1314 = vmatprep.subr.mxu0 0.0
        %1315 = vmatpush1.xpose.msra.mxu0 0.0
        %1316 = vmatprep.subr.mxu0 0.0
        %1317 = vmatpush1.xpose.msra.mxu0 0.0
        %1318 = vmatprep.subr.mxu0 0.0
        %1319 = vmatpush1.xpose.msra.mxu0 0.0
        %1320 = vmatprep.subr.mxu0 0.0
        %1321 = vmatpush1.xpose.msra.mxu0 0.0
        %1322 = vmatprep.subr.mxu0 0.0
        %1323 = vmatpush1.xpose.msra.mxu0 0.0
        %1324 = vmatprep.subr.mxu0 0.0
        %1325 = vmatpush1.xpose.msra.mxu0 0.0
        %1326 = vmatprep.subr.mxu0 0.0
        %1327 = vmatpush1.xpose.msra.mxu0 0.0
        %1328 = vmatprep.subr.mxu0 0.0
        %1329 = vmatpush1.xpose.msra.mxu0 0.0
        %1330 = vmatprep.subr.mxu0 0.0
        %1331 = vmatpush1.xpose.msra.mxu0 0.0
        %1332 = vmatprep.subr.mxu0 0.0
        %1333 = vmatpush1.xpose.msra.mxu0 %v1300
        %1334 = vmatprep.subr.mxu0 0.0
        %1335 = vmatpush2.xpose.msra.mxu0 0.0
        %1336 = vmatprep.subr.mxu0 0.0
        %1337 = vmatpush2.xpose.msra.mxu0 0.0
        %1338 = vmatprep.subr.mxu0 0.0
        %1339 = vmatpush2.xpose.msra.mxu0 0.0
        %1340 = vmatprep.subr.mxu0 0.0
        %1341 = vmatpush2.xpose.msra.mxu0 0.0
        %1342 = vmatprep.subr.mxu0 0.0
        %1343 = vmatpush2.xpose.msra.mxu0 0.0
        %1344 = vmatprep.subr.mxu0 0.0
        %1345 = vmatpush2.xpose.msra.mxu0 0.0
        %1346 = vmatprep.subr.mxu0 0.0
        %1347 = vmatpush2.xpose.msra.mxu0 0.0
        %1348 = vmatprep.subr.mxu0 0.0
        %1349 = vmatpush2.xpose.msra.mxu0 0.0
        %1350 = vmatprep.subr.mxu0 0.0
        %1351 = vmatpush2.xpose.msra.mxu0 0.0
        %1352 = vmatprep.subr.mxu0 0.0
        %1353 = vmatpush2.xpose.msra.mxu0 0.0
        %1354 = vmatprep.subr.mxu0 0.0
        %1355 = vmatpush2.xpose.msra.mxu0 0.0
        %1356 = vmatprep.subr.mxu0 0.0
        %1357 = vmatpush2.xpose.msra.mxu0 0.0
        %1358 = vmatprep.subr.mxu0 0.0
        %1359 = vmatpush2.xpose.msra.mxu0 0.0
        %1360 = vmatprep.subr.mxu0 0.0
        %1361 = vmatpush2.xpose.msra.mxu0 0.0
        %1362 = vmatprep.subr.mxu0 0.0
        %1363 = vmatpush2.xpose.msra.mxu0 0.0
        %1364 = vmatprep.subr.mxu0 0.0
        %1365 = vmatpush2.xpose.msra.mxu0 0.0
        %1366 = vmatprep.mubr.f32.mxu0 0.0
        %1367 = vmatmul.mubr.f32.gmra.mxu0 %v1297
        %v1368 = vpop.f32.mrf.mxu0
        %v1369 = vadd.f32 0.0, %v1368
        %v1370 = vpop.f32.mrf.mxu0
        %1371 = vdwg.mxu0
        %v1373 = vsel %vm631, %v881, 0
        %v1376 = vsel %vm631, %v1022, 0
        %1378 = vmatprep.subr.mxu0 0.0
        %1379 = vmatpush1.xpose.msra.mxu0 0.0
        %1380 = vmatprep.subr.mxu0 0.0
        %1381 = vmatpush1.xpose.msra.mxu0 0.0
        %1382 = vmatprep.subr.mxu0 0.0
        %1383 = vmatpush1.xpose.msra.mxu0 0.0
        %1384 = vmatprep.subr.mxu0 0.0
        %1385 = vmatpush1.xpose.msra.mxu0 0.0
        %1386 = vmatprep.subr.mxu0 0.0
        %1387 = vmatpush1.xpose.msra.mxu0 0.0
        %1388 = vmatprep.subr.mxu0 0.0
        %1389 = vmatpush1.xpose.msra.mxu0 0.0
        %1390 = vmatprep.subr.mxu0 0.0
        %1391 = vmatpush1.xpose.msra.mxu0 0.0
        %1392 = vmatprep.subr.mxu0 0.0
        %1393 = vmatpush1.xpose.msra.mxu0 0.0
        %1394 = vmatprep.subr.mxu0 0.0
        %1395 = vmatpush1.xpose.msra.mxu0 0.0
        %1396 = vmatprep.subr.mxu0 0.0
        %1397 = vmatpush1.xpose.msra.mxu0 0.0
        %1398 = vmatprep.subr.mxu0 0.0
        %1399 = vmatpush1.xpose.msra.mxu0 0.0
        %1400 = vmatprep.subr.mxu0 0.0
        %1401 = vmatpush1.xpose.msra.mxu0 0.0
        %1402 = vmatprep.subr.mxu0 0.0
        %1403 = vmatpush1.xpose.msra.mxu0 0.0
        %1404 = vmatprep.subr.mxu0 0.0
        %1405 = vmatpush1.xpose.msra.mxu0 0.0
        %1406 = vmatprep.subr.mxu0 0.0
        %1407 = vmatpush1.xpose.msra.mxu0 0.0
        %1408 = vmatprep.subr.mxu0 0.0
        %1409 = vmatpush1.xpose.msra.mxu0 %v1376
        %1410 = vmatprep.subr.mxu0 0.0
        %1411 = vmatpush2.xpose.msra.mxu0 0.0
        %1412 = vmatprep.subr.mxu0 0.0
        %1413 = vmatpush2.xpose.msra.mxu0 0.0
        %1414 = vmatprep.subr.mxu0 0.0
        %1415 = vmatpush2.xpose.msra.mxu0 0.0
        %1416 = vmatprep.subr.mxu0 0.0
        %1417 = vmatpush2.xpose.msra.mxu0 0.0
        %1418 = vmatprep.subr.mxu0 0.0
        %1419 = vmatpush2.xpose.msra.mxu0 0.0
        %1420 = vmatprep.subr.mxu0 0.0
        %1421 = vmatpush2.xpose.msra.mxu0 0.0
        %1422 = vmatprep.subr.mxu0 0.0
        %1423 = vmatpush2.xpose.msra.mxu0 0.0
        %1424 = vmatprep.subr.mxu0 0.0
        %1425 = vmatpush2.xpose.msra.mxu0 0.0
        %1426 = vmatprep.subr.mxu0 0.0
        %1427 = vmatpush2.xpose.msra.mxu0 0.0
        %1428 = vmatprep.subr.mxu0 0.0
        %1429 = vmatpush2.xpose.msra.mxu0 0.0
        %1430 = vmatprep.subr.mxu0 0.0
        %1431 = vmatpush2.xpose.msra.mxu0 0.0
        %1432 = vmatprep.subr.mxu0 0.0
        %1433 = vmatpush2.xpose.msra.mxu0 0.0
        %1434 = vmatprep.subr.mxu0 0.0
        %1435 = vmatpush2.xpose.msra.mxu0 0.0
        %1436 = vmatprep.subr.mxu0 0.0
        %1437 = vmatpush2.xpose.msra.mxu0 0.0
        %1438 = vmatprep.subr.mxu0 0.0
        %1439 = vmatpush2.xpose.msra.mxu0 0.0
        %1440 = vmatprep.subr.mxu0 0.0
        %1441 = vmatpush2.xpose.msra.mxu0 0.0
        %1442 = vmatprep.mubr.f32.mxu0 0.0
        %1443 = vmatmul.mubr.f32.gmra.mxu0 %v1373
        %v1444 = vpop.f32.mrf.mxu0
        %v1445 = vadd.f32 0.0, %v1444
        %v1446 = vpop.f32.mrf.mxu0
        %1447 = vdwg.mxu0
        %v1449 = vsel %vm631, %v882, 0
        %v1452 = vsel %vm631, %v1023, 0
        %1454 = vmatprep.subr.mxu0 0.0
        %1455 = vmatpush1.xpose.msra.mxu0 0.0
        %1456 = vmatprep.subr.mxu0 0.0
        %1457 = vmatpush1.xpose.msra.mxu0 0.0
        %1458 = vmatprep.subr.mxu0 0.0
        %1459 = vmatpush1.xpose.msra.mxu0 0.0
        %1460 = vmatprep.subr.mxu0 0.0
        %1461 = vmatpush1.xpose.msra.mxu0 0.0
        %1462 = vmatprep.subr.mxu0 0.0
        %1463 = vmatpush1.xpose.msra.mxu0 0.0
        %1464 = vmatprep.subr.mxu0 0.0
        %1465 = vmatpush1.xpose.msra.mxu0 0.0
        %1466 = vmatprep.subr.mxu0 0.0
        %1467 = vmatpush1.xpose.msra.mxu0 0.0
        %1468 = vmatprep.subr.mxu0 0.0
        %1469 = vmatpush1.xpose.msra.mxu0 0.0
        %1470 = vmatprep.subr.mxu0 0.0
        %1471 = vmatpush1.xpose.msra.mxu0 0.0
        %1472 = vmatprep.subr.mxu0 0.0
        %1473 = vmatpush1.xpose.msra.mxu0 0.0
        %1474 = vmatprep.subr.mxu0 0.0
        %1475 = vmatpush1.xpose.msra.mxu0 0.0
        %1476 = vmatprep.subr.mxu0 0.0
        %1477 = vmatpush1.xpose.msra.mxu0 0.0
        %1478 = vmatprep.subr.mxu0 0.0
        %1479 = vmatpush1.xpose.msra.mxu0 0.0
        %1480 = vmatprep.subr.mxu0 0.0
        %1481 = vmatpush1.xpose.msra.mxu0 0.0
        %1482 = vmatprep.subr.mxu0 0.0
        %1483 = vmatpush1.xpose.msra.mxu0 0.0
        %1484 = vmatprep.subr.mxu0 0.0
        %1485 = vmatpush1.xpose.msra.mxu0 %v1452
        %1486 = vmatprep.subr.mxu0 0.0
        %1487 = vmatpush2.xpose.msra.mxu0 0.0
        %1488 = vmatprep.subr.mxu0 0.0
        %1489 = vmatpush2.xpose.msra.mxu0 0.0
        %1490 = vmatprep.subr.mxu0 0.0
        %1491 = vmatpush2.xpose.msra.mxu0 0.0
        %1492 = vmatprep.subr.mxu0 0.0
        %1493 = vmatpush2.xpose.msra.mxu0 0.0
        %1494 = vmatprep.subr.mxu0 0.0
        %1495 = vmatpush2.xpose.msra.mxu0 0.0
        %1496 = vmatprep.subr.mxu0 0.0
        %1497 = vmatpush2.xpose.msra.mxu0 0.0
        %1498 = vmatprep.subr.mxu0 0.0
        %1499 = vmatpush2.xpose.msra.mxu0 0.0
        %1500 = vmatprep.subr.mxu0 0.0
        %1501 = vmatpush2.xpose.msra.mxu0 0.0
        %1502 = vmatprep.subr.mxu0 0.0
        %1503 = vmatpush2.xpose.msra.mxu0 0.0
        %1504 = vmatprep.subr.mxu0 0.0
        %1505 = vmatpush2.xpose.msra.mxu0 0.0
        %1506 = vmatprep.subr.mxu0 0.0
        %1507 = vmatpush2.xpose.msra.mxu0 0.0
        %1508 = vmatprep.subr.mxu0 0.0
        %1509 = vmatpush2.xpose.msra.mxu0 0.0
        %1510 = vmatprep.subr.mxu0 0.0
        %1511 = vmatpush2.xpose.msra.mxu0 0.0
        %1512 = vmatprep.subr.mxu0 0.0
        %1513 = vmatpush2.xpose.msra.mxu0 0.0
        %1514 = vmatprep.subr.mxu0 0.0
        %1515 = vmatpush2.xpose.msra.mxu0 0.0
        %1516 = vmatprep.subr.mxu0 0.0
        %1517 = vmatpush2.xpose.msra.mxu0 0.0
        %1518 = vmatprep.mubr.f32.mxu0 0.0
        %1519 = vmatmul.mubr.f32.gmra.mxu0 %v1449
        %v1520 = vpop.f32.mrf.mxu0
        %v1521 = vadd.f32 0.0, %v1520
        %v1522 = vpop.f32.mrf.mxu0
        %1523 = vdwg.mxu0
        %v1525 = vsel %vm631, %v883, 0
        %v1528 = vsel %vm631, %v1024, 0
        %1530 = vmatprep.subr.mxu0 0.0
        %1531 = vmatpush1.xpose.msra.mxu0 0.0
        %1532 = vmatprep.subr.mxu0 0.0
        %1533 = vmatpush1.xpose.msra.mxu0 0.0
        %1534 = vmatprep.subr.mxu0 0.0
        %1535 = vmatpush1.xpose.msra.mxu0 0.0
        %1536 = vmatprep.subr.mxu0 0.0
        %1537 = vmatpush1.xpose.msra.mxu0 0.0
        %1538 = vmatprep.subr.mxu0 0.0
        %1539 = vmatpush1.xpose.msra.mxu0 0.0
        %1540 = vmatprep.subr.mxu0 0.0
        %1541 = vmatpush1.xpose.msra.mxu0 0.0
        %1542 = vmatprep.subr.mxu0 0.0
        %1543 = vmatpush1.xpose.msra.mxu0 0.0
        %1544 = vmatprep.subr.mxu0 0.0
        %1545 = vmatpush1.xpose.msra.mxu0 0.0
        %1546 = vmatprep.subr.mxu0 0.0
        %1547 = vmatpush1.xpose.msra.mxu0 0.0
        %1548 = vmatprep.subr.mxu0 0.0
        %1549 = vmatpush1.xpose.msra.mxu0 0.0
        %1550 = vmatprep.subr.mxu0 0.0
        %1551 = vmatpush1.xpose.msra.mxu0 0.0
        %1552 = vmatprep.subr.mxu0 0.0
        %1553 = vmatpush1.xpose.msra.mxu0 0.0
        %1554 = vmatprep.subr.mxu0 0.0
        %1555 = vmatpush1.xpose.msra.mxu0 0.0
        %1556 = vmatprep.subr.mxu0 0.0
        %1557 = vmatpush1.xpose.msra.mxu0 0.0
        %1558 = vmatprep.subr.mxu0 0.0
        %1559 = vmatpush1.xpose.msra.mxu0 0.0
        %1560 = vmatprep.subr.mxu0 0.0
        %1561 = vmatpush1.xpose.msra.mxu0 %v1528
        %1562 = vmatprep.subr.mxu0 0.0
        %1563 = vmatpush2.xpose.msra.mxu0 0.0
        %1564 = vmatprep.subr.mxu0 0.0
        %1565 = vmatpush2.xpose.msra.mxu0 0.0
        %1566 = vmatprep.subr.mxu0 0.0
        %1567 = vmatpush2.xpose.msra.mxu0 0.0
        %1568 = vmatprep.subr.mxu0 0.0
        %1569 = vmatpush2.xpose.msra.mxu0 0.0
        %1570 = vmatprep.subr.mxu0 0.0
        %1571 = vmatpush2.xpose.msra.mxu0 0.0
        %1572 = vmatprep.subr.mxu0 0.0
        %1573 = vmatpush2.xpose.msra.mxu0 0.0
        %1574 = vmatprep.subr.mxu0 0.0
        %1575 = vmatpush2.xpose.msra.mxu0 0.0
        %1576 = vmatprep.subr.mxu0 0.0
        %1577 = vmatpush2.xpose.msra.mxu0 0.0
        %1578 = vmatprep.subr.mxu0 0.0
        %1579 = vmatpush2.xpose.msra.mxu0 0.0
        %1580 = vmatprep.subr.mxu0 0.0
        %1581 = vmatpush2.xpose.msra.mxu0 0.0
        %1582 = vmatprep.subr.mxu0 0.0
        %1583 = vmatpush2.xpose.msra.mxu0 0.0
        %1584 = vmatprep.subr.mxu0 0.0
        %1585 = vmatpush2.xpose.msra.mxu0 0.0
        %1586 = vmatprep.subr.mxu0 0.0
        %1587 = vmatpush2.xpose.msra.mxu0 0.0
        %1588 = vmatprep.subr.mxu0 0.0
        %1589 = vmatpush2.xpose.msra.mxu0 0.0
        %1590 = vmatprep.subr.mxu0 0.0
        %1591 = vmatpush2.xpose.msra.mxu0 0.0
        %1592 = vmatprep.subr.mxu0 0.0
        %1593 = vmatpush2.xpose.msra.mxu0 0.0
        %1594 = vmatprep.mubr.f32.mxu0 0.0
        %1595 = vmatmul.mubr.f32.gmra.mxu0 %v1525
        %v1596 = vpop.f32.mrf.mxu0
        %v1597 = vadd.f32 0.0, %v1596
        %v1598 = vpop.f32.mrf.mxu0
        %1599 = vdwg.mxu0
        %v1601 = vsel %vm631, %v884, 0
        %v1604 = vsel %vm631, %v1025, 0
        %1606 = vmatprep.subr.mxu0 0.0
        %1607 = vmatpush1.xpose.msra.mxu0 0.0
        %1608 = vmatprep.subr.mxu0 0.0
        %1609 = vmatpush1.xpose.msra.mxu0 0.0
        %1610 = vmatprep.subr.mxu0 0.0
        %1611 = vmatpush1.xpose.msra.mxu0 0.0
        %1612 = vmatprep.subr.mxu0 0.0
        %1613 = vmatpush1.xpose.msra.mxu0 0.0
        %1614 = vmatprep.subr.mxu0 0.0
        %1615 = vmatpush1.xpose.msra.mxu0 0.0
        %1616 = vmatprep.subr.mxu0 0.0
        %1617 = vmatpush1.xpose.msra.mxu0 0.0
        %1618 = vmatprep.subr.mxu0 0.0
        %1619 = vmatpush1.xpose.msra.mxu0 0.0
        %1620 = vmatprep.subr.mxu0 0.0
        %1621 = vmatpush1.xpose.msra.mxu0 0.0
        %1622 = vmatprep.subr.mxu0 0.0
        %1623 = vmatpush1.xpose.msra.mxu0 0.0
        %1624 = vmatprep.subr.mxu0 0.0
        %1625 = vmatpush1.xpose.msra.mxu0 0.0
        %1626 = vmatprep.subr.mxu0 0.0
        %1627 = vmatpush1.xpose.msra.mxu0 0.0
        %1628 = vmatprep.subr.mxu0 0.0
        %1629 = vmatpush1.xpose.msra.mxu0 0.0
        %1630 = vmatprep.subr.mxu0 0.0
        %1631 = vmatpush1.xpose.msra.mxu0 0.0
        %1632 = vmatprep.subr.mxu0 0.0
        %1633 = vmatpush1.xpose.msra.mxu0 0.0
        %1634 = vmatprep.subr.mxu0 0.0
        %1635 = vmatpush1.xpose.msra.mxu0 0.0
        %1636 = vmatprep.subr.mxu0 0.0
        %1637 = vmatpush1.xpose.msra.mxu0 %v1604
        %1638 = vmatprep.subr.mxu0 0.0
        %1639 = vmatpush2.xpose.msra.mxu0 0.0
        %1640 = vmatprep.subr.mxu0 0.0
        %1641 = vmatpush2.xpose.msra.mxu0 0.0
        %1642 = vmatprep.subr.mxu0 0.0
        %1643 = vmatpush2.xpose.msra.mxu0 0.0
        %1644 = vmatprep.subr.mxu0 0.0
        %1645 = vmatpush2.xpose.msra.mxu0 0.0
        %1646 = vmatprep.subr.mxu0 0.0
        %1647 = vmatpush2.xpose.msra.mxu0 0.0
        %1648 = vmatprep.subr.mxu0 0.0
        %1649 = vmatpush2.xpose.msra.mxu0 0.0
        %1650 = vmatprep.subr.mxu0 0.0
        %1651 = vmatpush2.xpose.msra.mxu0 0.0
        %1652 = vmatprep.subr.mxu0 0.0
        %1653 = vmatpush2.xpose.msra.mxu0 0.0
        %1654 = vmatprep.subr.mxu0 0.0
        %1655 = vmatpush2.xpose.msra.mxu0 0.0
        %1656 = vmatprep.subr.mxu0 0.0
        %1657 = vmatpush2.xpose.msra.mxu0 0.0
        %1658 = vmatprep.subr.mxu0 0.0
        %1659 = vmatpush2.xpose.msra.mxu0 0.0
        %1660 = vmatprep.subr.mxu0 0.0
        %1661 = vmatpush2.xpose.msra.mxu0 0.0
        %1662 = vmatprep.subr.mxu0 0.0
        %1663 = vmatpush2.xpose.msra.mxu0 0.0
        %1664 = vmatprep.subr.mxu0 0.0
        %1665 = vmatpush2.xpose.msra.mxu0 0.0
        %1666 = vmatprep.subr.mxu0 0.0
        %1667 = vmatpush2.xpose.msra.mxu0 0.0
        %1668 = vmatprep.subr.mxu0 0.0
        %1669 = vmatpush2.xpose.msra.mxu0 0.0
        %1670 = vmatprep.mubr.f32.mxu0 0.0
        %1671 = vmatmul.mubr.f32.gmra.mxu0 %v1601
        %v1672 = vpop.f32.mrf.mxu0
        %v1673 = vadd.f32 0.0, %v1672
        %v1674 = vpop.f32.mrf.mxu0
        %1675 = vdwg.mxu0
        %v1677 = vsel %vm631, %v885, 0
        %v1680 = vsel %vm631, %v1026, 0
        %1682 = vmatprep.subr.mxu0 0.0
        %1683 = vmatpush1.xpose.msra.mxu0 0.0
        %1684 = vmatprep.subr.mxu0 0.0
        %1685 = vmatpush1.xpose.msra.mxu0 0.0
        %1686 = vmatprep.subr.mxu0 0.0
        %1687 = vmatpush1.xpose.msra.mxu0 0.0
        %1688 = vmatprep.subr.mxu0 0.0
        %1689 = vmatpush1.xpose.msra.mxu0 0.0
        %1690 = vmatprep.subr.mxu0 0.0
        %1691 = vmatpush1.xpose.msra.mxu0 0.0
        %1692 = vmatprep.subr.mxu0 0.0
        %1693 = vmatpush1.xpose.msra.mxu0 0.0
        %1694 = vmatprep.subr.mxu0 0.0
        %1695 = vmatpush1.xpose.msra.mxu0 0.0
        %1696 = vmatprep.subr.mxu0 0.0
        %1697 = vmatpush1.xpose.msra.mxu0 0.0
        %1698 = vmatprep.subr.mxu0 0.0
        %1699 = vmatpush1.xpose.msra.mxu0 0.0
        %1700 = vmatprep.subr.mxu0 0.0
        %1701 = vmatpush1.xpose.msra.mxu0 0.0
        %1702 = vmatprep.subr.mxu0 0.0
        %1703 = vmatpush1.xpose.msra.mxu0 0.0
        %1704 = vmatprep.subr.mxu0 0.0
        %1705 = vmatpush1.xpose.msra.mxu0 0.0
        %1706 = vmatprep.subr.mxu0 0.0
        %1707 = vmatpush1.xpose.msra.mxu0 0.0
        %1708 = vmatprep.subr.mxu0 0.0
        %1709 = vmatpush1.xpose.msra.mxu0 0.0
        %1710 = vmatprep.subr.mxu0 0.0
        %1711 = vmatpush1.xpose.msra.mxu0 0.0
        %1712 = vmatprep.subr.mxu0 0.0
        %1713 = vmatpush1.xpose.msra.mxu0 %v1680
        %1714 = vmatprep.subr.mxu0 0.0
        %1715 = vmatpush2.xpose.msra.mxu0 0.0
        %1716 = vmatprep.subr.mxu0 0.0
        %1717 = vmatpush2.xpose.msra.mxu0 0.0
        %1718 = vmatprep.subr.mxu0 0.0
        %1719 = vmatpush2.xpose.msra.mxu0 0.0
        %1720 = vmatprep.subr.mxu0 0.0
        %1721 = vmatpush2.xpose.msra.mxu0 0.0
        %1722 = vmatprep.subr.mxu0 0.0
        %1723 = vmatpush2.xpose.msra.mxu0 0.0
        %1724 = vmatprep.subr.mxu0 0.0
        %1725 = vmatpush2.xpose.msra.mxu0 0.0
        %1726 = vmatprep.subr.mxu0 0.0
        %1727 = vmatpush2.xpose.msra.mxu0 0.0
        %1728 = vmatprep.subr.mxu0 0.0
        %1729 = vmatpush2.xpose.msra.mxu0 0.0
        %1730 = vmatprep.subr.mxu0 0.0
        %1731 = vmatpush2.xpose.msra.mxu0 0.0
        %1732 = vmatprep.subr.mxu0 0.0
        %1733 = vmatpush2.xpose.msra.mxu0 0.0
        %1734 = vmatprep.subr.mxu0 0.0
        %1735 = vmatpush2.xpose.msra.mxu0 0.0
        %1736 = vmatprep.subr.mxu0 0.0
        %1737 = vmatpush2.xpose.msra.mxu0 0.0
        %1738 = vmatprep.subr.mxu0 0.0
        %1739 = vmatpush2.xpose.msra.mxu0 0.0
        %1740 = vmatprep.subr.mxu0 0.0
        %1741 = vmatpush2.xpose.msra.mxu0 0.0
        %1742 = vmatprep.subr.mxu0 0.0
        %1743 = vmatpush2.xpose.msra.mxu0 0.0
        %1744 = vmatprep.subr.mxu0 0.0
        %1745 = vmatpush2.xpose.msra.mxu0 0.0
        %1746 = vmatprep.mubr.f32.mxu0 0.0
        %1747 = vmatmul.mubr.f32.gmra.mxu0 %v1677
        %v1748 = vpop.f32.mrf.mxu0
        %v1749 = vadd.f32 0.0, %v1748
        %v1750 = vpop.f32.mrf.mxu0
        %1751 = vdwg.mxu0
        %v1752 = vmax.f32 %v1217, 0.0
        %v1753 = vmax.f32 %v1293, 0.0
        %v1754 = vmax.f32 %v1369, 0.0
        %v1755 = vmax.f32 %v1445, 0.0
        %v1756 = vmax.f32 %v1521, 0.0
        %v1757 = vmax.f32 %v1597, 0.0
        %v1758 = vmax.f32 %v1673, 0.0
        %v1759 = vmax.f32 %v1749, 0.0
        %1760 = vmatprep.subr.mxu0 0.0
        %1761 = vmatpush1.xpose.msra.mxu0 0.0
        %1762 = vmatprep.subr.mxu0 0.0
        %1763 = vmatpush1.xpose.msra.mxu0 0.0
        %1764 = vmatprep.subr.mxu0 0.0
        %1765 = vmatpush1.xpose.msra.mxu0 0.0
        %1766 = vmatprep.subr.mxu0 0.0
        %1767 = vmatpush1.xpose.msra.mxu0 0.0
        %1768 = vmatprep.subr.mxu0 0.0
        %1769 = vmatpush1.xpose.msra.mxu0 0.0
        %1770 = vmatprep.subr.mxu0 0.0
        %1771 = vmatpush1.xpose.msra.mxu0 0.0
        %1772 = vmatprep.subr.mxu0 0.0
        %1773 = vmatpush1.xpose.msra.mxu0 0.0
        %1774 = vmatprep.subr.mxu0 0.0
        %1775 = vmatpush1.xpose.msra.mxu0 0.0
        %1776 = vmatprep.subr.mxu0 0.0
        %1777 = vmatpush1.xpose.msra.mxu0 0.0
        %1778 = vmatprep.subr.mxu0 0.0
        %1779 = vmatpush1.xpose.msra.mxu0 0.0
        %1780 = vmatprep.subr.mxu0 0.0
        %1781 = vmatpush1.xpose.msra.mxu0 0.0
        %1782 = vmatprep.subr.mxu0 0.0
        %1783 = vmatpush1.xpose.msra.mxu0 0.0
        %1784 = vmatprep.subr.mxu0 0.0
        %1785 = vmatpush1.xpose.msra.mxu0 0.0
        %1786 = vmatprep.subr.mxu0 0.0
        %1787 = vmatpush1.xpose.msra.mxu0 0.0
        %1788 = vmatprep.subr.mxu0 0.0
        %1789 = vmatpush1.xpose.msra.mxu0 0.0
        %1790 = vmatprep.subr.mxu0 0.0
        %1791 = vmatpush1.xpose.msra.mxu0 %v1145
        %1792 = vmatprep.subr.mxu0 0.0
        %1793 = vmatpush2.xpose.msra.mxu0 0.0
        %1794 = vmatprep.subr.mxu0 0.0
        %1795 = vmatpush2.xpose.msra.mxu0 0.0
        %1796 = vmatprep.subr.mxu0 0.0
        %1797 = vmatpush2.xpose.msra.mxu0 0.0
        %1798 = vmatprep.subr.mxu0 0.0
        %1799 = vmatpush2.xpose.msra.mxu0 0.0
        %1800 = vmatprep.subr.mxu0 0.0
        %1801 = vmatpush2.xpose.msra.mxu0 0.0
        %1802 = vmatprep.subr.mxu0 0.0
        %1803 = vmatpush2.xpose.msra.mxu0 0.0
        %1804 = vmatprep.subr.mxu0 0.0
        %1805 = vmatpush2.xpose.msra.mxu0 0.0
        %1806 = vmatprep.subr.mxu0 0.0
        %1807 = vmatpush2.xpose.msra.mxu0 0.0
        %1808 = vmatprep.subr.mxu0 0.0
        %1809 = vmatpush2.xpose.msra.mxu0 0.0
        %1810 = vmatprep.subr.mxu0 0.0
        %1811 = vmatpush2.xpose.msra.mxu0 0.0
        %1812 = vmatprep.subr.mxu0 0.0
        %1813 = vmatpush2.xpose.msra.mxu0 0.0
        %1814 = vmatprep.subr.mxu0 0.0
        %1815 = vmatpush2.xpose.msra.mxu0 0.0
        %1816 = vmatprep.subr.mxu0 0.0
        %1817 = vmatpush2.xpose.msra.mxu0 0.0
        %1818 = vmatprep.subr.mxu0 0.0
        %1819 = vmatpush2.xpose.msra.mxu0 0.0
        %1820 = vmatprep.subr.mxu0 0.0
        %1821 = vmatpush2.xpose.msra.mxu0 0.0
        %1822 = vmatprep.subr.mxu0 0.0
        %1823 = vmatpush2.xpose.msra.mxu0 0.0
        %1824 = vmatprep.mubr.f32.mxu0 0.0
        %1825 = vmatmul.mubr.f32.gmra.mxu0 %v1148
        %v1826 = vpop.f32.mrf.mxu0
        %v1827 = vadd.f32 0.0, %v1826
        %v1828 = vpop.f32.mrf.mxu0
        %1829 = vdwg.mxu0
        %1830 = vmatprep.subr.mxu0 0.0
        %1831 = vmatpush1.xpose.msra.mxu0 0.0
        %1832 = vmatprep.subr.mxu0 0.0
        %1833 = vmatpush1.xpose.msra.mxu0 0.0
        %1834 = vmatprep.subr.mxu0 0.0
        %1835 = vmatpush1.xpose.msra.mxu0 0.0
        %1836 = vmatprep.subr.mxu0 0.0
        %1837 = vmatpush1.xpose.msra.mxu0 0.0
        %1838 = vmatprep.subr.mxu0 0.0
        %1839 = vmatpush1.xpose.msra.mxu0 0.0
        %1840 = vmatprep.subr.mxu0 0.0
        %1841 = vmatpush1.xpose.msra.mxu0 0.0
        %1842 = vmatprep.subr.mxu0 0.0
        %1843 = vmatpush1.xpose.msra.mxu0 0.0
        %1844 = vmatprep.subr.mxu0 0.0
        %1845 = vmatpush1.xpose.msra.mxu0 0.0
        %1846 = vmatprep.subr.mxu0 0.0
        %1847 = vmatpush1.xpose.msra.mxu0 0.0
        %1848 = vmatprep.subr.mxu0 0.0
        %1849 = vmatpush1.xpose.msra.mxu0 0.0
        %1850 = vmatprep.subr.mxu0 0.0
        %1851 = vmatpush1.xpose.msra.mxu0 0.0
        %1852 = vmatprep.subr.mxu0 0.0
        %1853 = vmatpush1.xpose.msra.mxu0 0.0
        %1854 = vmatprep.subr.mxu0 0.0
        %1855 = vmatpush1.xpose.msra.mxu0 0.0
        %1856 = vmatprep.subr.mxu0 0.0
        %1857 = vmatpush1.xpose.msra.mxu0 0.0
        %1858 = vmatprep.subr.mxu0 0.0
        %1859 = vmatpush1.xpose.msra.mxu0 0.0
        %1860 = vmatprep.subr.mxu0 0.0
        %1861 = vmatpush1.xpose.msra.mxu0 %v1221
        %1862 = vmatprep.subr.mxu0 0.0
        %1863 = vmatpush2.xpose.msra.mxu0 0.0
        %1864 = vmatprep.subr.mxu0 0.0
        %1865 = vmatpush2.xpose.msra.mxu0 0.0
        %1866 = vmatprep.subr.mxu0 0.0
        %1867 = vmatpush2.xpose.msra.mxu0 0.0
        %1868 = vmatprep.subr.mxu0 0.0
        %1869 = vmatpush2.xpose.msra.mxu0 0.0
        %1870 = vmatprep.subr.mxu0 0.0
        %1871 = vmatpush2.xpose.msra.mxu0 0.0
        %1872 = vmatprep.subr.mxu0 0.0
        %1873 = vmatpush2.xpose.msra.mxu0 0.0
        %1874 = vmatprep.subr.mxu0 0.0
        %1875 = vmatpush2.xpose.msra.mxu0 0.0
        %1876 = vmatprep.subr.mxu0 0.0
        %1877 = vmatpush2.xpose.msra.mxu0 0.0
        %1878 = vmatprep.subr.mxu0 0.0
        %1879 = vmatpush2.xpose.msra.mxu0 0.0
        %1880 = vmatprep.subr.mxu0 0.0
        %1881 = vmatpush2.xpose.msra.mxu0 0.0
        %1882 = vmatprep.subr.mxu0 0.0
        %1883 = vmatpush2.xpose.msra.mxu0 0.0
        %1884 = vmatprep.subr.mxu0 0.0
        %1885 = vmatpush2.xpose.msra.mxu0 0.0
        %1886 = vmatprep.subr.mxu0 0.0
        %1887 = vmatpush2.xpose.msra.mxu0 0.0
        %1888 = vmatprep.subr.mxu0 0.0
        %1889 = vmatpush2.xpose.msra.mxu0 0.0
        %1890 = vmatprep.subr.mxu0 0.0
        %1891 = vmatpush2.xpose.msra.mxu0 0.0
        %1892 = vmatprep.subr.mxu0 0.0
        %1893 = vmatpush2.xpose.msra.mxu0 0.0
        %1894 = vmatprep.mubr.f32.mxu0 0.0
        %1895 = vmatmul.mubr.f32.gmra.mxu0 %v1224
        %v1896 = vpop.f32.mrf.mxu0
        %v1897 = vadd.f32 0.0, %v1896
        %v1898 = vpop.f32.mrf.mxu0
        %1899 = vdwg.mxu0
        %1900 = vmatprep.subr.mxu0 0.0
        %1901 = vmatpush1.xpose.msra.mxu0 0.0
        %1902 = vmatprep.subr.mxu0 0.0
        %1903 = vmatpush1.xpose.msra.mxu0 0.0
        %1904 = vmatprep.subr.mxu0 0.0
        %1905 = vmatpush1.xpose.msra.mxu0 0.0
        %1906 = vmatprep.subr.mxu0 0.0
        %1907 = vmatpush1.xpose.msra.mxu0 0.0
        %1908 = vmatprep.subr.mxu0 0.0
        %1909 = vmatpush1.xpose.msra.mxu0 0.0
        %1910 = vmatprep.subr.mxu0 0.0
        %1911 = vmatpush1.xpose.msra.mxu0 0.0
        %1912 = vmatprep.subr.mxu0 0.0
        %1913 = vmatpush1.xpose.msra.mxu0 0.0
        %1914 = vmatprep.subr.mxu0 0.0
        %1915 = vmatpush1.xpose.msra.mxu0 0.0
        %1916 = vmatprep.subr.mxu0 0.0
        %1917 = vmatpush1.xpose.msra.mxu0 0.0
        %1918 = vmatprep.subr.mxu0 0.0
        %1919 = vmatpush1.xpose.msra.mxu0 0.0
        %1920 = vmatprep.subr.mxu0 0.0
        %1921 = vmatpush1.xpose.msra.mxu0 0.0
        %1922 = vmatprep.subr.mxu0 0.0
        %1923 = vmatpush1.xpose.msra.mxu0 0.0
        %1924 = vmatprep.subr.mxu0 0.0
        %1925 = vmatpush1.xpose.msra.mxu0 0.0
        %1926 = vmatprep.subr.mxu0 0.0
        %1927 = vmatpush1.xpose.msra.mxu0 0.0
        %1928 = vmatprep.subr.mxu0 0.0
        %1929 = vmatpush1.xpose.msra.mxu0 0.0
        %1930 = vmatprep.subr.mxu0 0.0
        %1931 = vmatpush1.xpose.msra.mxu0 %v1297
        %1932 = vmatprep.subr.mxu0 0.0
        %1933 = vmatpush2.xpose.msra.mxu0 0.0
        %1934 = vmatprep.subr.mxu0 0.0
        %1935 = vmatpush2.xpose.msra.mxu0 0.0
        %1936 = vmatprep.subr.mxu0 0.0
        %1937 = vmatpush2.xpose.msra.mxu0 0.0
        %1938 = vmatprep.subr.mxu0 0.0
        %1939 = vmatpush2.xpose.msra.mxu0 0.0
        %1940 = vmatprep.subr.mxu0 0.0
        %1941 = vmatpush2.xpose.msra.mxu0 0.0
        %1942 = vmatprep.subr.mxu0 0.0
        %1943 = vmatpush2.xpose.msra.mxu0 0.0
        %1944 = vmatprep.subr.mxu0 0.0
        %1945 = vmatpush2.xpose.msra.mxu0 0.0
        %1946 = vmatprep.subr.mxu0 0.0
        %1947 = vmatpush2.xpose.msra.mxu0 0.0
        %1948 = vmatprep.subr.mxu0 0.0
        %1949 = vmatpush2.xpose.msra.mxu0 0.0
        %1950 = vmatprep.subr.mxu0 0.0
        %1951 = vmatpush2.xpose.msra.mxu0 0.0
        %1952 = vmatprep.subr.mxu0 0.0
        %1953 = vmatpush2.xpose.msra.mxu0 0.0
        %1954 = vmatprep.subr.mxu0 0.0
        %1955 = vmatpush2.xpose.msra.mxu0 0.0
        %1956 = vmatprep.subr.mxu0 0.0
        %1957 = vmatpush2.xpose.msra.mxu0 0.0
        %1958 = vmatprep.subr.mxu0 0.0
        %1959 = vmatpush2.xpose.msra.mxu0 0.0
        %1960 = vmatprep.subr.mxu0 0.0
        %1961 = vmatpush2.xpose.msra.mxu0 0.0
        %1962 = vmatprep.subr.mxu0 0.0
        %1963 = vmatpush2.xpose.msra.mxu0 0.0
        %1964 = vmatprep.mubr.f32.mxu0 0.0
        %1965 = vmatmul.mubr.f32.gmra.mxu0 %v1300
        %v1966 = vpop.f32.mrf.mxu0
        %v1967 = vadd.f32 0.0, %v1966
        %v1968 = vpop.f32.mrf.mxu0
        %1969 = vdwg.mxu0
        %1970 = vmatprep.subr.mxu0 0.0
        %1971 = vmatpush1.xpose.msra.mxu0 0.0
        %1972 = vmatprep.subr.mxu0 0.0
        %1973 = vmatpush1.xpose.msra.mxu0 0.0
        %1974 = vmatprep.subr.mxu0 0.0
        %1975 = vmatpush1.xpose.msra.mxu0 0.0
        %1976 = vmatprep.subr.mxu0 0.0
        %1977 = vmatpush1.xpose.msra.mxu0 0.0
        %1978 = vmatprep.subr.mxu0 0.0
        %1979 = vmatpush1.xpose.msra.mxu0 0.0
        %1980 = vmatprep.subr.mxu0 0.0
        %1981 = vmatpush1.xpose.msra.mxu0 0.0
        %1982 = vmatprep.subr.mxu0 0.0
        %1983 = vmatpush1.xpose.msra.mxu0 0.0
        %1984 = vmatprep.subr.mxu0 0.0
        %1985 = vmatpush1.xpose.msra.mxu0 0.0
        %1986 = vmatprep.subr.mxu0 0.0
        %1987 = vmatpush1.xpose.msra.mxu0 0.0
        %1988 = vmatprep.subr.mxu0 0.0
        %1989 = vmatpush1.xpose.msra.mxu0 0.0
        %1990 = vmatprep.subr.mxu0 0.0
        %1991 = vmatpush1.xpose.msra.mxu0 0.0
        %1992 = vmatprep.subr.mxu0 0.0
        %1993 = vmatpush1.xpose.msra.mxu0 0.0
        %1994 = vmatprep.subr.mxu0 0.0
        %1995 = vmatpush1.xpose.msra.mxu0 0.0
        %1996 = vmatprep.subr.mxu0 0.0
        %1997 = vmatpush1.xpose.msra.mxu0 0.0
        %1998 = vmatprep.subr.mxu0 0.0
        %1999 = vmatpush1.xpose.msra.mxu0 0.0
        %2000 = vmatprep.subr.mxu0 0.0
        %2001 = vmatpush1.xpose.msra.mxu0 %v1373
        %2002 = vmatprep.subr.mxu0 0.0
        %2003 = vmatpush2.xpose.msra.mxu0 0.0
        %2004 = vmatprep.subr.mxu0 0.0
        %2005 = vmatpush2.xpose.msra.mxu0 0.0
        %2006 = vmatprep.subr.mxu0 0.0
        %2007 = vmatpush2.xpose.msra.mxu0 0.0
        %2008 = vmatprep.subr.mxu0 0.0
        %2009 = vmatpush2.xpose.msra.mxu0 0.0
        %2010 = vmatprep.subr.mxu0 0.0
        %2011 = vmatpush2.xpose.msra.mxu0 0.0
        %2012 = vmatprep.subr.mxu0 0.0
        %2013 = vmatpush2.xpose.msra.mxu0 0.0
        %2014 = vmatprep.subr.mxu0 0.0
        %2015 = vmatpush2.xpose.msra.mxu0 0.0
        %2016 = vmatprep.subr.mxu0 0.0
        %2017 = vmatpush2.xpose.msra.mxu0 0.0
        %2018 = vmatprep.subr.mxu0 0.0
        %2019 = vmatpush2.xpose.msra.mxu0 0.0
        %2020 = vmatprep.subr.mxu0 0.0
        %2021 = vmatpush2.xpose.msra.mxu0 0.0
        %2022 = vmatprep.subr.mxu0 0.0
        %2023 = vmatpush2.xpose.msra.mxu0 0.0
        %2024 = vmatprep.subr.mxu0 0.0
        %2025 = vmatpush2.xpose.msra.mxu0 0.0
        %2026 = vmatprep.subr.mxu0 0.0
        %2027 = vmatpush2.xpose.msra.mxu0 0.0
        %2028 = vmatprep.subr.mxu0 0.0
        %2029 = vmatpush2.xpose.msra.mxu0 0.0
        %2030 = vmatprep.subr.mxu0 0.0
        %2031 = vmatpush2.xpose.msra.mxu0 0.0
        %2032 = vmatprep.subr.mxu0 0.0
        %2033 = vmatpush2.xpose.msra.mxu0 0.0
        %2034 = vmatprep.mubr.f32.mxu0 0.0
        %2035 = vmatmul.mubr.f32.gmra.mxu0 %v1376
        %v2036 = vpop.f32.mrf.mxu0
        %v2037 = vadd.f32 0.0, %v2036
        %v2038 = vpop.f32.mrf.mxu0
        %2039 = vdwg.mxu0
        %2040 = vmatprep.subr.mxu0 0.0
        %2041 = vmatpush1.xpose.msra.mxu0 0.0
        %2042 = vmatprep.subr.mxu0 0.0
        %2043 = vmatpush1.xpose.msra.mxu0 0.0
        %2044 = vmatprep.subr.mxu0 0.0
        %2045 = vmatpush1.xpose.msra.mxu0 0.0
        %2046 = vmatprep.subr.mxu0 0.0
        %2047 = vmatpush1.xpose.msra.mxu0 0.0
        %2048 = vmatprep.subr.mxu0 0.0
        %2049 = vmatpush1.xpose.msra.mxu0 0.0
        %2050 = vmatprep.subr.mxu0 0.0
        %2051 = vmatpush1.xpose.msra.mxu0 0.0
        %2052 = vmatprep.subr.mxu0 0.0
        %2053 = vmatpush1.xpose.msra.mxu0 0.0
        %2054 = vmatprep.subr.mxu0 0.0
        %2055 = vmatpush1.xpose.msra.mxu0 0.0
        %2056 = vmatprep.subr.mxu0 0.0
        %2057 = vmatpush1.xpose.msra.mxu0 0.0
        %2058 = vmatprep.subr.mxu0 0.0
        %2059 = vmatpush1.xpose.msra.mxu0 0.0
        %2060 = vmatprep.subr.mxu0 0.0
        %2061 = vmatpush1.xpose.msra.mxu0 0.0
        %2062 = vmatprep.subr.mxu0 0.0
        %2063 = vmatpush1.xpose.msra.mxu0 0.0
        %2064 = vmatprep.subr.mxu0 0.0
        %2065 = vmatpush1.xpose.msra.mxu0 0.0
        %2066 = vmatprep.subr.mxu0 0.0
        %2067 = vmatpush1.xpose.msra.mxu0 0.0
        %2068 = vmatprep.subr.mxu0 0.0
        %2069 = vmatpush1.xpose.msra.mxu0 0.0
        %2070 = vmatprep.subr.mxu0 0.0
        %2071 = vmatpush1.xpose.msra.mxu0 %v1449
        %2072 = vmatprep.subr.mxu0 0.0
        %2073 = vmatpush2.xpose.msra.mxu0 0.0
        %2074 = vmatprep.subr.mxu0 0.0
        %2075 = vmatpush2.xpose.msra.mxu0 0.0
        %2076 = vmatprep.subr.mxu0 0.0
        %2077 = vmatpush2.xpose.msra.mxu0 0.0
        %2078 = vmatprep.subr.mxu0 0.0
        %2079 = vmatpush2.xpose.msra.mxu0 0.0
        %2080 = vmatprep.subr.mxu0 0.0
        %2081 = vmatpush2.xpose.msra.mxu0 0.0
        %2082 = vmatprep.subr.mxu0 0.0
        %2083 = vmatpush2.xpose.msra.mxu0 0.0
        %2084 = vmatprep.subr.mxu0 0.0
        %2085 = vmatpush2.xpose.msra.mxu0 0.0
        %2086 = vmatprep.subr.mxu0 0.0
        %2087 = vmatpush2.xpose.msra.mxu0 0.0
        %2088 = vmatprep.subr.mxu0 0.0
        %2089 = vmatpush2.xpose.msra.mxu0 0.0
        %2090 = vmatprep.subr.mxu0 0.0
        %2091 = vmatpush2.xpose.msra.mxu0 0.0
        %2092 = vmatprep.subr.mxu0 0.0
        %2093 = vmatpush2.xpose.msra.mxu0 0.0
        %2094 = vmatprep.subr.mxu0 0.0
        %2095 = vmatpush2.xpose.msra.mxu0 0.0
        %2096 = vmatprep.subr.mxu0 0.0
        %2097 = vmatpush2.xpose.msra.mxu0 0.0
        %2098 = vmatprep.subr.mxu0 0.0
        %2099 = vmatpush2.xpose.msra.mxu0 0.0
        %2100 = vmatprep.subr.mxu0 0.0
        %2101 = vmatpush2.xpose.msra.mxu0 0.0
        %2102 = vmatprep.subr.mxu0 0.0
        %2103 = vmatpush2.xpose.msra.mxu0 0.0
        %2104 = vmatprep.mubr.f32.mxu0 0.0
        %2105 = vmatmul.mubr.f32.gmra.mxu0 %v1452
        %v2106 = vpop.f32.mrf.mxu0
        %v2107 = vadd.f32 0.0, %v2106
        %v2108 = vpop.f32.mrf.mxu0
        %2109 = vdwg.mxu0
        %2110 = vmatprep.subr.mxu0 0.0
        %2111 = vmatpush1.xpose.msra.mxu0 0.0
        %2112 = vmatprep.subr.mxu0 0.0
        %2113 = vmatpush1.xpose.msra.mxu0 0.0
        %2114 = vmatprep.subr.mxu0 0.0
        %2115 = vmatpush1.xpose.msra.mxu0 0.0
        %2116 = vmatprep.subr.mxu0 0.0
        %2117 = vmatpush1.xpose.msra.mxu0 0.0
        %2118 = vmatprep.subr.mxu0 0.0
        %2119 = vmatpush1.xpose.msra.mxu0 0.0
        %2120 = vmatprep.subr.mxu0 0.0
        %2121 = vmatpush1.xpose.msra.mxu0 0.0
        %2122 = vmatprep.subr.mxu0 0.0
        %2123 = vmatpush1.xpose.msra.mxu0 0.0
        %2124 = vmatprep.subr.mxu0 0.0
        %2125 = vmatpush1.xpose.msra.mxu0 0.0
        %2126 = vmatprep.subr.mxu0 0.0
        %2127 = vmatpush1.xpose.msra.mxu0 0.0
        %2128 = vmatprep.subr.mxu0 0.0
        %2129 = vmatpush1.xpose.msra.mxu0 0.0
        %2130 = vmatprep.subr.mxu0 0.0
        %2131 = vmatpush1.xpose.msra.mxu0 0.0
        %2132 = vmatprep.subr.mxu0 0.0
        %2133 = vmatpush1.xpose.msra.mxu0 0.0
        %2134 = vmatprep.subr.mxu0 0.0
        %2135 = vmatpush1.xpose.msra.mxu0 0.0
        %2136 = vmatprep.subr.mxu0 0.0
        %2137 = vmatpush1.xpose.msra.mxu0 0.0
        %2138 = vmatprep.subr.mxu0 0.0
        %2139 = vmatpush1.xpose.msra.mxu0 0.0
        %2140 = vmatprep.subr.mxu0 0.0
        %2141 = vmatpush1.xpose.msra.mxu0 %v1525
        %2142 = vmatprep.subr.mxu0 0.0
        %2143 = vmatpush2.xpose.msra.mxu0 0.0
        %2144 = vmatprep.subr.mxu0 0.0
        %2145 = vmatpush2.xpose.msra.mxu0 0.0
        %2146 = vmatprep.subr.mxu0 0.0
        %2147 = vmatpush2.xpose.msra.mxu0 0.0
        %2148 = vmatprep.subr.mxu0 0.0
        %2149 = vmatpush2.xpose.msra.mxu0 0.0
        %2150 = vmatprep.subr.mxu0 0.0
        %2151 = vmatpush2.xpose.msra.mxu0 0.0
        %2152 = vmatprep.subr.mxu0 0.0
        %2153 = vmatpush2.xpose.msra.mxu0 0.0
        %2154 = vmatprep.subr.mxu0 0.0
        %2155 = vmatpush2.xpose.msra.mxu0 0.0
        %2156 = vmatprep.subr.mxu0 0.0
        %2157 = vmatpush2.xpose.msra.mxu0 0.0
        %2158 = vmatprep.subr.mxu0 0.0
        %2159 = vmatpush2.xpose.msra.mxu0 0.0
        %2160 = vmatprep.subr.mxu0 0.0
        %2161 = vmatpush2.xpose.msra.mxu0 0.0
        %2162 = vmatprep.subr.mxu0 0.0
        %2163 = vmatpush2.xpose.msra.mxu0 0.0
        %2164 = vmatprep.subr.mxu0 0.0
        %2165 = vmatpush2.xpose.msra.mxu0 0.0
        %2166 = vmatprep.subr.mxu0 0.0
        %2167 = vmatpush2.xpose.msra.mxu0 0.0
        %2168 = vmatprep.subr.mxu0 0.0
        %2169 = vmatpush2.xpose.msra.mxu0 0.0
        %2170 = vmatprep.subr.mxu0 0.0
        %2171 = vmatpush2.xpose.msra.mxu0 0.0
        %2172 = vmatprep.subr.mxu0 0.0
        %2173 = vmatpush2.xpose.msra.mxu0 0.0
        %2174 = vmatprep.mubr.f32.mxu0 0.0
        %2175 = vmatmul.mubr.f32.gmra.mxu0 %v1528
        %v2176 = vpop.f32.mrf.mxu0
        %v2177 = vadd.f32 0.0, %v2176
        %v2178 = vpop.f32.mrf.mxu0
        %2179 = vdwg.mxu0
        %2180 = vmatprep.subr.mxu0 0.0
        %2181 = vmatpush1.xpose.msra.mxu0 0.0
        %2182 = vmatprep.subr.mxu0 0.0
        %2183 = vmatpush1.xpose.msra.mxu0 0.0
        %2184 = vmatprep.subr.mxu0 0.0
        %2185 = vmatpush1.xpose.msra.mxu0 0.0
        %2186 = vmatprep.subr.mxu0 0.0
        %2187 = vmatpush1.xpose.msra.mxu0 0.0
        %2188 = vmatprep.subr.mxu0 0.0
        %2189 = vmatpush1.xpose.msra.mxu0 0.0
        %2190 = vmatprep.subr.mxu0 0.0
        %2191 = vmatpush1.xpose.msra.mxu0 0.0
        %2192 = vmatprep.subr.mxu0 0.0
        %2193 = vmatpush1.xpose.msra.mxu0 0.0
        %2194 = vmatprep.subr.mxu0 0.0
        %2195 = vmatpush1.xpose.msra.mxu0 0.0
        %2196 = vmatprep.subr.mxu0 0.0
        %2197 = vmatpush1.xpose.msra.mxu0 0.0
        %2198 = vmatprep.subr.mxu0 0.0
        %2199 = vmatpush1.xpose.msra.mxu0 0.0
        %2200 = vmatprep.subr.mxu0 0.0
        %2201 = vmatpush1.xpose.msra.mxu0 0.0
        %2202 = vmatprep.subr.mxu0 0.0
        %2203 = vmatpush1.xpose.msra.mxu0 0.0
        %2204 = vmatprep.subr.mxu0 0.0
        %2205 = vmatpush1.xpose.msra.mxu0 0.0
        %2206 = vmatprep.subr.mxu0 0.0
        %2207 = vmatpush1.xpose.msra.mxu0 0.0
        %2208 = vmatprep.subr.mxu0 0.0
        %2209 = vmatpush1.xpose.msra.mxu0 0.0
        %2210 = vmatprep.subr.mxu0 0.0
        %2211 = vmatpush1.xpose.msra.mxu0 %v1601
        %2212 = vmatprep.subr.mxu0 0.0
        %2213 = vmatpush2.xpose.msra.mxu0 0.0
        %2214 = vmatprep.subr.mxu0 0.0
        %2215 = vmatpush2.xpose.msra.mxu0 0.0
        %2216 = vmatprep.subr.mxu0 0.0
        %2217 = vmatpush2.xpose.msra.mxu0 0.0
        %2218 = vmatprep.subr.mxu0 0.0
        %2219 = vmatpush2.xpose.msra.mxu0 0.0
        %2220 = vmatprep.subr.mxu0 0.0
        %2221 = vmatpush2.xpose.msra.mxu0 0.0
        %2222 = vmatprep.subr.mxu0 0.0
        %2223 = vmatpush2.xpose.msra.mxu0 0.0
        %2224 = vmatprep.subr.mxu0 0.0
        %2225 = vmatpush2.xpose.msra.mxu0 0.0
        %2226 = vmatprep.subr.mxu0 0.0
        %2227 = vmatpush2.xpose.msra.mxu0 0.0
        %2228 = vmatprep.subr.mxu0 0.0
        %2229 = vmatpush2.xpose.msra.mxu0 0.0
        %2230 = vmatprep.subr.mxu0 0.0
        %2231 = vmatpush2.xpose.msra.mxu0 0.0
        %2232 = vmatprep.subr.mxu0 0.0
        %2233 = vmatpush2.xpose.msra.mxu0 0.0
        %2234 = vmatprep.subr.mxu0 0.0
        %2235 = vmatpush2.xpose.msra.mxu0 0.0
        %2236 = vmatprep.subr.mxu0 0.0
        %2237 = vmatpush2.xpose.msra.mxu0 0.0
        %2238 = vmatprep.subr.mxu0 0.0
        %2239 = vmatpush2.xpose.msra.mxu0 0.0
        %2240 = vmatprep.subr.mxu0 0.0
        %2241 = vmatpush2.xpose.msra.mxu0 0.0
        %2242 = vmatprep.subr.mxu0 0.0
        %2243 = vmatpush2.xpose.msra.mxu0 0.0
        %2244 = vmatprep.mubr.f32.mxu0 0.0
        %2245 = vmatmul.mubr.f32.gmra.mxu0 %v1604
        %v2246 = vpop.f32.mrf.mxu0
        %v2247 = vadd.f32 0.0, %v2246
        %v2248 = vpop.f32.mrf.mxu0
        %2249 = vdwg.mxu0
        %2250 = vmatprep.subr.mxu0 0.0
        %2251 = vmatpush1.xpose.msra.mxu0 0.0
        %2252 = vmatprep.subr.mxu0 0.0
        %2253 = vmatpush1.xpose.msra.mxu0 0.0
        %2254 = vmatprep.subr.mxu0 0.0
        %2255 = vmatpush1.xpose.msra.mxu0 0.0
        %2256 = vmatprep.subr.mxu0 0.0
        %2257 = vmatpush1.xpose.msra.mxu0 0.0
        %2258 = vmatprep.subr.mxu0 0.0
        %2259 = vmatpush1.xpose.msra.mxu0 0.0
        %2260 = vmatprep.subr.mxu0 0.0
        %2261 = vmatpush1.xpose.msra.mxu0 0.0
        %2262 = vmatprep.subr.mxu0 0.0
        %2263 = vmatpush1.xpose.msra.mxu0 0.0
        %2264 = vmatprep.subr.mxu0 0.0
        %2265 = vmatpush1.xpose.msra.mxu0 0.0
        %2266 = vmatprep.subr.mxu0 0.0
        %2267 = vmatpush1.xpose.msra.mxu0 0.0
        %2268 = vmatprep.subr.mxu0 0.0
        %2269 = vmatpush1.xpose.msra.mxu0 0.0
        %2270 = vmatprep.subr.mxu0 0.0
        %2271 = vmatpush1.xpose.msra.mxu0 0.0
        %2272 = vmatprep.subr.mxu0 0.0
        %2273 = vmatpush1.xpose.msra.mxu0 0.0
        %2274 = vmatprep.subr.mxu0 0.0
        %2275 = vmatpush1.xpose.msra.mxu0 0.0
        %2276 = vmatprep.subr.mxu0 0.0
        %2277 = vmatpush1.xpose.msra.mxu0 0.0
        %2278 = vmatprep.subr.mxu0 0.0
        %2279 = vmatpush1.xpose.msra.mxu0 0.0
        %2280 = vmatprep.subr.mxu0 0.0
        %2281 = vmatpush1.xpose.msra.mxu0 %v1677
        %2282 = vmatprep.subr.mxu0 0.0
        %2283 = vmatpush2.xpose.msra.mxu0 0.0
        %2284 = vmatprep.subr.mxu0 0.0
        %2285 = vmatpush2.xpose.msra.mxu0 0.0
        %2286 = vmatprep.subr.mxu0 0.0
        %2287 = vmatpush2.xpose.msra.mxu0 0.0
        %2288 = vmatprep.subr.mxu0 0.0
        %2289 = vmatpush2.xpose.msra.mxu0 0.0
        %2290 = vmatprep.subr.mxu0 0.0
        %2291 = vmatpush2.xpose.msra.mxu0 0.0
        %2292 = vmatprep.subr.mxu0 0.0
        %2293 = vmatpush2.xpose.msra.mxu0 0.0
        %2294 = vmatprep.subr.mxu0 0.0
        %2295 = vmatpush2.xpose.msra.mxu0 0.0
        %2296 = vmatprep.subr.mxu0 0.0
        %2297 = vmatpush2.xpose.msra.mxu0 0.0
        %2298 = vmatprep.subr.mxu0 0.0
        %2299 = vmatpush2.xpose.msra.mxu0 0.0
        %2300 = vmatprep.subr.mxu0 0.0
        %2301 = vmatpush2.xpose.msra.mxu0 0.0
        %2302 = vmatprep.subr.mxu0 0.0
        %2303 = vmatpush2.xpose.msra.mxu0 0.0
        %2304 = vmatprep.subr.mxu0 0.0
        %2305 = vmatpush2.xpose.msra.mxu0 0.0
        %2306 = vmatprep.subr.mxu0 0.0
        %2307 = vmatpush2.xpose.msra.mxu0 0.0
        %2308 = vmatprep.subr.mxu0 0.0
        %2309 = vmatpush2.xpose.msra.mxu0 0.0
        %2310 = vmatprep.subr.mxu0 0.0
        %2311 = vmatpush2.xpose.msra.mxu0 0.0
        %2312 = vmatprep.subr.mxu0 0.0
        %2313 = vmatpush2.xpose.msra.mxu0 0.0
        %2314 = vmatprep.mubr.f32.mxu0 0.0
        %2315 = vmatmul.mubr.f32.gmra.mxu0 %v1680
        %v2316 = vpop.f32.mrf.mxu0
        %v2317 = vadd.f32 0.0, %v2316
        %v2318 = vpop.f32.mrf.mxu0
        %2319 = vdwg.mxu0
        %v2320 = vmax.f32 %v1827, 0.0
        %v2321 = vmax.f32 %v1897, 0.0
        %v2322 = vmax.f32 %v1967, 0.0
        %v2323 = vmax.f32 %v2037, 0.0
        %v2324 = vmax.f32 %v2107, 0.0
        %v2325 = vmax.f32 %v2177, 0.0
        %v2326 = vmax.f32 %v2247, 0.0
        %v2327 = vmax.f32 %v2317, 0.0
        %vm2328 = vcmask 64512
        %v2329 = vsel %vm2328, %v1752, 0.0
        %2330 = vadd.xlane.f32.xlu0 %v2329
        %v2331 = vpop.xlane.xlu0 %2330
        %v2332 = vsel %vm2328, %v1753, 0.0
        %2333 = vadd.xlane.f32.xlu0 %v2332
        %v2334 = vpop.xlane.xlu0 %2333
        %v2335 = vsel %vm2328, %v1754, 0.0
        %2336 = vadd.xlane.f32.xlu0 %v2335
        %v2337 = vpop.xlane.xlu0 %2336
        %v2338 = vsel %vm2328, %v1755, 0.0
        %2339 = vadd.xlane.f32.xlu0 %v2338
        %v2340 = vpop.xlane.xlu0 %2339
        %v2341 = vsel %vm2328, %v1756, 0.0
        %2342 = vadd.xlane.f32.xlu0 %v2341
        %v2343 = vpop.xlane.xlu0 %2342
        %v2344 = vsel %vm2328, %v1757, 0.0
        %2345 = vadd.xlane.f32.xlu0 %v2344
        %v2346 = vpop.xlane.xlu0 %2345
        %v2347 = vsel %vm2328, %v1758, 0.0
        %2348 = vadd.xlane.f32.xlu0 %v2347
        %v2349 = vpop.xlane.xlu0 %2348
        %v2350 = vsel %vm2328, %v1759, 0.0
        %2351 = vadd.xlane.f32.xlu0 %v2350
        %v2352 = vpop.xlane.xlu0 %2351
        %v2353 = vadd.f32 %v2331, 1e-08
        %v2354 = vadd.f32 %v2334, 1e-08
        %v2355 = vadd.f32 %v2337, 1e-08
        %v2356 = vadd.f32 %v2340, 1e-08
        %v2357 = vadd.f32 %v2343, 1e-08
        %v2358 = vadd.f32 %v2346, 1e-08
        %v2359 = vadd.f32 %v2349, 1e-08
        %v2360 = vadd.f32 %v2352, 1e-08
        %v2361 = vrcp.pop %v2353
        %v2362 = vmul.f32 %v1752, %v2361
        %v2363 = vrcp.pop %v2354
        %v2364 = vmul.f32 %v1753, %v2363
        %v2365 = vrcp.pop %v2355
        %v2366 = vmul.f32 %v1754, %v2365
        %v2367 = vrcp.pop %v2356
        %v2368 = vmul.f32 %v1755, %v2367
        %v2369 = vrcp.pop %v2357
        %v2370 = vmul.f32 %v1756, %v2369
        %v2371 = vrcp.pop %v2358
        %v2372 = vmul.f32 %v1757, %v2371
        %v2373 = vrcp.pop %v2359
        %v2374 = vmul.f32 %v1758, %v2373
        %v2375 = vrcp.pop %v2360
        %v2376 = vmul.f32 %v1759, %v2375
        %v2377 = vstv %s610
        %vm2378 = vcmp.gt.f32.partialorder %v2362, %v2377
        %vm2379 = vcmp.gt.f32.partialorder %v2364, %v2377
        %vm2380 = vcmp.gt.f32.partialorder %v2366, %v2377
        %vm2381 = vcmp.gt.f32.partialorder %v2368, %v2377
        %vm2382 = vcmp.gt.f32.partialorder %v2370, %v2377
        %vm2383 = vcmp.gt.f32.partialorder %v2372, %v2377
        %vm2384 = vcmp.gt.f32.partialorder %v2374, %v2377
        %vm2385 = vcmp.gt.f32.partialorder %v2376, %v2377
        %v2386 = vsel %vm2378, %v2362, 0.0
        %v2387 = vsel %vm2379, %v2364, 0.0
        %v2388 = vsel %vm2380, %v2366, 0.0
        %v2389 = vsel %vm2381, %v2368, 0.0
        %v2390 = vsel %vm2382, %v2370, 0.0
        %v2391 = vsel %vm2383, %v2372, 0.0
        %v2392 = vsel %vm2384, %v2374, 0.0
        %v2393 = vsel %vm2385, %v2376, 0.0
        %v2394 = vsel %vm2328, %v2386, 0.0
        %2395 = vadd.xlane.f32.xlu0 %v2394
        %v2396 = vpop.xlane.xlu0 %2395
        %v2397 = vsel %vm2328, %v2387, 0.0
        %2398 = vadd.xlane.f32.xlu0 %v2397
        %v2399 = vpop.xlane.xlu0 %2398
        %v2400 = vsel %vm2328, %v2388, 0.0
        %2401 = vadd.xlane.f32.xlu0 %v2400
        %v2402 = vpop.xlane.xlu0 %2401
        %v2403 = vsel %vm2328, %v2389, 0.0
        %2404 = vadd.xlane.f32.xlu0 %v2403
        %v2405 = vpop.xlane.xlu0 %2404
        %v2406 = vsel %vm2328, %v2390, 0.0
        %2407 = vadd.xlane.f32.xlu0 %v2406
        %v2408 = vpop.xlane.xlu0 %2407
        %v2409 = vsel %vm2328, %v2391, 0.0
        %2410 = vadd.xlane.f32.xlu0 %v2409
        %v2411 = vpop.xlane.xlu0 %2410
        %v2412 = vsel %vm2328, %v2392, 0.0
        %2413 = vadd.xlane.f32.xlu0 %v2412
        %v2414 = vpop.xlane.xlu0 %2413
        %v2415 = vsel %vm2328, %v2393, 0.0
        %2416 = vadd.xlane.f32.xlu0 %v2415
        %v2417 = vpop.xlane.xlu0 %2416
        %v2418 = vadd.f32 %v2396, 1e-08
        %v2419 = vadd.f32 %v2399, 1e-08
        %v2420 = vadd.f32 %v2402, 1e-08
        %v2421 = vadd.f32 %v2405, 1e-08
        %v2422 = vadd.f32 %v2408, 1e-08
        %v2423 = vadd.f32 %v2411, 1e-08
        %v2424 = vadd.f32 %v2414, 1e-08
        %v2425 = vadd.f32 %v2417, 1e-08
        %v2426 = vrcp.pop %v2418
        %v2427 = vmul.f32 %v2386, %v2426
        %v2428 = vrcp.pop %v2419
        %v2429 = vmul.f32 %v2387, %v2428
        %v2430 = vrcp.pop %v2420
        %v2431 = vmul.f32 %v2388, %v2430
        %v2432 = vrcp.pop %v2421
        %v2433 = vmul.f32 %v2389, %v2432
        %v2434 = vrcp.pop %v2422
        %v2435 = vmul.f32 %v2390, %v2434
        %v2436 = vrcp.pop %v2423
        %v2437 = vmul.f32 %v2391, %v2436
        %v2438 = vrcp.pop %v2424
        %v2439 = vmul.f32 %v2392, %v2438
        %v2440 = vrcp.pop %v2425
        %v2441 = vmul.f32 %v2393, %v2440
        %v2442 = vsel %vm2328, %v2320, 0.0
        %2443 = vadd.xlane.f32.xlu0 %v2442
        %v2444 = vpop.xlane.xlu0 %2443
        %v2445 = vsel %vm2328, %v2321, 0.0
        %2446 = vadd.xlane.f32.xlu0 %v2445
        %v2447 = vpop.xlane.xlu0 %2446
        %v2448 = vsel %vm2328, %v2322, 0.0
        %2449 = vadd.xlane.f32.xlu0 %v2448
        %v2450 = vpop.xlane.xlu0 %2449
        %v2451 = vsel %vm2328, %v2323, 0.0
        %2452 = vadd.xlane.f32.xlu0 %v2451
        %v2453 = vpop.xlane.xlu0 %2452
        %v2454 = vsel %vm2328, %v2324, 0.0
        %2455 = vadd.xlane.f32.xlu0 %v2454
        %v2456 = vpop.xlane.xlu0 %2455
        %v2457 = vsel %vm2328, %v2325, 0.0
        %2458 = vadd.xlane.f32.xlu0 %v2457
        %v2459 = vpop.xlane.xlu0 %2458
        %v2460 = vsel %vm2328, %v2326, 0.0
        %2461 = vadd.xlane.f32.xlu0 %v2460
        %v2462 = vpop.xlane.xlu0 %2461
        %v2463 = vsel %vm2328, %v2327, 0.0
        %2464 = vadd.xlane.f32.xlu0 %v2463
        %v2465 = vpop.xlane.xlu0 %2464
        %v2466 = vadd.f32 %v2444, 1e-08
        %v2467 = vadd.f32 %v2447, 1e-08
        %v2468 = vadd.f32 %v2450, 1e-08
        %v2469 = vadd.f32 %v2453, 1e-08
        %v2470 = vadd.f32 %v2456, 1e-08
        %v2471 = vadd.f32 %v2459, 1e-08
        %v2472 = vadd.f32 %v2462, 1e-08
        %v2473 = vadd.f32 %v2465, 1e-08
        %v2474 = vrcp.pop %v2466
        %v2475 = vmul.f32 %v2320, %v2474
        %v2476 = vrcp.pop %v2467
        %v2477 = vmul.f32 %v2321, %v2476
        %v2478 = vrcp.pop %v2468
        %v2479 = vmul.f32 %v2322, %v2478
        %v2480 = vrcp.pop %v2469
        %v2481 = vmul.f32 %v2323, %v2480
        %v2482 = vrcp.pop %v2470
        %v2483 = vmul.f32 %v2324, %v2482
        %v2484 = vrcp.pop %v2471
        %v2485 = vmul.f32 %v2325, %v2484
        %v2486 = vrcp.pop %v2472
        %v2487 = vmul.f32 %v2326, %v2486
        %v2488 = vrcp.pop %v2473
        %v2489 = vmul.f32 %v2327, %v2488
        %vm2490 = vcmp.gt.f32.partialorder %v2475, %v2377
        %vm2491 = vcmp.gt.f32.partialorder %v2477, %v2377
        %vm2492 = vcmp.gt.f32.partialorder %v2479, %v2377
        %vm2493 = vcmp.gt.f32.partialorder %v2481, %v2377
        %vm2494 = vcmp.gt.f32.partialorder %v2483, %v2377
        %vm2495 = vcmp.gt.f32.partialorder %v2485, %v2377
        %vm2496 = vcmp.gt.f32.partialorder %v2487, %v2377
        %vm2497 = vcmp.gt.f32.partialorder %v2489, %v2377
        %v2498 = vsel %vm2490, %v2475, 0.0
        %v2499 = vsel %vm2491, %v2477, 0.0
        %v2500 = vsel %vm2492, %v2479, 0.0
        %v2501 = vsel %vm2493, %v2481, 0.0
        %v2502 = vsel %vm2494, %v2483, 0.0
        %v2503 = vsel %vm2495, %v2485, 0.0
        %v2504 = vsel %vm2496, %v2487, 0.0
        %v2505 = vsel %vm2497, %v2489, 0.0
        %v2506 = vsel %vm2328, %v2498, 0.0
        %2507 = vadd.xlane.f32.xlu0 %v2506
        %v2508 = vpop.xlane.xlu0 %2507
        %v2509 = vsel %vm2328, %v2499, 0.0
        %2510 = vadd.xlane.f32.xlu0 %v2509
        %v2511 = vpop.xlane.xlu0 %2510
        %v2512 = vsel %vm2328, %v2500, 0.0
        %2513 = vadd.xlane.f32.xlu0 %v2512
        %v2514 = vpop.xlane.xlu0 %2513
        %v2515 = vsel %vm2328, %v2501, 0.0
        %2516 = vadd.xlane.f32.xlu0 %v2515
        %v2517 = vpop.xlane.xlu0 %2516
        %v2518 = vsel %vm2328, %v2502, 0.0
        %2519 = vadd.xlane.f32.xlu0 %v2518
        %v2520 = vpop.xlane.xlu0 %2519
        %v2521 = vsel %vm2328, %v2503, 0.0
        %2522 = vadd.xlane.f32.xlu0 %v2521
        %v2523 = vpop.xlane.xlu0 %2522
        %v2524 = vsel %vm2328, %v2504, 0.0
        %2525 = vadd.xlane.f32.xlu0 %v2524
        %v2526 = vpop.xlane.xlu0 %2525
        %v2527 = vsel %vm2328, %v2505, 0.0
        %2528 = vadd.xlane.f32.xlu0 %v2527
        %v2529 = vpop.xlane.xlu0 %2528
        %v2530 = vadd.f32 %v2508, 1e-08
        %v2531 = vadd.f32 %v2511, 1e-08
        %v2532 = vadd.f32 %v2514, 1e-08
        %v2533 = vadd.f32 %v2517, 1e-08
        %v2534 = vadd.f32 %v2520, 1e-08
        %v2535 = vadd.f32 %v2523, 1e-08
        %v2536 = vadd.f32 %v2526, 1e-08
        %v2537 = vadd.f32 %v2529, 1e-08
        %v2538 = vrcp.pop %v2530
        %v2539 = vmul.f32 %v2498, %v2538
        %v2540 = vrcp.pop %v2531
        %v2541 = vmul.f32 %v2499, %v2540
        %v2542 = vrcp.pop %v2532
        %v2543 = vmul.f32 %v2500, %v2542
        %v2544 = vrcp.pop %v2533
        %v2545 = vmul.f32 %v2501, %v2544
        %v2546 = vrcp.pop %v2534
        %v2547 = vmul.f32 %v2502, %v2546
        %v2548 = vrcp.pop %v2535
        %v2549 = vmul.f32 %v2503, %v2548
        %v2550 = vrcp.pop %v2536
        %v2551 = vmul.f32 %v2504, %v2550
        %v2552 = vrcp.pop %v2537
        %v2553 = vmul.f32 %v2505, %v2552
        %v2555 = vsel %vm2328, %v2427, 0
        %2557 = vmatprep.subr.mxu0 0.0
        %2558 = vmatpush1.msra.mxu0 0.0
        %2559 = vmatprep.subr.mxu0 0.0
        %2560 = vmatpush1.msra.mxu0 0.0
        %2561 = vmatprep.subr.mxu0 0.0
        %2562 = vmatpush1.msra.mxu0 0.0
        %2563 = vmatprep.subr.mxu0 0.0
        %2564 = vmatpush1.msra.mxu0 0.0
        %2565 = vmatprep.subr.mxu0 0.0
        %2566 = vmatpush1.msra.mxu0 0.0
        %2567 = vmatprep.subr.mxu0 0.0
        %2568 = vmatpush1.msra.mxu0 0.0
        %2569 = vmatprep.subr.mxu0 0.0
        %2570 = vmatpush1.msra.mxu0 0.0
        %2571 = vmatprep.subr.mxu0 0.0
        %2572 = vmatpush1.msra.mxu0 0.0
        %2573 = vmatprep.subr.mxu0 0.0
        %2574 = vmatpush1.msra.mxu0 0.0
        %2575 = vmatprep.subr.mxu0 0.0
        %2576 = vmatpush1.msra.mxu0 0.0
        %2577 = vmatprep.subr.mxu0 0.0
        %2578 = vmatpush1.msra.mxu0 0.0
        %2579 = vmatprep.subr.mxu0 0.0
        %2580 = vmatpush1.msra.mxu0 0.0
        %2581 = vmatprep.subr.mxu0 0.0
        %2582 = vmatpush1.msra.mxu0 0.0
        %2583 = vmatprep.subr.mxu0 0.0
        %2584 = vmatpush1.msra.mxu0 0.0
        %2585 = vmatprep.subr.mxu0 0.0
        %2586 = vmatpush1.msra.mxu0 0.0
        %2587 = vmatprep.subr.mxu0 0.0
        %2588 = vmatpush1.msra.mxu0 %v1136
        %2589 = vmatprep.subr.mxu0 0.0
        %2590 = vmatpush2.msra.mxu0 0.0
        %2591 = vmatprep.subr.mxu0 0.0
        %2592 = vmatpush2.msra.mxu0 0.0
        %2593 = vmatprep.subr.mxu0 0.0
        %2594 = vmatpush2.msra.mxu0 0.0
        %2595 = vmatprep.subr.mxu0 0.0
        %2596 = vmatpush2.msra.mxu0 0.0
        %2597 = vmatprep.subr.mxu0 0.0
        %2598 = vmatpush2.msra.mxu0 0.0
        %2599 = vmatprep.subr.mxu0 0.0
        %2600 = vmatpush2.msra.mxu0 0.0
        %2601 = vmatprep.subr.mxu0 0.0
        %2602 = vmatpush2.msra.mxu0 0.0
        %2603 = vmatprep.subr.mxu0 0.0
        %2604 = vmatpush2.msra.mxu0 0.0
        %2605 = vmatprep.subr.mxu0 0.0
        %2606 = vmatpush2.msra.mxu0 0.0
        %2607 = vmatprep.subr.mxu0 0.0
        %2608 = vmatpush2.msra.mxu0 0.0
        %2609 = vmatprep.subr.mxu0 0.0
        %2610 = vmatpush2.msra.mxu0 0.0
        %2611 = vmatprep.subr.mxu0 0.0
        %2612 = vmatpush2.msra.mxu0 0.0
        %2613 = vmatprep.subr.mxu0 0.0
        %2614 = vmatpush2.msra.mxu0 0.0
        %2615 = vmatprep.subr.mxu0 0.0
        %2616 = vmatpush2.msra.mxu0 0.0
        %2617 = vmatprep.subr.mxu0 0.0
        %2618 = vmatpush2.msra.mxu0 0.0
        %2619 = vmatprep.subr.mxu0 0.0
        %2620 = vmatpush2.msra.mxu0 0.0
        %2621 = vmatprep.mubr.f32.mxu0 0.0
        %2622 = vmatmul.mubr.f32.gmra.mxu0 %v2555
        %v2623 = vpop.f32.mrf.mxu0
        %v2624 = vadd.f32 0.0, %v2623
        %v2625 = vpop.f32.mrf.mxu0
        %2626 = vdwg.mxu0
        %v2628 = vsel %vm2328, %v2429, 0
        %2630 = vmatprep.subr.mxu0 0.0
        %2631 = vmatpush1.msra.mxu0 0.0
        %2632 = vmatprep.subr.mxu0 0.0
        %2633 = vmatpush1.msra.mxu0 0.0
        %2634 = vmatprep.subr.mxu0 0.0
        %2635 = vmatpush1.msra.mxu0 0.0
        %2636 = vmatprep.subr.mxu0 0.0
        %2637 = vmatpush1.msra.mxu0 0.0
        %2638 = vmatprep.subr.mxu0 0.0
        %2639 = vmatpush1.msra.mxu0 0.0
        %2640 = vmatprep.subr.mxu0 0.0
        %2641 = vmatpush1.msra.mxu0 0.0
        %2642 = vmatprep.subr.mxu0 0.0
        %2643 = vmatpush1.msra.mxu0 0.0
        %2644 = vmatprep.subr.mxu0 0.0
        %2645 = vmatpush1.msra.mxu0 0.0
        %2646 = vmatprep.subr.mxu0 0.0
        %2647 = vmatpush1.msra.mxu0 0.0
        %2648 = vmatprep.subr.mxu0 0.0
        %2649 = vmatpush1.msra.mxu0 0.0
        %2650 = vmatprep.subr.mxu0 0.0
        %2651 = vmatpush1.msra.mxu0 0.0
        %2652 = vmatprep.subr.mxu0 0.0
        %2653 = vmatpush1.msra.mxu0 0.0
        %2654 = vmatprep.subr.mxu0 0.0
        %2655 = vmatpush1.msra.mxu0 0.0
        %2656 = vmatprep.subr.mxu0 0.0
        %2657 = vmatpush1.msra.mxu0 0.0
        %2658 = vmatprep.subr.mxu0 0.0
        %2659 = vmatpush1.msra.mxu0 0.0
        %2660 = vmatprep.subr.mxu0 0.0
        %2661 = vmatpush1.msra.mxu0 %v1137
        %2662 = vmatprep.subr.mxu0 0.0
        %2663 = vmatpush2.msra.mxu0 0.0
        %2664 = vmatprep.subr.mxu0 0.0
        %2665 = vmatpush2.msra.mxu0 0.0
        %2666 = vmatprep.subr.mxu0 0.0
        %2667 = vmatpush2.msra.mxu0 0.0
        %2668 = vmatprep.subr.mxu0 0.0
        %2669 = vmatpush2.msra.mxu0 0.0
        %2670 = vmatprep.subr.mxu0 0.0
        %2671 = vmatpush2.msra.mxu0 0.0
        %2672 = vmatprep.subr.mxu0 0.0
        %2673 = vmatpush2.msra.mxu0 0.0
        %2674 = vmatprep.subr.mxu0 0.0
        %2675 = vmatpush2.msra.mxu0 0.0
        %2676 = vmatprep.subr.mxu0 0.0
        %2677 = vmatpush2.msra.mxu0 0.0
        %2678 = vmatprep.subr.mxu0 0.0
        %2679 = vmatpush2.msra.mxu0 0.0
        %2680 = vmatprep.subr.mxu0 0.0
        %2681 = vmatpush2.msra.mxu0 0.0
        %2682 = vmatprep.subr.mxu0 0.0
        %2683 = vmatpush2.msra.mxu0 0.0
        %2684 = vmatprep.subr.mxu0 0.0
        %2685 = vmatpush2.msra.mxu0 0.0
        %2686 = vmatprep.subr.mxu0 0.0
        %2687 = vmatpush2.msra.mxu0 0.0
        %2688 = vmatprep.subr.mxu0 0.0
        %2689 = vmatpush2.msra.mxu0 0.0
        %2690 = vmatprep.subr.mxu0 0.0
        %2691 = vmatpush2.msra.mxu0 0.0
        %2692 = vmatprep.subr.mxu0 0.0
        %2693 = vmatpush2.msra.mxu0 0.0
        %2694 = vmatprep.mubr.f32.mxu0 0.0
        %2695 = vmatmul.mubr.f32.gmra.mxu0 %v2628
        %v2696 = vpop.f32.mrf.mxu0
        %v2697 = vadd.f32 0.0, %v2696
        %v2698 = vpop.f32.mrf.mxu0
        %2699 = vdwg.mxu0
        %v2701 = vsel %vm2328, %v2431, 0
        %2703 = vmatprep.subr.mxu0 0.0
        %2704 = vmatpush1.msra.mxu0 0.0
        %2705 = vmatprep.subr.mxu0 0.0
        %2706 = vmatpush1.msra.mxu0 0.0
        %2707 = vmatprep.subr.mxu0 0.0
        %2708 = vmatpush1.msra.mxu0 0.0
        %2709 = vmatprep.subr.mxu0 0.0
        %2710 = vmatpush1.msra.mxu0 0.0
        %2711 = vmatprep.subr.mxu0 0.0
        %2712 = vmatpush1.msra.mxu0 0.0
        %2713 = vmatprep.subr.mxu0 0.0
        %2714 = vmatpush1.msra.mxu0 0.0
        %2715 = vmatprep.subr.mxu0 0.0
        %2716 = vmatpush1.msra.mxu0 0.0
        %2717 = vmatprep.subr.mxu0 0.0
        %2718 = vmatpush1.msra.mxu0 0.0
        %2719 = vmatprep.subr.mxu0 0.0
        %2720 = vmatpush1.msra.mxu0 0.0
        %2721 = vmatprep.subr.mxu0 0.0
        %2722 = vmatpush1.msra.mxu0 0.0
        %2723 = vmatprep.subr.mxu0 0.0
        %2724 = vmatpush1.msra.mxu0 0.0
        %2725 = vmatprep.subr.mxu0 0.0
        %2726 = vmatpush1.msra.mxu0 0.0
        %2727 = vmatprep.subr.mxu0 0.0
        %2728 = vmatpush1.msra.mxu0 0.0
        %2729 = vmatprep.subr.mxu0 0.0
        %2730 = vmatpush1.msra.mxu0 0.0
        %2731 = vmatprep.subr.mxu0 0.0
        %2732 = vmatpush1.msra.mxu0 0.0
        %2733 = vmatprep.subr.mxu0 0.0
        %2734 = vmatpush1.msra.mxu0 %v1138
        %2735 = vmatprep.subr.mxu0 0.0
        %2736 = vmatpush2.msra.mxu0 0.0
        %2737 = vmatprep.subr.mxu0 0.0
        %2738 = vmatpush2.msra.mxu0 0.0
        %2739 = vmatprep.subr.mxu0 0.0
        %2740 = vmatpush2.msra.mxu0 0.0
        %2741 = vmatprep.subr.mxu0 0.0
        %2742 = vmatpush2.msra.mxu0 0.0
        %2743 = vmatprep.subr.mxu0 0.0
        %2744 = vmatpush2.msra.mxu0 0.0
        %2745 = vmatprep.subr.mxu0 0.0
        %2746 = vmatpush2.msra.mxu0 0.0
        %2747 = vmatprep.subr.mxu0 0.0
        %2748 = vmatpush2.msra.mxu0 0.0
        %2749 = vmatprep.subr.mxu0 0.0
        %2750 = vmatpush2.msra.mxu0 0.0
        %2751 = vmatprep.subr.mxu0 0.0
        %2752 = vmatpush2.msra.mxu0 0.0
        %2753 = vmatprep.subr.mxu0 0.0
        %2754 = vmatpush2.msra.mxu0 0.0
        %2755 = vmatprep.subr.mxu0 0.0
        %2756 = vmatpush2.msra.mxu0 0.0
        %2757 = vmatprep.subr.mxu0 0.0
        %2758 = vmatpush2.msra.mxu0 0.0
        %2759 = vmatprep.subr.mxu0 0.0
        %2760 = vmatpush2.msra.mxu0 0.0
        %2761 = vmatprep.subr.mxu0 0.0
        %2762 = vmatpush2.msra.mxu0 0.0
        %2763 = vmatprep.subr.mxu0 0.0
        %2764 = vmatpush2.msra.mxu0 0.0
        %2765 = vmatprep.subr.mxu0 0.0
        %2766 = vmatpush2.msra.mxu0 0.0
        %2767 = vmatprep.mubr.f32.mxu0 0.0
        %2768 = vmatmul.mubr.f32.gmra.mxu0 %v2701
        %v2769 = vpop.f32.mrf.mxu0
        %v2770 = vadd.f32 0.0, %v2769
        %v2771 = vpop.f32.mrf.mxu0
        %2772 = vdwg.mxu0
        %v2774 = vsel %vm2328, %v2433, 0
        %2776 = vmatprep.subr.mxu0 0.0
        %2777 = vmatpush1.msra.mxu0 0.0
        %2778 = vmatprep.subr.mxu0 0.0
        %2779 = vmatpush1.msra.mxu0 0.0
        %2780 = vmatprep.subr.mxu0 0.0
        %2781 = vmatpush1.msra.mxu0 0.0
        %2782 = vmatprep.subr.mxu0 0.0
        %2783 = vmatpush1.msra.mxu0 0.0
        %2784 = vmatprep.subr.mxu0 0.0
        %2785 = vmatpush1.msra.mxu0 0.0
        %2786 = vmatprep.subr.mxu0 0.0
        %2787 = vmatpush1.msra.mxu0 0.0
        %2788 = vmatprep.subr.mxu0 0.0
        %2789 = vmatpush1.msra.mxu0 0.0
        %2790 = vmatprep.subr.mxu0 0.0
        %2791 = vmatpush1.msra.mxu0 0.0
        %2792 = vmatprep.subr.mxu0 0.0
        %2793 = vmatpush1.msra.mxu0 0.0
        %2794 = vmatprep.subr.mxu0 0.0
        %2795 = vmatpush1.msra.mxu0 0.0
        %2796 = vmatprep.subr.mxu0 0.0
        %2797 = vmatpush1.msra.mxu0 0.0
        %2798 = vmatprep.subr.mxu0 0.0
        %2799 = vmatpush1.msra.mxu0 0.0
        %2800 = vmatprep.subr.mxu0 0.0
        %2801 = vmatpush1.msra.mxu0 0.0
        %2802 = vmatprep.subr.mxu0 0.0
        %2803 = vmatpush1.msra.mxu0 0.0
        %2804 = vmatprep.subr.mxu0 0.0
        %2805 = vmatpush1.msra.mxu0 0.0
        %2806 = vmatprep.subr.mxu0 0.0
        %2807 = vmatpush1.msra.mxu0 %v1139
        %2808 = vmatprep.subr.mxu0 0.0
        %2809 = vmatpush2.msra.mxu0 0.0
        %2810 = vmatprep.subr.mxu0 0.0
        %2811 = vmatpush2.msra.mxu0 0.0
        %2812 = vmatprep.subr.mxu0 0.0
        %2813 = vmatpush2.msra.mxu0 0.0
        %2814 = vmatprep.subr.mxu0 0.0
        %2815 = vmatpush2.msra.mxu0 0.0
        %2816 = vmatprep.subr.mxu0 0.0
        %2817 = vmatpush2.msra.mxu0 0.0
        %2818 = vmatprep.subr.mxu0 0.0
        %2819 = vmatpush2.msra.mxu0 0.0
        %2820 = vmatprep.subr.mxu0 0.0
        %2821 = vmatpush2.msra.mxu0 0.0
        %2822 = vmatprep.subr.mxu0 0.0
        %2823 = vmatpush2.msra.mxu0 0.0
        %2824 = vmatprep.subr.mxu0 0.0
        %2825 = vmatpush2.msra.mxu0 0.0
        %2826 = vmatprep.subr.mxu0 0.0
        %2827 = vmatpush2.msra.mxu0 0.0
        %2828 = vmatprep.subr.mxu0 0.0
        %2829 = vmatpush2.msra.mxu0 0.0
        %2830 = vmatprep.subr.mxu0 0.0
        %2831 = vmatpush2.msra.mxu0 0.0
        %2832 = vmatprep.subr.mxu0 0.0
        %2833 = vmatpush2.msra.mxu0 0.0
        %2834 = vmatprep.subr.mxu0 0.0
        %2835 = vmatpush2.msra.mxu0 0.0
        %2836 = vmatprep.subr.mxu0 0.0
        %2837 = vmatpush2.msra.mxu0 0.0
        %2838 = vmatprep.subr.mxu0 0.0
        %2839 = vmatpush2.msra.mxu0 0.0
        %2840 = vmatprep.mubr.f32.mxu0 0.0
        %2841 = vmatmul.mubr.f32.gmra.mxu0 %v2774
        %v2842 = vpop.f32.mrf.mxu0
        %v2843 = vadd.f32 0.0, %v2842
        %v2844 = vpop.f32.mrf.mxu0
        %2845 = vdwg.mxu0
        %v2847 = vsel %vm2328, %v2435, 0
        %2849 = vmatprep.subr.mxu0 0.0
        %2850 = vmatpush1.msra.mxu0 0.0
        %2851 = vmatprep.subr.mxu0 0.0
        %2852 = vmatpush1.msra.mxu0 0.0
        %2853 = vmatprep.subr.mxu0 0.0
        %2854 = vmatpush1.msra.mxu0 0.0
        %2855 = vmatprep.subr.mxu0 0.0
        %2856 = vmatpush1.msra.mxu0 0.0
        %2857 = vmatprep.subr.mxu0 0.0
        %2858 = vmatpush1.msra.mxu0 0.0
        %2859 = vmatprep.subr.mxu0 0.0
        %2860 = vmatpush1.msra.mxu0 0.0
        %2861 = vmatprep.subr.mxu0 0.0
        %2862 = vmatpush1.msra.mxu0 0.0
        %2863 = vmatprep.subr.mxu0 0.0
        %2864 = vmatpush1.msra.mxu0 0.0
        %2865 = vmatprep.subr.mxu0 0.0
        %2866 = vmatpush1.msra.mxu0 0.0
        %2867 = vmatprep.subr.mxu0 0.0
        %2868 = vmatpush1.msra.mxu0 0.0
        %2869 = vmatprep.subr.mxu0 0.0
        %2870 = vmatpush1.msra.mxu0 0.0
        %2871 = vmatprep.subr.mxu0 0.0
        %2872 = vmatpush1.msra.mxu0 0.0
        %2873 = vmatprep.subr.mxu0 0.0
        %2874 = vmatpush1.msra.mxu0 0.0
        %2875 = vmatprep.subr.mxu0 0.0
        %2876 = vmatpush1.msra.mxu0 0.0
        %2877 = vmatprep.subr.mxu0 0.0
        %2878 = vmatpush1.msra.mxu0 0.0
        %2879 = vmatprep.subr.mxu0 0.0
        %2880 = vmatpush1.msra.mxu0 %v1140
        %2881 = vmatprep.subr.mxu0 0.0
        %2882 = vmatpush2.msra.mxu0 0.0
        %2883 = vmatprep.subr.mxu0 0.0
        %2884 = vmatpush2.msra.mxu0 0.0
        %2885 = vmatprep.subr.mxu0 0.0
        %2886 = vmatpush2.msra.mxu0 0.0
        %2887 = vmatprep.subr.mxu0 0.0
        %2888 = vmatpush2.msra.mxu0 0.0
        %2889 = vmatprep.subr.mxu0 0.0
        %2890 = vmatpush2.msra.mxu0 0.0
        %2891 = vmatprep.subr.mxu0 0.0
        %2892 = vmatpush2.msra.mxu0 0.0
        %2893 = vmatprep.subr.mxu0 0.0
        %2894 = vmatpush2.msra.mxu0 0.0
        %2895 = vmatprep.subr.mxu0 0.0
        %2896 = vmatpush2.msra.mxu0 0.0
        %2897 = vmatprep.subr.mxu0 0.0
        %2898 = vmatpush2.msra.mxu0 0.0
        %2899 = vmatprep.subr.mxu0 0.0
        %2900 = vmatpush2.msra.mxu0 0.0
        %2901 = vmatprep.subr.mxu0 0.0
        %2902 = vmatpush2.msra.mxu0 0.0
        %2903 = vmatprep.subr.mxu0 0.0
        %2904 = vmatpush2.msra.mxu0 0.0
        %2905 = vmatprep.subr.mxu0 0.0
        %2906 = vmatpush2.msra.mxu0 0.0
        %2907 = vmatprep.subr.mxu0 0.0
        %2908 = vmatpush2.msra.mxu0 0.0
        %2909 = vmatprep.subr.mxu0 0.0
        %2910 = vmatpush2.msra.mxu0 0.0
        %2911 = vmatprep.subr.mxu0 0.0
        %2912 = vmatpush2.msra.mxu0 0.0
        %2913 = vmatprep.mubr.f32.mxu0 0.0
        %2914 = vmatmul.mubr.f32.gmra.mxu0 %v2847
        %v2915 = vpop.f32.mrf.mxu0
        %v2916 = vadd.f32 0.0, %v2915
        %v2917 = vpop.f32.mrf.mxu0
        %2918 = vdwg.mxu0
        %v2920 = vsel %vm2328, %v2437, 0
        %2922 = vmatprep.subr.mxu0 0.0
        %2923 = vmatpush1.msra.mxu0 0.0
        %2924 = vmatprep.subr.mxu0 0.0
        %2925 = vmatpush1.msra.mxu0 0.0
        %2926 = vmatprep.subr.mxu0 0.0
        %2927 = vmatpush1.msra.mxu0 0.0
        %2928 = vmatprep.subr.mxu0 0.0
        %2929 = vmatpush1.msra.mxu0 0.0
        %2930 = vmatprep.subr.mxu0 0.0
        %2931 = vmatpush1.msra.mxu0 0.0
        %2932 = vmatprep.subr.mxu0 0.0
        %2933 = vmatpush1.msra.mxu0 0.0
        %2934 = vmatprep.subr.mxu0 0.0
        %2935 = vmatpush1.msra.mxu0 0.0
        %2936 = vmatprep.subr.mxu0 0.0
        %2937 = vmatpush1.msra.mxu0 0.0
        %2938 = vmatprep.subr.mxu0 0.0
        %2939 = vmatpush1.msra.mxu0 0.0
        %2940 = vmatprep.subr.mxu0 0.0
        %2941 = vmatpush1.msra.mxu0 0.0
        %2942 = vmatprep.subr.mxu0 0.0
        %2943 = vmatpush1.msra.mxu0 0.0
        %2944 = vmatprep.subr.mxu0 0.0
        %2945 = vmatpush1.msra.mxu0 0.0
        %2946 = vmatprep.subr.mxu0 0.0
        %2947 = vmatpush1.msra.mxu0 0.0
        %2948 = vmatprep.subr.mxu0 0.0
        %2949 = vmatpush1.msra.mxu0 0.0
        %2950 = vmatprep.subr.mxu0 0.0
        %2951 = vmatpush1.msra.mxu0 0.0
        %2952 = vmatprep.subr.mxu0 0.0
        %2953 = vmatpush1.msra.mxu0 %v1141
        %2954 = vmatprep.subr.mxu0 0.0
        %2955 = vmatpush2.msra.mxu0 0.0
        %2956 = vmatprep.subr.mxu0 0.0
        %2957 = vmatpush2.msra.mxu0 0.0
        %2958 = vmatprep.subr.mxu0 0.0
        %2959 = vmatpush2.msra.mxu0 0.0
        %2960 = vmatprep.subr.mxu0 0.0
        %2961 = vmatpush2.msra.mxu0 0.0
        %2962 = vmatprep.subr.mxu0 0.0
        %2963 = vmatpush2.msra.mxu0 0.0
        %2964 = vmatprep.subr.mxu0 0.0
        %2965 = vmatpush2.msra.mxu0 0.0
        %2966 = vmatprep.subr.mxu0 0.0
        %2967 = vmatpush2.msra.mxu0 0.0
        %2968 = vmatprep.subr.mxu0 0.0
        %2969 = vmatpush2.msra.mxu0 0.0
        %2970 = vmatprep.subr.mxu0 0.0
        %2971 = vmatpush2.msra.mxu0 0.0
        %2972 = vmatprep.subr.mxu0 0.0
        %2973 = vmatpush2.msra.mxu0 0.0
        %2974 = vmatprep.subr.mxu0 0.0
        %2975 = vmatpush2.msra.mxu0 0.0
        %2976 = vmatprep.subr.mxu0 0.0
        %2977 = vmatpush2.msra.mxu0 0.0
        %2978 = vmatprep.subr.mxu0 0.0
        %2979 = vmatpush2.msra.mxu0 0.0
        %2980 = vmatprep.subr.mxu0 0.0
        %2981 = vmatpush2.msra.mxu0 0.0
        %2982 = vmatprep.subr.mxu0 0.0
        %2983 = vmatpush2.msra.mxu0 0.0
        %2984 = vmatprep.subr.mxu0 0.0
        %2985 = vmatpush2.msra.mxu0 0.0
        %2986 = vmatprep.mubr.f32.mxu0 0.0
        %2987 = vmatmul.mubr.f32.gmra.mxu0 %v2920
        %v2988 = vpop.f32.mrf.mxu0
        %v2989 = vadd.f32 0.0, %v2988
        %v2990 = vpop.f32.mrf.mxu0
        %2991 = vdwg.mxu0
        %v2993 = vsel %vm2328, %v2439, 0
        %2995 = vmatprep.subr.mxu0 0.0
        %2996 = vmatpush1.msra.mxu0 0.0
        %2997 = vmatprep.subr.mxu0 0.0
        %2998 = vmatpush1.msra.mxu0 0.0
        %2999 = vmatprep.subr.mxu0 0.0
        %3000 = vmatpush1.msra.mxu0 0.0
        %3001 = vmatprep.subr.mxu0 0.0
        %3002 = vmatpush1.msra.mxu0 0.0
        %3003 = vmatprep.subr.mxu0 0.0
        %3004 = vmatpush1.msra.mxu0 0.0
        %3005 = vmatprep.subr.mxu0 0.0
        %3006 = vmatpush1.msra.mxu0 0.0
        %3007 = vmatprep.subr.mxu0 0.0
        %3008 = vmatpush1.msra.mxu0 0.0
        %3009 = vmatprep.subr.mxu0 0.0
        %3010 = vmatpush1.msra.mxu0 0.0
        %3011 = vmatprep.subr.mxu0 0.0
        %3012 = vmatpush1.msra.mxu0 0.0
        %3013 = vmatprep.subr.mxu0 0.0
        %3014 = vmatpush1.msra.mxu0 0.0
        %3015 = vmatprep.subr.mxu0 0.0
        %3016 = vmatpush1.msra.mxu0 0.0
        %3017 = vmatprep.subr.mxu0 0.0
        %3018 = vmatpush1.msra.mxu0 0.0
        %3019 = vmatprep.subr.mxu0 0.0
        %3020 = vmatpush1.msra.mxu0 0.0
        %3021 = vmatprep.subr.mxu0 0.0
        %3022 = vmatpush1.msra.mxu0 0.0
        %3023 = vmatprep.subr.mxu0 0.0
        %3024 = vmatpush1.msra.mxu0 0.0
        %3025 = vmatprep.subr.mxu0 0.0
        %3026 = vmatpush1.msra.mxu0 %v1142
        %3027 = vmatprep.subr.mxu0 0.0
        %3028 = vmatpush2.msra.mxu0 0.0
        %3029 = vmatprep.subr.mxu0 0.0
        %3030 = vmatpush2.msra.mxu0 0.0
        %3031 = vmatprep.subr.mxu0 0.0
        %3032 = vmatpush2.msra.mxu0 0.0
        %3033 = vmatprep.subr.mxu0 0.0
        %3034 = vmatpush2.msra.mxu0 0.0
        %3035 = vmatprep.subr.mxu0 0.0
        %3036 = vmatpush2.msra.mxu0 0.0
        %3037 = vmatprep.subr.mxu0 0.0
        %3038 = vmatpush2.msra.mxu0 0.0
        %3039 = vmatprep.subr.mxu0 0.0
        %3040 = vmatpush2.msra.mxu0 0.0
        %3041 = vmatprep.subr.mxu0 0.0
        %3042 = vmatpush2.msra.mxu0 0.0
        %3043 = vmatprep.subr.mxu0 0.0
        %3044 = vmatpush2.msra.mxu0 0.0
        %3045 = vmatprep.subr.mxu0 0.0
        %3046 = vmatpush2.msra.mxu0 0.0
        %3047 = vmatprep.subr.mxu0 0.0
        %3048 = vmatpush2.msra.mxu0 0.0
        %3049 = vmatprep.subr.mxu0 0.0
        %3050 = vmatpush2.msra.mxu0 0.0
        %3051 = vmatprep.subr.mxu0 0.0
        %3052 = vmatpush2.msra.mxu0 0.0
        %3053 = vmatprep.subr.mxu0 0.0
        %3054 = vmatpush2.msra.mxu0 0.0
        %3055 = vmatprep.subr.mxu0 0.0
        %3056 = vmatpush2.msra.mxu0 0.0
        %3057 = vmatprep.subr.mxu0 0.0
        %3058 = vmatpush2.msra.mxu0 0.0
        %3059 = vmatprep.mubr.f32.mxu0 0.0
        %3060 = vmatmul.mubr.f32.gmra.mxu0 %v2993
        %v3061 = vpop.f32.mrf.mxu0
        %v3062 = vadd.f32 0.0, %v3061
        %v3063 = vpop.f32.mrf.mxu0
        %3064 = vdwg.mxu0
        %v3066 = vsel %vm2328, %v2441, 0
        %3068 = vmatprep.subr.mxu0 0.0
        %3069 = vmatpush1.msra.mxu0 0.0
        %3070 = vmatprep.subr.mxu0 0.0
        %3071 = vmatpush1.msra.mxu0 0.0
        %3072 = vmatprep.subr.mxu0 0.0
        %3073 = vmatpush1.msra.mxu0 0.0
        %3074 = vmatprep.subr.mxu0 0.0
        %3075 = vmatpush1.msra.mxu0 0.0
        %3076 = vmatprep.subr.mxu0 0.0
        %3077 = vmatpush1.msra.mxu0 0.0
        %3078 = vmatprep.subr.mxu0 0.0
        %3079 = vmatpush1.msra.mxu0 0.0
        %3080 = vmatprep.subr.mxu0 0.0
        %3081 = vmatpush1.msra.mxu0 0.0
        %3082 = vmatprep.subr.mxu0 0.0
        %3083 = vmatpush1.msra.mxu0 0.0
        %3084 = vmatprep.subr.mxu0 0.0
        %3085 = vmatpush1.msra.mxu0 0.0
        %3086 = vmatprep.subr.mxu0 0.0
        %3087 = vmatpush1.msra.mxu0 0.0
        %3088 = vmatprep.subr.mxu0 0.0
        %3089 = vmatpush1.msra.mxu0 0.0
        %3090 = vmatprep.subr.mxu0 0.0
        %3091 = vmatpush1.msra.mxu0 0.0
        %3092 = vmatprep.subr.mxu0 0.0
        %3093 = vmatpush1.msra.mxu0 0.0
        %3094 = vmatprep.subr.mxu0 0.0
        %3095 = vmatpush1.msra.mxu0 0.0
        %3096 = vmatprep.subr.mxu0 0.0
        %3097 = vmatpush1.msra.mxu0 0.0
        %3098 = vmatprep.subr.mxu0 0.0
        %3099 = vmatpush1.msra.mxu0 %v1143
        %3100 = vmatprep.subr.mxu0 0.0
        %3101 = vmatpush2.msra.mxu0 0.0
        %3102 = vmatprep.subr.mxu0 0.0
        %3103 = vmatpush2.msra.mxu0 0.0
        %3104 = vmatprep.subr.mxu0 0.0
        %3105 = vmatpush2.msra.mxu0 0.0
        %3106 = vmatprep.subr.mxu0 0.0
        %3107 = vmatpush2.msra.mxu0 0.0
        %3108 = vmatprep.subr.mxu0 0.0
        %3109 = vmatpush2.msra.mxu0 0.0
        %3110 = vmatprep.subr.mxu0 0.0
        %3111 = vmatpush2.msra.mxu0 0.0
        %3112 = vmatprep.subr.mxu0 0.0
        %3113 = vmatpush2.msra.mxu0 0.0
        %3114 = vmatprep.subr.mxu0 0.0
        %3115 = vmatpush2.msra.mxu0 0.0
        %3116 = vmatprep.subr.mxu0 0.0
        %3117 = vmatpush2.msra.mxu0 0.0
        %3118 = vmatprep.subr.mxu0 0.0
        %3119 = vmatpush2.msra.mxu0 0.0
        %3120 = vmatprep.subr.mxu0 0.0
        %3121 = vmatpush2.msra.mxu0 0.0
        %3122 = vmatprep.subr.mxu0 0.0
        %3123 = vmatpush2.msra.mxu0 0.0
        %3124 = vmatprep.subr.mxu0 0.0
        %3125 = vmatpush2.msra.mxu0 0.0
        %3126 = vmatprep.subr.mxu0 0.0
        %3127 = vmatpush2.msra.mxu0 0.0
        %3128 = vmatprep.subr.mxu0 0.0
        %3129 = vmatpush2.msra.mxu0 0.0
        %3130 = vmatprep.subr.mxu0 0.0
        %3131 = vmatpush2.msra.mxu0 0.0
        %3132 = vmatprep.mubr.f32.mxu0 0.0
        %3133 = vmatmul.mubr.f32.gmra.mxu0 %v3066
        %v3134 = vpop.f32.mrf.mxu0
        %v3135 = vadd.f32 0.0, %v3134
        %v3136 = vpop.f32.mrf.mxu0
        %3137 = vdwg.mxu0
        %v3139 = vsel %vm2328, %v2539, 0
        %3141 = vmatprep.subr.mxu0 0.0
        %3142 = vmatpush1.msra.mxu0 0.0
        %3143 = vmatprep.subr.mxu0 0.0
        %3144 = vmatpush1.msra.mxu0 0.0
        %3145 = vmatprep.subr.mxu0 0.0
        %3146 = vmatpush1.msra.mxu0 0.0
        %3147 = vmatprep.subr.mxu0 0.0
        %3148 = vmatpush1.msra.mxu0 0.0
        %3149 = vmatprep.subr.mxu0 0.0
        %3150 = vmatpush1.msra.mxu0 0.0
        %3151 = vmatprep.subr.mxu0 0.0
        %3152 = vmatpush1.msra.mxu0 0.0
        %3153 = vmatprep.subr.mxu0 0.0
        %3154 = vmatpush1.msra.mxu0 0.0
        %3155 = vmatprep.subr.mxu0 0.0
        %3156 = vmatpush1.msra.mxu0 0.0
        %3157 = vmatprep.subr.mxu0 0.0
        %3158 = vmatpush1.msra.mxu0 0.0
        %3159 = vmatprep.subr.mxu0 0.0
        %3160 = vmatpush1.msra.mxu0 0.0
        %3161 = vmatprep.subr.mxu0 0.0
        %3162 = vmatpush1.msra.mxu0 0.0
        %3163 = vmatprep.subr.mxu0 0.0
        %3164 = vmatpush1.msra.mxu0 0.0
        %3165 = vmatprep.subr.mxu0 0.0
        %3166 = vmatpush1.msra.mxu0 0.0
        %3167 = vmatprep.subr.mxu0 0.0
        %3168 = vmatpush1.msra.mxu0 0.0
        %3169 = vmatprep.subr.mxu0 0.0
        %3170 = vmatpush1.msra.mxu0 0.0
        %3171 = vmatprep.subr.mxu0 0.0
        %3172 = vmatpush1.msra.mxu0 %v761
        %3173 = vmatprep.subr.mxu0 0.0
        %3174 = vmatpush2.msra.mxu0 0.0
        %3175 = vmatprep.subr.mxu0 0.0
        %3176 = vmatpush2.msra.mxu0 0.0
        %3177 = vmatprep.subr.mxu0 0.0
        %3178 = vmatpush2.msra.mxu0 0.0
        %3179 = vmatprep.subr.mxu0 0.0
        %3180 = vmatpush2.msra.mxu0 0.0
        %3181 = vmatprep.subr.mxu0 0.0
        %3182 = vmatpush2.msra.mxu0 0.0
        %3183 = vmatprep.subr.mxu0 0.0
        %3184 = vmatpush2.msra.mxu0 0.0
        %3185 = vmatprep.subr.mxu0 0.0
        %3186 = vmatpush2.msra.mxu0 0.0
        %3187 = vmatprep.subr.mxu0 0.0
        %3188 = vmatpush2.msra.mxu0 0.0
        %3189 = vmatprep.subr.mxu0 0.0
        %3190 = vmatpush2.msra.mxu0 0.0
        %3191 = vmatprep.subr.mxu0 0.0
        %3192 = vmatpush2.msra.mxu0 0.0
        %3193 = vmatprep.subr.mxu0 0.0
        %3194 = vmatpush2.msra.mxu0 0.0
        %3195 = vmatprep.subr.mxu0 0.0
        %3196 = vmatpush2.msra.mxu0 0.0
        %3197 = vmatprep.subr.mxu0 0.0
        %3198 = vmatpush2.msra.mxu0 0.0
        %3199 = vmatprep.subr.mxu0 0.0
        %3200 = vmatpush2.msra.mxu0 0.0
        %3201 = vmatprep.subr.mxu0 0.0
        %3202 = vmatpush2.msra.mxu0 0.0
        %3203 = vmatprep.subr.mxu0 0.0
        %3204 = vmatpush2.msra.mxu0 0.0
        %3205 = vmatprep.mubr.f32.mxu0 0.0
        %3206 = vmatmul.mubr.f32.gmra.mxu0 %v3139
        %v3207 = vpop.f32.mrf.mxu0
        %v3208 = vadd.f32 0.0, %v3207
        %v3209 = vpop.f32.mrf.mxu0
        %3210 = vdwg.mxu0
        %v3212 = vsel %vm2328, %v2541, 0
        %3214 = vmatprep.subr.mxu0 0.0
        %3215 = vmatpush1.msra.mxu0 0.0
        %3216 = vmatprep.subr.mxu0 0.0
        %3217 = vmatpush1.msra.mxu0 0.0
        %3218 = vmatprep.subr.mxu0 0.0
        %3219 = vmatpush1.msra.mxu0 0.0
        %3220 = vmatprep.subr.mxu0 0.0
        %3221 = vmatpush1.msra.mxu0 0.0
        %3222 = vmatprep.subr.mxu0 0.0
        %3223 = vmatpush1.msra.mxu0 0.0
        %3224 = vmatprep.subr.mxu0 0.0
        %3225 = vmatpush1.msra.mxu0 0.0
        %3226 = vmatprep.subr.mxu0 0.0
        %3227 = vmatpush1.msra.mxu0 0.0
        %3228 = vmatprep.subr.mxu0 0.0
        %3229 = vmatpush1.msra.mxu0 0.0
        %3230 = vmatprep.subr.mxu0 0.0
        %3231 = vmatpush1.msra.mxu0 0.0
        %3232 = vmatprep.subr.mxu0 0.0
        %3233 = vmatpush1.msra.mxu0 0.0
        %3234 = vmatprep.subr.mxu0 0.0
        %3235 = vmatpush1.msra.mxu0 0.0
        %3236 = vmatprep.subr.mxu0 0.0
        %3237 = vmatpush1.msra.mxu0 0.0
        %3238 = vmatprep.subr.mxu0 0.0
        %3239 = vmatpush1.msra.mxu0 0.0
        %3240 = vmatprep.subr.mxu0 0.0
        %3241 = vmatpush1.msra.mxu0 0.0
        %3242 = vmatprep.subr.mxu0 0.0
        %3243 = vmatpush1.msra.mxu0 0.0
        %3244 = vmatprep.subr.mxu0 0.0
        %3245 = vmatpush1.msra.mxu0 %v762
        %3246 = vmatprep.subr.mxu0 0.0
        %3247 = vmatpush2.msra.mxu0 0.0
        %3248 = vmatprep.subr.mxu0 0.0
        %3249 = vmatpush2.msra.mxu0 0.0
        %3250 = vmatprep.subr.mxu0 0.0
        %3251 = vmatpush2.msra.mxu0 0.0
        %3252 = vmatprep.subr.mxu0 0.0
        %3253 = vmatpush2.msra.mxu0 0.0
        %3254 = vmatprep.subr.mxu0 0.0
        %3255 = vmatpush2.msra.mxu0 0.0
        %3256 = vmatprep.subr.mxu0 0.0
        %3257 = vmatpush2.msra.mxu0 0.0
        %3258 = vmatprep.subr.mxu0 0.0
        %3259 = vmatpush2.msra.mxu0 0.0
        %3260 = vmatprep.subr.mxu0 0.0
        %3261 = vmatpush2.msra.mxu0 0.0
        %3262 = vmatprep.subr.mxu0 0.0
        %3263 = vmatpush2.msra.mxu0 0.0
        %3264 = vmatprep.subr.mxu0 0.0
        %3265 = vmatpush2.msra.mxu0 0.0
        %3266 = vmatprep.subr.mxu0 0.0
        %3267 = vmatpush2.msra.mxu0 0.0
        %3268 = vmatprep.subr.mxu0 0.0
        %3269 = vmatpush2.msra.mxu0 0.0
        %3270 = vmatprep.subr.mxu0 0.0
        %3271 = vmatpush2.msra.mxu0 0.0
        %3272 = vmatprep.subr.mxu0 0.0
        %3273 = vmatpush2.msra.mxu0 0.0
        %3274 = vmatprep.subr.mxu0 0.0
        %3275 = vmatpush2.msra.mxu0 0.0
        %3276 = vmatprep.subr.mxu0 0.0
        %3277 = vmatpush2.msra.mxu0 0.0
        %3278 = vmatprep.mubr.f32.mxu0 0.0
        %3279 = vmatmul.mubr.f32.gmra.mxu0 %v3212
        %v3280 = vpop.f32.mrf.mxu0
        %v3281 = vadd.f32 0.0, %v3280
        %v3282 = vpop.f32.mrf.mxu0
        %3283 = vdwg.mxu0
        %v3285 = vsel %vm2328, %v2543, 0
        %3287 = vmatprep.subr.mxu0 0.0
        %3288 = vmatpush1.msra.mxu0 0.0
        %3289 = vmatprep.subr.mxu0 0.0
        %3290 = vmatpush1.msra.mxu0 0.0
        %3291 = vmatprep.subr.mxu0 0.0
        %3292 = vmatpush1.msra.mxu0 0.0
        %3293 = vmatprep.subr.mxu0 0.0
        %3294 = vmatpush1.msra.mxu0 0.0
        %3295 = vmatprep.subr.mxu0 0.0
        %3296 = vmatpush1.msra.mxu0 0.0
        %3297 = vmatprep.subr.mxu0 0.0
        %3298 = vmatpush1.msra.mxu0 0.0
        %3299 = vmatprep.subr.mxu0 0.0
        %3300 = vmatpush1.msra.mxu0 0.0
        %3301 = vmatprep.subr.mxu0 0.0
        %3302 = vmatpush1.msra.mxu0 0.0
        %3303 = vmatprep.subr.mxu0 0.0
        %3304 = vmatpush1.msra.mxu0 0.0
        %3305 = vmatprep.subr.mxu0 0.0
        %3306 = vmatpush1.msra.mxu0 0.0
        %3307 = vmatprep.subr.mxu0 0.0
        %3308 = vmatpush1.msra.mxu0 0.0
        %3309 = vmatprep.subr.mxu0 0.0
        %3310 = vmatpush1.msra.mxu0 0.0
        %3311 = vmatprep.subr.mxu0 0.0
        %3312 = vmatpush1.msra.mxu0 0.0
        %3313 = vmatprep.subr.mxu0 0.0
        %3314 = vmatpush1.msra.mxu0 0.0
        %3315 = vmatprep.subr.mxu0 0.0
        %3316 = vmatpush1.msra.mxu0 0.0
        %3317 = vmatprep.subr.mxu0 0.0
        %3318 = vmatpush1.msra.mxu0 %v763
        %3319 = vmatprep.subr.mxu0 0.0
        %3320 = vmatpush2.msra.mxu0 0.0
        %3321 = vmatprep.subr.mxu0 0.0
        %3322 = vmatpush2.msra.mxu0 0.0
        %3323 = vmatprep.subr.mxu0 0.0
        %3324 = vmatpush2.msra.mxu0 0.0
        %3325 = vmatprep.subr.mxu0 0.0
        %3326 = vmatpush2.msra.mxu0 0.0
        %3327 = vmatprep.subr.mxu0 0.0
        %3328 = vmatpush2.msra.mxu0 0.0
        %3329 = vmatprep.subr.mxu0 0.0
        %3330 = vmatpush2.msra.mxu0 0.0
        %3331 = vmatprep.subr.mxu0 0.0
        %3332 = vmatpush2.msra.mxu0 0.0
        %3333 = vmatprep.subr.mxu0 0.0
        %3334 = vmatpush2.msra.mxu0 0.0
        %3335 = vmatprep.subr.mxu0 0.0
        %3336 = vmatpush2.msra.mxu0 0.0
        %3337 = vmatprep.subr.mxu0 0.0
        %3338 = vmatpush2.msra.mxu0 0.0
        %3339 = vmatprep.subr.mxu0 0.0
        %3340 = vmatpush2.msra.mxu0 0.0
        %3341 = vmatprep.subr.mxu0 0.0
        %3342 = vmatpush2.msra.mxu0 0.0
        %3343 = vmatprep.subr.mxu0 0.0
        %3344 = vmatpush2.msra.mxu0 0.0
        %3345 = vmatprep.subr.mxu0 0.0
        %3346 = vmatpush2.msra.mxu0 0.0
        %3347 = vmatprep.subr.mxu0 0.0
        %3348 = vmatpush2.msra.mxu0 0.0
        %3349 = vmatprep.subr.mxu0 0.0
        %3350 = vmatpush2.msra.mxu0 0.0
        %3351 = vmatprep.mubr.f32.mxu0 0.0
        %3352 = vmatmul.mubr.f32.gmra.mxu0 %v3285
        %v3353 = vpop.f32.mrf.mxu0
        %v3354 = vadd.f32 0.0, %v3353
        %v3355 = vpop.f32.mrf.mxu0
        %3356 = vdwg.mxu0
        %v3358 = vsel %vm2328, %v2545, 0
        %3360 = vmatprep.subr.mxu0 0.0
        %3361 = vmatpush1.msra.mxu0 0.0
        %3362 = vmatprep.subr.mxu0 0.0
        %3363 = vmatpush1.msra.mxu0 0.0
        %3364 = vmatprep.subr.mxu0 0.0
        %3365 = vmatpush1.msra.mxu0 0.0
        %3366 = vmatprep.subr.mxu0 0.0
        %3367 = vmatpush1.msra.mxu0 0.0
        %3368 = vmatprep.subr.mxu0 0.0
        %3369 = vmatpush1.msra.mxu0 0.0
        %3370 = vmatprep.subr.mxu0 0.0
        %3371 = vmatpush1.msra.mxu0 0.0
        %3372 = vmatprep.subr.mxu0 0.0
        %3373 = vmatpush1.msra.mxu0 0.0
        %3374 = vmatprep.subr.mxu0 0.0
        %3375 = vmatpush1.msra.mxu0 0.0
        %3376 = vmatprep.subr.mxu0 0.0
        %3377 = vmatpush1.msra.mxu0 0.0
        %3378 = vmatprep.subr.mxu0 0.0
        %3379 = vmatpush1.msra.mxu0 0.0
        %3380 = vmatprep.subr.mxu0 0.0
        %3381 = vmatpush1.msra.mxu0 0.0
        %3382 = vmatprep.subr.mxu0 0.0
        %3383 = vmatpush1.msra.mxu0 0.0
        %3384 = vmatprep.subr.mxu0 0.0
        %3385 = vmatpush1.msra.mxu0 0.0
        %3386 = vmatprep.subr.mxu0 0.0
        %3387 = vmatpush1.msra.mxu0 0.0
        %3388 = vmatprep.subr.mxu0 0.0
        %3389 = vmatpush1.msra.mxu0 0.0
        %3390 = vmatprep.subr.mxu0 0.0
        %3391 = vmatpush1.msra.mxu0 %v764
        %3392 = vmatprep.subr.mxu0 0.0
        %3393 = vmatpush2.msra.mxu0 0.0
        %3394 = vmatprep.subr.mxu0 0.0
        %3395 = vmatpush2.msra.mxu0 0.0
        %3396 = vmatprep.subr.mxu0 0.0
        %3397 = vmatpush2.msra.mxu0 0.0
        %3398 = vmatprep.subr.mxu0 0.0
        %3399 = vmatpush2.msra.mxu0 0.0
        %3400 = vmatprep.subr.mxu0 0.0
        %3401 = vmatpush2.msra.mxu0 0.0
        %3402 = vmatprep.subr.mxu0 0.0
        %3403 = vmatpush2.msra.mxu0 0.0
        %3404 = vmatprep.subr.mxu0 0.0
        %3405 = vmatpush2.msra.mxu0 0.0
        %3406 = vmatprep.subr.mxu0 0.0
        %3407 = vmatpush2.msra.mxu0 0.0
        %3408 = vmatprep.subr.mxu0 0.0
        %3409 = vmatpush2.msra.mxu0 0.0
        %3410 = vmatprep.subr.mxu0 0.0
        %3411 = vmatpush2.msra.mxu0 0.0
        %3412 = vmatprep.subr.mxu0 0.0
        %3413 = vmatpush2.msra.mxu0 0.0
        %3414 = vmatprep.subr.mxu0 0.0
        %3415 = vmatpush2.msra.mxu0 0.0
        %3416 = vmatprep.subr.mxu0 0.0
        %3417 = vmatpush2.msra.mxu0 0.0
        %3418 = vmatprep.subr.mxu0 0.0
        %3419 = vmatpush2.msra.mxu0 0.0
        %3420 = vmatprep.subr.mxu0 0.0
        %3421 = vmatpush2.msra.mxu0 0.0
        %3422 = vmatprep.subr.mxu0 0.0
        %3423 = vmatpush2.msra.mxu0 0.0
        %3424 = vmatprep.mubr.f32.mxu0 0.0
        %3425 = vmatmul.mubr.f32.gmra.mxu0 %v3358
        %v3426 = vpop.f32.mrf.mxu0
        %v3427 = vadd.f32 0.0, %v3426
        %v3428 = vpop.f32.mrf.mxu0
        %3429 = vdwg.mxu0
        %v3431 = vsel %vm2328, %v2547, 0
        %3433 = vmatprep.subr.mxu0 0.0
        %3434 = vmatpush1.msra.mxu0 0.0
        %3435 = vmatprep.subr.mxu0 0.0
        %3436 = vmatpush1.msra.mxu0 0.0
        %3437 = vmatprep.subr.mxu0 0.0
        %3438 = vmatpush1.msra.mxu0 0.0
        %3439 = vmatprep.subr.mxu0 0.0
        %3440 = vmatpush1.msra.mxu0 0.0
        %3441 = vmatprep.subr.mxu0 0.0
        %3442 = vmatpush1.msra.mxu0 0.0
        %3443 = vmatprep.subr.mxu0 0.0
        %3444 = vmatpush1.msra.mxu0 0.0
        %3445 = vmatprep.subr.mxu0 0.0
        %3446 = vmatpush1.msra.mxu0 0.0
        %3447 = vmatprep.subr.mxu0 0.0
        %3448 = vmatpush1.msra.mxu0 0.0
        %3449 = vmatprep.subr.mxu0 0.0
        %3450 = vmatpush1.msra.mxu0 0.0
        %3451 = vmatprep.subr.mxu0 0.0
        %3452 = vmatpush1.msra.mxu0 0.0
        %3453 = vmatprep.subr.mxu0 0.0
        %3454 = vmatpush1.msra.mxu0 0.0
        %3455 = vmatprep.subr.mxu0 0.0
        %3456 = vmatpush1.msra.mxu0 0.0
        %3457 = vmatprep.subr.mxu0 0.0
        %3458 = vmatpush1.msra.mxu0 0.0
        %3459 = vmatprep.subr.mxu0 0.0
        %3460 = vmatpush1.msra.mxu0 0.0
        %3461 = vmatprep.subr.mxu0 0.0
        %3462 = vmatpush1.msra.mxu0 0.0
        %3463 = vmatprep.subr.mxu0 0.0
        %3464 = vmatpush1.msra.mxu0 %v765
        %3465 = vmatprep.subr.mxu0 0.0
        %3466 = vmatpush2.msra.mxu0 0.0
        %3467 = vmatprep.subr.mxu0 0.0
        %3468 = vmatpush2.msra.mxu0 0.0
        %3469 = vmatprep.subr.mxu0 0.0
        %3470 = vmatpush2.msra.mxu0 0.0
        %3471 = vmatprep.subr.mxu0 0.0
        %3472 = vmatpush2.msra.mxu0 0.0
        %3473 = vmatprep.subr.mxu0 0.0
        %3474 = vmatpush2.msra.mxu0 0.0
        %3475 = vmatprep.subr.mxu0 0.0
        %3476 = vmatpush2.msra.mxu0 0.0
        %3477 = vmatprep.subr.mxu0 0.0
        %3478 = vmatpush2.msra.mxu0 0.0
        %3479 = vmatprep.subr.mxu0 0.0
        %3480 = vmatpush2.msra.mxu0 0.0
        %3481 = vmatprep.subr.mxu0 0.0
        %3482 = vmatpush2.msra.mxu0 0.0
        %3483 = vmatprep.subr.mxu0 0.0
        %3484 = vmatpush2.msra.mxu0 0.0
        %3485 = vmatprep.subr.mxu0 0.0
        %3486 = vmatpush2.msra.mxu0 0.0
        %3487 = vmatprep.subr.mxu0 0.0
        %3488 = vmatpush2.msra.mxu0 0.0
        %3489 = vmatprep.subr.mxu0 0.0
        %3490 = vmatpush2.msra.mxu0 0.0
        %3491 = vmatprep.subr.mxu0 0.0
        %3492 = vmatpush2.msra.mxu0 0.0
        %3493 = vmatprep.subr.mxu0 0.0
        %3494 = vmatpush2.msra.mxu0 0.0
        %3495 = vmatprep.subr.mxu0 0.0
        %3496 = vmatpush2.msra.mxu0 0.0
        %3497 = vmatprep.mubr.f32.mxu0 0.0
        %3498 = vmatmul.mubr.f32.gmra.mxu0 %v3431
        %v3499 = vpop.f32.mrf.mxu0
        %v3500 = vadd.f32 0.0, %v3499
        %v3501 = vpop.f32.mrf.mxu0
        %3502 = vdwg.mxu0
        %v3504 = vsel %vm2328, %v2549, 0
        %3506 = vmatprep.subr.mxu0 0.0
        %3507 = vmatpush1.msra.mxu0 0.0
        %3508 = vmatprep.subr.mxu0 0.0
        %3509 = vmatpush1.msra.mxu0 0.0
        %3510 = vmatprep.subr.mxu0 0.0
        %3511 = vmatpush1.msra.mxu0 0.0
        %3512 = vmatprep.subr.mxu0 0.0
        %3513 = vmatpush1.msra.mxu0 0.0
        %3514 = vmatprep.subr.mxu0 0.0
        %3515 = vmatpush1.msra.mxu0 0.0
        %3516 = vmatprep.subr.mxu0 0.0
        %3517 = vmatpush1.msra.mxu0 0.0
        %3518 = vmatprep.subr.mxu0 0.0
        %3519 = vmatpush1.msra.mxu0 0.0
        %3520 = vmatprep.subr.mxu0 0.0
        %3521 = vmatpush1.msra.mxu0 0.0
        %3522 = vmatprep.subr.mxu0 0.0
        %3523 = vmatpush1.msra.mxu0 0.0
        %3524 = vmatprep.subr.mxu0 0.0
        %3525 = vmatpush1.msra.mxu0 0.0
        %3526 = vmatprep.subr.mxu0 0.0
        %3527 = vmatpush1.msra.mxu0 0.0
        %3528 = vmatprep.subr.mxu0 0.0
        %3529 = vmatpush1.msra.mxu0 0.0
        %3530 = vmatprep.subr.mxu0 0.0
        %3531 = vmatpush1.msra.mxu0 0.0
        %3532 = vmatprep.subr.mxu0 0.0
        %3533 = vmatpush1.msra.mxu0 0.0
        %3534 = vmatprep.subr.mxu0 0.0
        %3535 = vmatpush1.msra.mxu0 0.0
        %3536 = vmatprep.subr.mxu0 0.0
        %3537 = vmatpush1.msra.mxu0 %v766
        %3538 = vmatprep.subr.mxu0 0.0
        %3539 = vmatpush2.msra.mxu0 0.0
        %3540 = vmatprep.subr.mxu0 0.0
        %3541 = vmatpush2.msra.mxu0 0.0
        %3542 = vmatprep.subr.mxu0 0.0
        %3543 = vmatpush2.msra.mxu0 0.0
        %3544 = vmatprep.subr.mxu0 0.0
        %3545 = vmatpush2.msra.mxu0 0.0
        %3546 = vmatprep.subr.mxu0 0.0
        %3547 = vmatpush2.msra.mxu0 0.0
        %3548 = vmatprep.subr.mxu0 0.0
        %3549 = vmatpush2.msra.mxu0 0.0
        %3550 = vmatprep.subr.mxu0 0.0
        %3551 = vmatpush2.msra.mxu0 0.0
        %3552 = vmatprep.subr.mxu0 0.0
        %3553 = vmatpush2.msra.mxu0 0.0
        %3554 = vmatprep.subr.mxu0 0.0
        %3555 = vmatpush2.msra.mxu0 0.0
        %3556 = vmatprep.subr.mxu0 0.0
        %3557 = vmatpush2.msra.mxu0 0.0
        %3558 = vmatprep.subr.mxu0 0.0
        %3559 = vmatpush2.msra.mxu0 0.0
        %3560 = vmatprep.subr.mxu0 0.0
        %3561 = vmatpush2.msra.mxu0 0.0
        %3562 = vmatprep.subr.mxu0 0.0
        %3563 = vmatpush2.msra.mxu0 0.0
        %3564 = vmatprep.subr.mxu0 0.0
        %3565 = vmatpush2.msra.mxu0 0.0
        %3566 = vmatprep.subr.mxu0 0.0
        %3567 = vmatpush2.msra.mxu0 0.0
        %3568 = vmatprep.subr.mxu0 0.0
        %3569 = vmatpush2.msra.mxu0 0.0
        %3570 = vmatprep.mubr.f32.mxu0 0.0
        %3571 = vmatmul.mubr.f32.gmra.mxu0 %v3504
        %v3572 = vpop.f32.mrf.mxu0
        %v3573 = vadd.f32 0.0, %v3572
        %v3574 = vpop.f32.mrf.mxu0
        %3575 = vdwg.mxu0
        %v3577 = vsel %vm2328, %v2551, 0
        %3579 = vmatprep.subr.mxu0 0.0
        %3580 = vmatpush1.msra.mxu0 0.0
        %3581 = vmatprep.subr.mxu0 0.0
        %3582 = vmatpush1.msra.mxu0 0.0
        %3583 = vmatprep.subr.mxu0 0.0
        %3584 = vmatpush1.msra.mxu0 0.0
        %3585 = vmatprep.subr.mxu0 0.0
        %3586 = vmatpush1.msra.mxu0 0.0
        %3587 = vmatprep.subr.mxu0 0.0
        %3588 = vmatpush1.msra.mxu0 0.0
        %3589 = vmatprep.subr.mxu0 0.0
        %3590 = vmatpush1.msra.mxu0 0.0
        %3591 = vmatprep.subr.mxu0 0.0
        %3592 = vmatpush1.msra.mxu0 0.0
        %3593 = vmatprep.subr.mxu0 0.0
        %3594 = vmatpush1.msra.mxu0 0.0
        %3595 = vmatprep.subr.mxu0 0.0
        %3596 = vmatpush1.msra.mxu0 0.0
        %3597 = vmatprep.subr.mxu0 0.0
        %3598 = vmatpush1.msra.mxu0 0.0
        %3599 = vmatprep.subr.mxu0 0.0
        %3600 = vmatpush1.msra.mxu0 0.0
        %3601 = vmatprep.subr.mxu0 0.0
        %3602 = vmatpush1.msra.mxu0 0.0
        %3603 = vmatprep.subr.mxu0 0.0
        %3604 = vmatpush1.msra.mxu0 0.0
        %3605 = vmatprep.subr.mxu0 0.0
        %3606 = vmatpush1.msra.mxu0 0.0
        %3607 = vmatprep.subr.mxu0 0.0
        %3608 = vmatpush1.msra.mxu0 0.0
        %3609 = vmatprep.subr.mxu0 0.0
        %3610 = vmatpush1.msra.mxu0 %v767
        %3611 = vmatprep.subr.mxu0 0.0
        %3612 = vmatpush2.msra.mxu0 0.0
        %3613 = vmatprep.subr.mxu0 0.0
        %3614 = vmatpush2.msra.mxu0 0.0
        %3615 = vmatprep.subr.mxu0 0.0
        %3616 = vmatpush2.msra.mxu0 0.0
        %3617 = vmatprep.subr.mxu0 0.0
        %3618 = vmatpush2.msra.mxu0 0.0
        %3619 = vmatprep.subr.mxu0 0.0
        %3620 = vmatpush2.msra.mxu0 0.0
        %3621 = vmatprep.subr.mxu0 0.0
        %3622 = vmatpush2.msra.mxu0 0.0
        %3623 = vmatprep.subr.mxu0 0.0
        %3624 = vmatpush2.msra.mxu0 0.0
        %3625 = vmatprep.subr.mxu0 0.0
        %3626 = vmatpush2.msra.mxu0 0.0
        %3627 = vmatprep.subr.mxu0 0.0
        %3628 = vmatpush2.msra.mxu0 0.0
        %3629 = vmatprep.subr.mxu0 0.0
        %3630 = vmatpush2.msra.mxu0 0.0
        %3631 = vmatprep.subr.mxu0 0.0
        %3632 = vmatpush2.msra.mxu0 0.0
        %3633 = vmatprep.subr.mxu0 0.0
        %3634 = vmatpush2.msra.mxu0 0.0
        %3635 = vmatprep.subr.mxu0 0.0
        %3636 = vmatpush2.msra.mxu0 0.0
        %3637 = vmatprep.subr.mxu0 0.0
        %3638 = vmatpush2.msra.mxu0 0.0
        %3639 = vmatprep.subr.mxu0 0.0
        %3640 = vmatpush2.msra.mxu0 0.0
        %3641 = vmatprep.subr.mxu0 0.0
        %3642 = vmatpush2.msra.mxu0 0.0
        %3643 = vmatprep.mubr.f32.mxu0 0.0
        %3644 = vmatmul.mubr.f32.gmra.mxu0 %v3577
        %v3645 = vpop.f32.mrf.mxu0
        %v3646 = vadd.f32 0.0, %v3645
        %v3647 = vpop.f32.mrf.mxu0
        %3648 = vdwg.mxu0
        %v3650 = vsel %vm2328, %v2553, 0
        %3652 = vmatprep.subr.mxu0 0.0
        %3653 = vmatpush1.msra.mxu0 0.0
        %3654 = vmatprep.subr.mxu0 0.0
        %3655 = vmatpush1.msra.mxu0 0.0
        %3656 = vmatprep.subr.mxu0 0.0
        %3657 = vmatpush1.msra.mxu0 0.0
        %3658 = vmatprep.subr.mxu0 0.0
        %3659 = vmatpush1.msra.mxu0 0.0
        %3660 = vmatprep.subr.mxu0 0.0
        %3661 = vmatpush1.msra.mxu0 0.0
        %3662 = vmatprep.subr.mxu0 0.0
        %3663 = vmatpush1.msra.mxu0 0.0
        %3664 = vmatprep.subr.mxu0 0.0
        %3665 = vmatpush1.msra.mxu0 0.0
        %3666 = vmatprep.subr.mxu0 0.0
        %3667 = vmatpush1.msra.mxu0 0.0
        %3668 = vmatprep.subr.mxu0 0.0
        %3669 = vmatpush1.msra.mxu0 0.0
        %3670 = vmatprep.subr.mxu0 0.0
        %3671 = vmatpush1.msra.mxu0 0.0
        %3672 = vmatprep.subr.mxu0 0.0
        %3673 = vmatpush1.msra.mxu0 0.0
        %3674 = vmatprep.subr.mxu0 0.0
        %3675 = vmatpush1.msra.mxu0 0.0
        %3676 = vmatprep.subr.mxu0 0.0
        %3677 = vmatpush1.msra.mxu0 0.0
        %3678 = vmatprep.subr.mxu0 0.0
        %3679 = vmatpush1.msra.mxu0 0.0
        %3680 = vmatprep.subr.mxu0 0.0
        %3681 = vmatpush1.msra.mxu0 0.0
        %3682 = vmatprep.subr.mxu0 0.0
        %3683 = vmatpush1.msra.mxu0 %v768
        %3684 = vmatprep.subr.mxu0 0.0
        %3685 = vmatpush2.msra.mxu0 0.0
        %3686 = vmatprep.subr.mxu0 0.0
        %3687 = vmatpush2.msra.mxu0 0.0
        %3688 = vmatprep.subr.mxu0 0.0
        %3689 = vmatpush2.msra.mxu0 0.0
        %3690 = vmatprep.subr.mxu0 0.0
        %3691 = vmatpush2.msra.mxu0 0.0
        %3692 = vmatprep.subr.mxu0 0.0
        %3693 = vmatpush2.msra.mxu0 0.0
        %3694 = vmatprep.subr.mxu0 0.0
        %3695 = vmatpush2.msra.mxu0 0.0
        %3696 = vmatprep.subr.mxu0 0.0
        %3697 = vmatpush2.msra.mxu0 0.0
        %3698 = vmatprep.subr.mxu0 0.0
        %3699 = vmatpush2.msra.mxu0 0.0
        %3700 = vmatprep.subr.mxu0 0.0
        %3701 = vmatpush2.msra.mxu0 0.0
        %3702 = vmatprep.subr.mxu0 0.0
        %3703 = vmatpush2.msra.mxu0 0.0
        %3704 = vmatprep.subr.mxu0 0.0
        %3705 = vmatpush2.msra.mxu0 0.0
        %3706 = vmatprep.subr.mxu0 0.0
        %3707 = vmatpush2.msra.mxu0 0.0
        %3708 = vmatprep.subr.mxu0 0.0
        %3709 = vmatpush2.msra.mxu0 0.0
        %3710 = vmatprep.subr.mxu0 0.0
        %3711 = vmatpush2.msra.mxu0 0.0
        %3712 = vmatprep.subr.mxu0 0.0
        %3713 = vmatpush2.msra.mxu0 0.0
        %3714 = vmatprep.subr.mxu0 0.0
        %3715 = vmatpush2.msra.mxu0 0.0
        %3716 = vmatprep.mubr.f32.mxu0 0.0
        %3717 = vmatmul.mubr.f32.gmra.mxu0 %v3650
        %v3718 = vpop.f32.mrf.mxu0
        %v3719 = vadd.f32 0.0, %v3718
        %v3720 = vpop.f32.mrf.mxu0
        %3721 = vdwg.mxu0
        %v3722 = vadd.f32 %v619, %v2624
        %v3723 = vadd.f32 %v620, %v2697
        %v3724 = vadd.f32 %v621, %v2770
        %v3725 = vadd.f32 %v622, %v2843
        %v3726 = vadd.f32 %v623, %v2916
        %v3727 = vadd.f32 %v624, %v2989
        %v3728 = vadd.f32 %v625, %v3062
        %v3729 = vadd.f32 %v626, %v3135
        %v3730 = vld [vmem:[#allocation11] sm:$0xff]
        %v3731 = vld [vmem:[#allocation11 + $0x8] sm:$0xff]
        %v3732 = vld [vmem:[#allocation11 + $0x10] sm:$0xff]
        %v3733 = vld [vmem:[#allocation11 + $0x18] sm:$0xff]
        %v3735 = vsel %vm631, %v3722, 0
        %v3738 = vsel %vm631, %v3723, 0
        %v3741 = vsel %vm631, %v3724, 0
        %v3744 = vsel %vm631, %v3725, 0
        %v3747 = vsel %vm631, %v3726, 0
        %v3750 = vsel %vm631, %v3727, 0
        %v3753 = vsel %vm631, %v3728, 0
        %v3756 = vsel %vm631, %v3729, 0
        %3758 = vmatprep.subr.mxu0 0.0
        %3759 = vmatpush1.msra.mxu0 0.0
        %3760 = vmatprep.subr.mxu0 0.0
        %3761 = vmatpush1.msra.mxu0 0.0
        %3762 = vmatprep.subr.mxu0 0.0
        %3763 = vmatpush1.msra.mxu0 0.0
        %3764 = vmatprep.subr.mxu0 0.0
        %3765 = vmatpush1.msra.mxu0 0.0
        %3766 = vmatprep.subr.mxu0 0.0
        %3767 = vmatpush1.msra.mxu0 0.0
        %3768 = vmatprep.subr.mxu0 0.0
        %3769 = vmatpush1.msra.mxu0 0.0
        %3770 = vmatprep.subr.mxu0 0.0
        %3771 = vmatpush1.msra.mxu0 0.0
        %3772 = vmatprep.subr.mxu0 0.0
        %3773 = vmatpush1.msra.mxu0 0.0
        %3774 = vmatprep.subr.mxu0 0.0
        %3775 = vmatpush1.msra.mxu0 0.0
        %3776 = vmatprep.subr.mxu0 0.0
        %3777 = vmatpush1.msra.mxu0 0.0
        %3778 = vmatprep.subr.mxu0 0.0
        %3779 = vmatpush1.msra.mxu0 0.0
        %3780 = vmatprep.subr.mxu0 0.0
        %3781 = vmatpush1.msra.mxu0 0.0
        %3782 = vmatprep.subr.mxu0 0.0
        %3783 = vmatpush1.msra.mxu0 %v3733
        %3784 = vmatprep.subr.mxu0 0.0
        %3785 = vmatpush1.msra.mxu0 %v3732
        %3786 = vmatprep.subr.mxu0 0.0
        %3787 = vmatpush1.msra.mxu0 %v3731
        %3788 = vmatprep.subr.mxu0 0.0
        %3789 = vmatpush1.msra.mxu0 %v3730
        %3790 = vmatprep.subr.mxu0 0.0
        %3791 = vmatpush2.msra.mxu0 0.0
        %3792 = vmatprep.subr.mxu0 0.0
        %3793 = vmatpush2.msra.mxu0 0.0
        %3794 = vmatprep.subr.mxu0 0.0
        %3795 = vmatpush2.msra.mxu0 0.0
        %3796 = vmatprep.subr.mxu0 0.0
        %3797 = vmatpush2.msra.mxu0 0.0
        %3798 = vmatprep.subr.mxu0 0.0
        %3799 = vmatpush2.msra.mxu0 0.0
        %3800 = vmatprep.subr.mxu0 0.0
        %3801 = vmatpush2.msra.mxu0 0.0
        %3802 = vmatprep.subr.mxu0 0.0
        %3803 = vmatpush2.msra.mxu0 0.0
        %3804 = vmatprep.subr.mxu0 0.0
        %3805 = vmatpush2.msra.mxu0 0.0
        %3806 = vmatprep.subr.mxu0 0.0
        %3807 = vmatpush2.msra.mxu0 0.0
        %3808 = vmatprep.subr.mxu0 0.0
        %3809 = vmatpush2.msra.mxu0 0.0
        %3810 = vmatprep.subr.mxu0 0.0
        %3811 = vmatpush2.msra.mxu0 0.0
        %3812 = vmatprep.subr.mxu0 0.0
        %3813 = vmatpush2.msra.mxu0 0.0
        %3814 = vmatprep.subr.mxu0 0.0
        %3815 = vmatpush2.msra.mxu0 0.0
        %3816 = vmatprep.subr.mxu0 0.0
        %3817 = vmatpush2.msra.mxu0 0.0
        %3818 = vmatprep.subr.mxu0 0.0
        %3819 = vmatpush2.msra.mxu0 0.0
        %3820 = vmatprep.subr.mxu0 0.0
        %3821 = vmatpush2.msra.mxu0 0.0
        %3822 = vmatprep.mubr.f32.mxu0 0.0
        %3823 = vmatmul.mubr.f32.gmra.mxu0 %v3735
        %v3824 = vpop.f32.mrf.mxu0
        %v3825 = vadd.f32 0.0, %v3824
        %v3826 = vpop.f32.mrf.mxu0
        %3827 = vmatprep.mubr.f32.mxu0 0.0
        %3828 = vmatmul.mubr.f32.gmra.mxu0 %v3738
        %v3829 = vpop.f32.mrf.mxu0
        %v3830 = vadd.f32 0.0, %v3829
        %v3831 = vpop.f32.mrf.mxu0
        %3832 = vmatprep.mubr.f32.mxu0 0.0
        %3833 = vmatmul.mubr.f32.gmra.mxu0 %v3741
        %v3834 = vpop.f32.mrf.mxu0
        %v3835 = vadd.f32 0.0, %v3834
        %v3836 = vpop.f32.mrf.mxu0
        %3837 = vmatprep.mubr.f32.mxu0 0.0
        %3838 = vmatmul.mubr.f32.gmra.mxu0 %v3744
        %v3839 = vpop.f32.mrf.mxu0
        %v3840 = vadd.f32 0.0, %v3839
        %v3841 = vpop.f32.mrf.mxu0
        %3842 = vmatprep.mubr.f32.mxu0 0.0
        %3843 = vmatmul.mubr.f32.gmra.mxu0 %v3747
        %v3844 = vpop.f32.mrf.mxu0
        %v3845 = vadd.f32 0.0, %v3844
        %v3846 = vpop.f32.mrf.mxu0
        %3847 = vmatprep.mubr.f32.mxu0 0.0
        %3848 = vmatmul.mubr.f32.gmra.mxu0 %v3750
        %v3849 = vpop.f32.mrf.mxu0
        %v3850 = vadd.f32 0.0, %v3849
        %v3851 = vpop.f32.mrf.mxu0
        %3852 = vmatprep.mubr.f32.mxu0 0.0
        %3853 = vmatmul.mubr.f32.gmra.mxu0 %v3753
        %v3854 = vpop.f32.mrf.mxu0
        %v3855 = vadd.f32 0.0, %v3854
        %v3856 = vpop.f32.mrf.mxu0
        %3857 = vmatprep.mubr.f32.mxu0 0.0
        %3858 = vmatmul.mubr.f32.gmra.mxu0 %v3756
        %v3859 = vpop.f32.mrf.mxu0
        %v3860 = vadd.f32 0.0, %v3859
        %v3861 = vpop.f32.mrf.mxu0
        %3862 = vdwg.mxu0
        %v3863 = vmax.f32 %v3825, 0.0
        %v3864 = vmax.f32 %v3830, 0.0
        %v3865 = vmax.f32 %v3835, 0.0
        %v3866 = vmax.f32 %v3840, 0.0
        %v3867 = vmax.f32 %v3845, 0.0
        %v3868 = vmax.f32 %v3850, 0.0
        %v3869 = vmax.f32 %v3855, 0.0
        %v3870 = vmax.f32 %v3860, 0.0
        %v3871 = vadd.f32 %v611, %v3208
        %v3872 = vadd.f32 %v612, %v3281
        %v3873 = vadd.f32 %v613, %v3354
        %v3874 = vadd.f32 %v614, %v3427
        %v3875 = vadd.f32 %v615, %v3500
        %v3876 = vadd.f32 %v616, %v3573
        %v3877 = vadd.f32 %v617, %v3646
        %v3878 = vadd.f32 %v618, %v3719
        %v3879 = vld [vmem:[#allocation15] sm:$0xff]
        %v3880 = vld [vmem:[#allocation15 + $0x8] sm:$0xff]
        %v3881 = vld [vmem:[#allocation15 + $0x10] sm:$0xff]
        %v3882 = vld [vmem:[#allocation15 + $0x18] sm:$0xff]
        %v3884 = vsel %vm631, %v3871, 0
        %v3887 = vsel %vm631, %v3872, 0
        %v3890 = vsel %vm631, %v3873, 0
        %v3893 = vsel %vm631, %v3874, 0
        %v3896 = vsel %vm631, %v3875, 0
        %v3899 = vsel %vm631, %v3876, 0
        %v3902 = vsel %vm631, %v3877, 0
        %v3905 = vsel %vm631, %v3878, 0
        %3907 = vmatprep.subr.mxu0 0.0
        %3908 = vmatpush1.msra.mxu0 0.0
        %3909 = vmatprep.subr.mxu0 0.0
        %3910 = vmatpush1.msra.mxu0 0.0
        %3911 = vmatprep.subr.mxu0 0.0
        %3912 = vmatpush1.msra.mxu0 0.0
        %3913 = vmatprep.subr.mxu0 0.0
        %3914 = vmatpush1.msra.mxu0 0.0
        %3915 = vmatprep.subr.mxu0 0.0
        %3916 = vmatpush1.msra.mxu0 0.0
        %3917 = vmatprep.subr.mxu0 0.0
        %3918 = vmatpush1.msra.mxu0 0.0
        %3919 = vmatprep.subr.mxu0 0.0
        %3920 = vmatpush1.msra.mxu0 0.0
        %3921 = vmatprep.subr.mxu0 0.0
        %3922 = vmatpush1.msra.mxu0 0.0
        %3923 = vmatprep.subr.mxu0 0.0
        %3924 = vmatpush1.msra.mxu0 0.0
        %3925 = vmatprep.subr.mxu0 0.0
        %3926 = vmatpush1.msra.mxu0 0.0
        %3927 = vmatprep.subr.mxu0 0.0
        %3928 = vmatpush1.msra.mxu0 0.0
        %3929 = vmatprep.subr.mxu0 0.0
        %3930 = vmatpush1.msra.mxu0 0.0
        %3931 = vmatprep.subr.mxu0 0.0
        %3932 = vmatpush1.msra.mxu0 %v3882
        %3933 = vmatprep.subr.mxu0 0.0
        %3934 = vmatpush1.msra.mxu0 %v3881
        %3935 = vmatprep.subr.mxu0 0.0
        %3936 = vmatpush1.msra.mxu0 %v3880
        %3937 = vmatprep.subr.mxu0 0.0
        %3938 = vmatpush1.msra.mxu0 %v3879
        %3939 = vmatprep.subr.mxu0 0.0
        %3940 = vmatpush2.msra.mxu0 0.0
        %3941 = vmatprep.subr.mxu0 0.0
        %3942 = vmatpush2.msra.mxu0 0.0
        %3943 = vmatprep.subr.mxu0 0.0
        %3944 = vmatpush2.msra.mxu0 0.0
        %3945 = vmatprep.subr.mxu0 0.0
        %3946 = vmatpush2.msra.mxu0 0.0
        %3947 = vmatprep.subr.mxu0 0.0
        %3948 = vmatpush2.msra.mxu0 0.0
        %3949 = vmatprep.subr.mxu0 0.0
        %3950 = vmatpush2.msra.mxu0 0.0
        %3951 = vmatprep.subr.mxu0 0.0
        %3952 = vmatpush2.msra.mxu0 0.0
        %3953 = vmatprep.subr.mxu0 0.0
        %3954 = vmatpush2.msra.mxu0 0.0
        %3955 = vmatprep.subr.mxu0 0.0
        %3956 = vmatpush2.msra.mxu0 0.0
        %3957 = vmatprep.subr.mxu0 0.0
        %3958 = vmatpush2.msra.mxu0 0.0
        %3959 = vmatprep.subr.mxu0 0.0
        %3960 = vmatpush2.msra.mxu0 0.0
        %3961 = vmatprep.subr.mxu0 0.0
        %3962 = vmatpush2.msra.mxu0 0.0
        %3963 = vmatprep.subr.mxu0 0.0
        %3964 = vmatpush2.msra.mxu0 0.0
        %3965 = vmatprep.subr.mxu0 0.0
        %3966 = vmatpush2.msra.mxu0 0.0
        %3967 = vmatprep.subr.mxu0 0.0
        %3968 = vmatpush2.msra.mxu0 0.0
        %3969 = vmatprep.subr.mxu0 0.0
        %3970 = vmatpush2.msra.mxu0 0.0
        %3971 = vmatprep.mubr.f32.mxu0 0.0
        %3972 = vmatmul.mubr.f32.gmra.mxu0 %v3884
        %v3973 = vpop.f32.mrf.mxu0
        %v3974 = vadd.f32 0.0, %v3973
        %v3975 = vpop.f32.mrf.mxu0
        %3976 = vmatprep.mubr.f32.mxu0 0.0
        %3977 = vmatmul.mubr.f32.gmra.mxu0 %v3887
        %v3978 = vpop.f32.mrf.mxu0
        %v3979 = vadd.f32 0.0, %v3978
        %v3980 = vpop.f32.mrf.mxu0
        %3981 = vmatprep.mubr.f32.mxu0 0.0
        %3982 = vmatmul.mubr.f32.gmra.mxu0 %v3890
        %v3983 = vpop.f32.mrf.mxu0
        %v3984 = vadd.f32 0.0, %v3983
        %v3985 = vpop.f32.mrf.mxu0
        %3986 = vmatprep.mubr.f32.mxu0 0.0
        %3987 = vmatmul.mubr.f32.gmra.mxu0 %v3893
        %v3988 = vpop.f32.mrf.mxu0
        %v3989 = vadd.f32 0.0, %v3988
        %v3990 = vpop.f32.mrf.mxu0
        %3991 = vmatprep.mubr.f32.mxu0 0.0
        %3992 = vmatmul.mubr.f32.gmra.mxu0 %v3896
        %v3993 = vpop.f32.mrf.mxu0
        %v3994 = vadd.f32 0.0, %v3993
        %v3995 = vpop.f32.mrf.mxu0
        %3996 = vmatprep.mubr.f32.mxu0 0.0
        %3997 = vmatmul.mubr.f32.gmra.mxu0 %v3899
        %v3998 = vpop.f32.mrf.mxu0
        %v3999 = vadd.f32 0.0, %v3998
        %v4000 = vpop.f32.mrf.mxu0
        %4001 = vmatprep.mubr.f32.mxu0 0.0
        %4002 = vmatmul.mubr.f32.gmra.mxu0 %v3902
        %v4003 = vpop.f32.mrf.mxu0
        %v4004 = vadd.f32 0.0, %v4003
        %v4005 = vpop.f32.mrf.mxu0
        %4006 = vmatprep.mubr.f32.mxu0 0.0
        %4007 = vmatmul.mubr.f32.gmra.mxu0 %v3905
        %v4008 = vpop.f32.mrf.mxu0
        %v4009 = vadd.f32 0.0, %v4008
        %v4010 = vpop.f32.mrf.mxu0
        %4011 = vdwg.mxu0
        %v4012 = vmax.f32 %v3974, 0.0
        %v4013 = vmax.f32 %v3979, 0.0
        %v4014 = vmax.f32 %v3984, 0.0
        %v4015 = vmax.f32 %v3989, 0.0
        %v4016 = vmax.f32 %v3994, 0.0
        %v4017 = vmax.f32 %v3999, 0.0
        %v4018 = vmax.f32 %v4004, 0.0
        %v4019 = vmax.f32 %v4009, 0.0
        %v4020 = vld [vmem:[%s8] sm:$0x1]
        %v4021 = vld [vmem:[%s9] sm:$0x1]
        %v4022 = vsel %vm631, %v3863, 0.0
        %4023 = vadd.xlane.f32.xlu0 %v4022
        %v4024 = vpop.xlane.xlu0 %4023
        %v4025 = vsel %vm631, %v3864, 0.0
        %4026 = vadd.xlane.f32.xlu0 %v4025
        %v4027 = vpop.xlane.xlu0 %4026
        %v4028 = vsel %vm631, %v3865, 0.0
        %4029 = vadd.xlane.f32.xlu0 %v4028
        %v4030 = vpop.xlane.xlu0 %4029
        %v4031 = vsel %vm631, %v3866, 0.0
        %4032 = vadd.xlane.f32.xlu0 %v4031
        %v4033 = vpop.xlane.xlu0 %4032
        %v4034 = vsel %vm631, %v3867, 0.0
        %4035 = vadd.xlane.f32.xlu0 %v4034
        %v4036 = vpop.xlane.xlu0 %4035
        %v4037 = vsel %vm631, %v3868, 0.0
        %4038 = vadd.xlane.f32.xlu0 %v4037
        %v4039 = vpop.xlane.xlu0 %4038
        %v4040 = vsel %vm631, %v3869, 0.0
        %4041 = vadd.xlane.f32.xlu0 %v4040
        %v4042 = vpop.xlane.xlu0 %4041
        %v4043 = vsel %vm631, %v3870, 0.0
        %4044 = vadd.xlane.f32.xlu0 %v4043
        %v4045 = vpop.xlane.xlu0 %4044
        %v4046 = vrcp.pop 32.0
        %v4047 = vmul.f32 %v4024, %v4046
        %v4048 = vmul.f32 %v4027, %v4046
        %v4049 = vmul.f32 %v4030, %v4046
        %v4050 = vmul.f32 %v4033, %v4046
        %v4051 = vmul.f32 %v4036, %v4046
        %v4052 = vmul.f32 %v4039, %v4046
        %v4053 = vmul.f32 %v4042, %v4046
        %v4054 = vmul.f32 %v4045, %v4046
        %v4055 = vmul.f32 %v3863, %v3863
        %v4056 = vmul.f32 %v3864, %v3864
        %v4057 = vmul.f32 %v3865, %v3865
        %v4058 = vmul.f32 %v3866, %v3866
        %v4059 = vmul.f32 %v3867, %v3867
        %v4060 = vmul.f32 %v3868, %v3868
        %v4061 = vmul.f32 %v3869, %v3869
        %v4062 = vmul.f32 %v3870, %v3870
        %v4063 = vsel %vm631, %v4055, 0.0
        %4064 = vadd.xlane.f32.xlu0 %v4063
        %v4065 = vpop.xlane.xlu0 %4064
        %v4066 = vsel %vm631, %v4056, 0.0
        %4067 = vadd.xlane.f32.xlu0 %v4066
        %v4068 = vpop.xlane.xlu0 %4067
        %v4069 = vsel %vm631, %v4057, 0.0
        %4070 = vadd.xlane.f32.xlu0 %v4069
        %v4071 = vpop.xlane.xlu0 %4070
        %v4072 = vsel %vm631, %v4058, 0.0
        %4073 = vadd.xlane.f32.xlu0 %v4072
        %v4074 = vpop.xlane.xlu0 %4073
        %v4075 = vsel %vm631, %v4059, 0.0
        %4076 = vadd.xlane.f32.xlu0 %v4075
        %v4077 = vpop.xlane.xlu0 %4076
        %v4078 = vsel %vm631, %v4060, 0.0
        %4079 = vadd.xlane.f32.xlu0 %v4078
        %v4080 = vpop.xlane.xlu0 %4079
        %v4081 = vsel %vm631, %v4061, 0.0
        %4082 = vadd.xlane.f32.xlu0 %v4081
        %v4083 = vpop.xlane.xlu0 %4082
        %v4084 = vsel %vm631, %v4062, 0.0
        %4085 = vadd.xlane.f32.xlu0 %v4084
        %v4086 = vpop.xlane.xlu0 %4085
        %v4087 = vmul.f32 %v4065, %v4046
        %v4088 = vmul.f32 %v4068, %v4046
        %v4089 = vmul.f32 %v4071, %v4046
        %v4090 = vmul.f32 %v4074, %v4046
        %v4091 = vmul.f32 %v4077, %v4046
        %v4092 = vmul.f32 %v4080, %v4046
        %v4093 = vmul.f32 %v4083, %v4046
        %v4094 = vmul.f32 %v4086, %v4046
        %v4095 = vmul.f32 %v4047, %v4047
        %v4096 = vmul.f32 %v4048, %v4048
        %v4097 = vmul.f32 %v4049, %v4049
        %v4098 = vmul.f32 %v4050, %v4050
        %v4099 = vmul.f32 %v4051, %v4051
        %v4100 = vmul.f32 %v4052, %v4052
        %v4101 = vmul.f32 %v4053, %v4053
        %v4102 = vmul.f32 %v4054, %v4054
        %v4103 = vsub.f32 %v4087, %v4095
        %v4104 = vsub.f32 %v4088, %v4096
        %v4105 = vsub.f32 %v4089, %v4097
        %v4106 = vsub.f32 %v4090, %v4098
        %v4107 = vsub.f32 %v4091, %v4099
        %v4108 = vsub.f32 %v4092, %v4100
        %v4109 = vsub.f32 %v4093, %v4101
        %v4110 = vsub.f32 %v4094, %v4102
        %v4111 = vsub.f32 %v3863, %v4047
        %v4112 = vsub.f32 %v3864, %v4048
        %v4113 = vsub.f32 %v3865, %v4049
        %v4114 = vsub.f32 %v3866, %v4050
        %v4115 = vsub.f32 %v3867, %v4051
        %v4116 = vsub.f32 %v3868, %v4052
        %v4117 = vsub.f32 %v3869, %v4053
        %v4118 = vsub.f32 %v3870, %v4054
        %v4119 = vadd.f32 %v4103, 1e-06
        %v4120 = vadd.f32 %v4104, 1e-06
        %v4121 = vadd.f32 %v4105, 1e-06
        %v4122 = vadd.f32 %v4106, 1e-06
        %v4123 = vadd.f32 %v4107, 1e-06
        %v4124 = vadd.f32 %v4108, 1e-06
        %v4125 = vadd.f32 %v4109, 1e-06
        %v4126 = vadd.f32 %v4110, 1e-06
        %v4127 = vrsqrt.pop %v4119
        %v4128 = vrsqrt.pop %v4120
        %v4129 = vrsqrt.pop %v4121
        %v4130 = vrsqrt.pop %v4122
        %v4131 = vrsqrt.pop %v4123
        %v4132 = vrsqrt.pop %v4124
        %v4133 = vrsqrt.pop %v4125
        %v4134 = vrsqrt.pop %v4126
        %v4135 = vmul.f32 %v4111, %v4127
        %v4136 = vmul.f32 %v4112, %v4128
        %v4137 = vmul.f32 %v4113, %v4129
        %v4138 = vmul.f32 %v4114, %v4130
        %v4139 = vmul.f32 %v4115, %v4131
        %v4140 = vmul.f32 %v4116, %v4132
        %v4141 = vmul.f32 %v4117, %v4133
        %v4142 = vmul.f32 %v4118, %v4134
        %v4144 = vlaneseq
        %v4145 = vshrl.u32 %v4144, 7
        %v4146 = vsub.s32 0, %v4145
        %v4147 = vrot.slane %v4020, %v4146
        %v4149 = vmul.f32 %v4135, %v4147
        %v4150 = vmul.f32 %v4136, %v4147
        %v4151 = vmul.f32 %v4137, %v4147
        %v4152 = vmul.f32 %v4138, %v4147
        %v4153 = vmul.f32 %v4139, %v4147
        %v4154 = vmul.f32 %v4140, %v4147
        %v4155 = vmul.f32 %v4141, %v4147
        %v4156 = vmul.f32 %v4142, %v4147
        %v4158 = vlaneseq
        %v4159 = vshrl.u32 %v4158, 7
        %v4160 = vsub.s32 0, %v4159
        %v4161 = vrot.slane %v4021, %v4160
        %v4163 = vadd.f32 %v4149, %v4161
        %v4164 = vadd.f32 %v4150, %v4161
        %v4165 = vadd.f32 %v4151, %v4161
        %v4166 = vadd.f32 %v4152, %v4161
        %v4167 = vadd.f32 %v4153, %v4161
        %v4168 = vadd.f32 %v4154, %v4161
        %v4169 = vadd.f32 %v4155, %v4161
        %v4170 = vadd.f32 %v4156, %v4161
        %v4171 = vsel %vm631, %v4012, 0.0
        %4172 = vadd.xlane.f32.xlu0 %v4171
        %v4173 = vpop.xlane.xlu0 %4172
        %v4174 = vsel %vm631, %v4013, 0.0
        %4175 = vadd.xlane.f32.xlu0 %v4174
        %v4176 = vpop.xlane.xlu0 %4175
        %v4177 = vsel %vm631, %v4014, 0.0
        %4178 = vadd.xlane.f32.xlu0 %v4177
        %v4179 = vpop.xlane.xlu0 %4178
        %v4180 = vsel %vm631, %v4015, 0.0
        %4181 = vadd.xlane.f32.xlu0 %v4180
        %v4182 = vpop.xlane.xlu0 %4181
        %v4183 = vsel %vm631, %v4016, 0.0
        %4184 = vadd.xlane.f32.xlu0 %v4183
        %v4185 = vpop.xlane.xlu0 %4184
        %v4186 = vsel %vm631, %v4017, 0.0
        %4187 = vadd.xlane.f32.xlu0 %v4186
        %v4188 = vpop.xlane.xlu0 %4187
        %v4189 = vsel %vm631, %v4018, 0.0
        %4190 = vadd.xlane.f32.xlu0 %v4189
        %v4191 = vpop.xlane.xlu0 %4190
        %v4192 = vsel %vm631, %v4019, 0.0
        %4193 = vadd.xlane.f32.xlu0 %v4192
        %v4194 = vpop.xlane.xlu0 %4193
        %v4195 = vmul.f32 %v4173, %v4046
        %v4196 = vmul.f32 %v4176, %v4046
        %v4197 = vmul.f32 %v4179, %v4046
        %v4198 = vmul.f32 %v4182, %v4046
        %v4199 = vmul.f32 %v4185, %v4046
        %v4200 = vmul.f32 %v4188, %v4046
        %v4201 = vmul.f32 %v4191, %v4046
        %v4202 = vmul.f32 %v4194, %v4046
        %v4203 = vmul.f32 %v4012, %v4012
        %v4204 = vmul.f32 %v4013, %v4013
        %v4205 = vmul.f32 %v4014, %v4014
        %v4206 = vmul.f32 %v4015, %v4015
        %v4207 = vmul.f32 %v4016, %v4016
        %v4208 = vmul.f32 %v4017, %v4017
        %v4209 = vmul.f32 %v4018, %v4018
        %v4210 = vmul.f32 %v4019, %v4019
        %v4211 = vsel %vm631, %v4203, 0.0
        %4212 = vadd.xlane.f32.xlu0 %v4211
        %v4213 = vpop.xlane.xlu0 %4212
        %v4214 = vsel %vm631, %v4204, 0.0
        %4215 = vadd.xlane.f32.xlu0 %v4214
        %v4216 = vpop.xlane.xlu0 %4215
        %v4217 = vsel %vm631, %v4205, 0.0
        %4218 = vadd.xlane.f32.xlu0 %v4217
        %v4219 = vpop.xlane.xlu0 %4218
        %v4220 = vsel %vm631, %v4206, 0.0
        %4221 = vadd.xlane.f32.xlu0 %v4220
        %v4222 = vpop.xlane.xlu0 %4221
        %v4223 = vsel %vm631, %v4207, 0.0
        %4224 = vadd.xlane.f32.xlu0 %v4223
        %v4225 = vpop.xlane.xlu0 %4224
        %v4226 = vsel %vm631, %v4208, 0.0
        %4227 = vadd.xlane.f32.xlu0 %v4226
        %v4228 = vpop.xlane.xlu0 %4227
        %v4229 = vsel %vm631, %v4209, 0.0
        %4230 = vadd.xlane.f32.xlu0 %v4229
        %v4231 = vpop.xlane.xlu0 %4230
        %v4232 = vsel %vm631, %v4210, 0.0
        %4233 = vadd.xlane.f32.xlu0 %v4232
        %v4234 = vpop.xlane.xlu0 %4233
        %v4235 = vmul.f32 %v4213, %v4046
        %v4236 = vmul.f32 %v4216, %v4046
        %v4237 = vmul.f32 %v4219, %v4046
        %v4238 = vmul.f32 %v4222, %v4046
        %v4239 = vmul.f32 %v4225, %v4046
        %v4240 = vmul.f32 %v4228, %v4046
        %v4241 = vmul.f32 %v4231, %v4046
        %v4242 = vmul.f32 %v4234, %v4046
        %v4243 = vmul.f32 %v4195, %v4195
        %v4244 = vmul.f32 %v4196, %v4196
        %v4245 = vmul.f32 %v4197, %v4197
        %v4246 = vmul.f32 %v4198, %v4198
        %v4247 = vmul.f32 %v4199, %v4199
        %v4248 = vmul.f32 %v4200, %v4200
        %v4249 = vmul.f32 %v4201, %v4201
        %v4250 = vmul.f32 %v4202, %v4202
        %v4251 = vsub.f32 %v4235, %v4243
        %v4252 = vsub.f32 %v4236, %v4244
        %v4253 = vsub.f32 %v4237, %v4245
        %v4254 = vsub.f32 %v4238, %v4246
        %v4255 = vsub.f32 %v4239, %v4247
        %v4256 = vsub.f32 %v4240, %v4248
        %v4257 = vsub.f32 %v4241, %v4249
        %v4258 = vsub.f32 %v4242, %v4250
        %v4259 = vsub.f32 %v4012, %v4195
        %v4260 = vsub.f32 %v4013, %v4196
        %v4261 = vsub.f32 %v4014, %v4197
        %v4262 = vsub.f32 %v4015, %v4198
        %v4263 = vsub.f32 %v4016, %v4199
        %v4264 = vsub.f32 %v4017, %v4200
        %v4265 = vsub.f32 %v4018, %v4201
        %v4266 = vsub.f32 %v4019, %v4202
        %v4267 = vadd.f32 %v4251, 1e-06
        %v4268 = vadd.f32 %v4252, 1e-06
        %v4269 = vadd.f32 %v4253, 1e-06
        %v4270 = vadd.f32 %v4254, 1e-06
        %v4271 = vadd.f32 %v4255, 1e-06
        %v4272 = vadd.f32 %v4256, 1e-06
        %v4273 = vadd.f32 %v4257, 1e-06
        %v4274 = vadd.f32 %v4258, 1e-06
        %v4275 = vrsqrt.pop %v4267
        %v4276 = vrsqrt.pop %v4268
        %v4277 = vrsqrt.pop %v4269
        %v4278 = vrsqrt.pop %v4270
        %v4279 = vrsqrt.pop %v4271
        %v4280 = vrsqrt.pop %v4272
        %v4281 = vrsqrt.pop %v4273
        %v4282 = vrsqrt.pop %v4274
        %v4283 = vmul.f32 %v4259, %v4275
        %v4284 = vmul.f32 %v4260, %v4276
        %v4285 = vmul.f32 %v4261, %v4277
        %v4286 = vmul.f32 %v4262, %v4278
        %v4287 = vmul.f32 %v4263, %v4279
        %v4288 = vmul.f32 %v4264, %v4280
        %v4289 = vmul.f32 %v4265, %v4281
        %v4290 = vmul.f32 %v4266, %v4282
        %v4291 = vmul.f32 %v4283, %v4147
        %v4292 = vmul.f32 %v4284, %v4147
        %v4293 = vmul.f32 %v4285, %v4147
        %v4294 = vmul.f32 %v4286, %v4147
        %v4295 = vmul.f32 %v4287, %v4147
        %v4296 = vmul.f32 %v4288, %v4147
        %v4297 = vmul.f32 %v4289, %v4147
        %v4298 = vmul.f32 %v4290, %v4147
        %v4299 = vadd.f32 %v4291, %v4161
        %v4300 = vadd.f32 %v4292, %v4161
        %v4301 = vadd.f32 %v4293, %v4161
        %v4302 = vadd.f32 %v4294, %v4161
        %v4303 = vadd.f32 %v4295, %v4161
        %v4304 = vadd.f32 %v4296, %v4161
        %v4305 = vadd.f32 %v4297, %v4161
        %v4306 = vadd.f32 %v4298, %v4161
        %4307 = vst.msk [vmem:[%s597] sm:$0xff] %vm631, %v4163
        %4308 = vst.msk [vmem:[%s597 + $0x8] sm:$0xff] %vm631, %v4164
        %4309 = vst.msk [vmem:[%s597 + $0x10] sm:$0xff] %vm631, %v4165
        %4310 = vst.msk [vmem:[%s597 + $0x18] sm:$0xff] %vm631, %v4166
        %4311 = vst.msk [vmem:[%s597 + $0x20] sm:$0xff] %vm631, %v4167
        %4312 = vst.msk [vmem:[%s597 + $0x28] sm:$0xff] %vm631, %v4168
        %4313 = vst.msk [vmem:[%s597 + $0x30] sm:$0xff] %vm631, %v4169
        %4314 = vst.msk [vmem:[%s597 + $0x38] sm:$0xff] %vm631, %v4170
        %4315 = vst.msk [vmem:[%s604] sm:$0xff] %vm631, %v4299
        %4316 = vst.msk [vmem:[%s604 + $0x8] sm:$0xff] %vm631, %v4300
        %4317 = vst.msk [vmem:[%s604 + $0x10] sm:$0xff] %vm631, %v4301
        %4318 = vst.msk [vmem:[%s604 + $0x18] sm:$0xff] %vm631, %v4302
        %4319 = vst.msk [vmem:[%s604 + $0x20] sm:$0xff] %vm631, %v4303
        %4320 = vst.msk [vmem:[%s604 + $0x28] sm:$0xff] %vm631, %v4304
        %4321 = vst.msk [vmem:[%s604 + $0x30] sm:$0xff] %vm631, %v4305
        %4322 = vst.msk [vmem:[%s604 + $0x38] sm:$0xff] %vm631, %v4306
        %v4323 = vadd.f32 %v4163, %v4299
        %v4324 = vadd.f32 %v4164, %v4300
        %v4325 = vadd.f32 %v4165, %v4301
        %v4326 = vadd.f32 %v4166, %v4302
        %v4327 = vadd.f32 %v4167, %v4303
        %v4328 = vadd.f32 %v4168, %v4304
        %v4329 = vadd.f32 %v4169, %v4305
        %v4330 = vadd.f32 %v4170, %v4306
        %v4331 = vmul.f32 %v4323, 0.5
        %v4332 = vmul.f32 %v4324, 0.5
        %v4333 = vmul.f32 %v4325, 0.5
        %v4334 = vmul.f32 %v4326, 0.5
        %v4335 = vmul.f32 %v4327, 0.5
        %v4336 = vmul.f32 %v4328, 0.5
        %v4337 = vmul.f32 %v4329, 0.5
        %v4338 = vmul.f32 %v4330, 0.5
        %4339 = vst.msk [vmem:[%s590] sm:$0xff] %vm631, %v4331
        %4340 = vst.msk [vmem:[%s590 + $0x8] sm:$0xff] %vm631, %v4332
        %4341 = vst.msk [vmem:[%s590 + $0x10] sm:$0xff] %vm631, %v4333
        %4342 = vst.msk [vmem:[%s590 + $0x18] sm:$0xff] %vm631, %v4334
        %4343 = vst.msk [vmem:[%s590 + $0x20] sm:$0xff] %vm631, %v4335
        %4344 = vst.msk [vmem:[%s590 + $0x28] sm:$0xff] %vm631, %v4336
        %4345 = vst.msk [vmem:[%s590 + $0x30] sm:$0xff] %vm631, %v4337
        %4346 = vst.msk [vmem:[%s590 + $0x38] sm:$0xff] %vm631, %v4338
        %s4347 = sand.u32 %s290, 1
        %s4348 = scalar_lea.sflag [#allocation5], %s4347
        %s4349 = sand.u32 %s290, 1
        %s4350 = smul.addr %s4349, 64
        %s4351 = scalar_lea.vmem [#allocation17], %s4350
        %s4352 = sand.u32 %s41, 1
        %s4353 = scalar_lea.sflag [#allocation19], %s4352
        %s4354 = sand.u32 %s316, 1
        %s4355 = smul.addr %s4354, 64
        %s4356 = scalar_lea.vmem [#allocation18], %s4355
        %s4357 = sand.u32 %s41, 1
        %s4358 = scalar_lea.sflag [#allocation19], %s4357
        %s4359 = sand.u32 %s342, 1
        %s4360 = smul.addr %s4359, 64
        %s4361 = scalar_lea.vmem [#allocation20], %s4360
        // Predicated region
        $region97: #{tpu_custom_call.1} parent=63 // pred_check
          %p4362 = pneg %p300
        $region98: #{tpu_custom_call.1} parent=63 // pred_check_branch
          %4364 = sbr.rel (%p4362) target = $region100
        $region99: #{tpu_custom_call.1} parent=63 // pred_region
          %s4365 = smul.u32 8, %s41
          %s4367 = ssub.s32 1024, 1024
          %4368 = vsyncadd %s4348, %s4367
          %s4369 = smul.addr %s4365, 128
          %s4370 = scalar_lea.hbm %s11, %s4369
          %s4371 = sshll.u32 %s4351, 4
          %s4372 = int_to_ptr.vmem [resolvable:$true] %s4371
          %4377 = dma.vmem_to_hbm [thread:$0]  %s4372, 1024, %s4370, %s4348, 128, 128, 8
        $region100: #{tpu_custom_call.1} parent=63 // pred_fallthru
          _
        // Predicated region
        $region101: #{tpu_custom_call.1} parent=63 // pred_check
          %p4378 = pneg %p326
        $region102: #{tpu_custom_call.1} parent=63 // pred_check_branch
          %4380 = sbr.rel (%p4378) target = $region104
        $region103: #{tpu_custom_call.1} parent=63 // pred_region
          %s4381 = smul.u32 8, %s41
          %s4383 = ssub.s32 1024, 1024
          %4384 = vsyncadd %s4353, %s4383
          %s4385 = smul.addr %s4381, 128
          %s4386 = scalar_lea.hbm %s12, %s4385
          %s4387 = sshll.u32 %s4356, 4
          %s4388 = int_to_ptr.vmem [resolvable:$true] %s4387
          %4393 = dma.vmem_to_hbm [thread:$0]  %s4388, 1024, %s4386, %s4353, 128, 128, 8
        $region104: #{tpu_custom_call.1} parent=63 // pred_fallthru
          _
        // Predicated region
        $region105: #{tpu_custom_call.1} parent=63 // pred_check
          %p4394 = pneg %p352
        $region106: #{tpu_custom_call.1} parent=63 // pred_check_branch
          %4396 = sbr.rel (%p4394) target = $region108
        $region107: #{tpu_custom_call.1} parent=63 // pred_region
          %s4397 = smul.u32 8, %s41
          %s4399 = ssub.s32 1024, 1024
          %4400 = vsyncadd %s4358, %s4399
          %s4401 = smul.addr %s4397, 128
          %s4402 = scalar_lea.hbm %s13, %s4401
          %s4403 = sshll.u32 %s4361, 4
          %s4404 = int_to_ptr.vmem [resolvable:$true] %s4403
          %4409 = dma.vmem_to_hbm [thread:$0]  %s4404, 1024, %s4402, %s4358, 128, 128, 8
        $region108: #{tpu_custom_call.1} parent=63 // pred_fallthru
          _
      $region64: #{tpu_custom_call.1} parent=5 // pred_fallthru
        _
      %p4410 = scmp.le.s32.totalorder 2, %s36
      // Predicated region
      $region109: #{tpu_custom_call.1} parent=5 // pred_check
        %p4411 = pneg %p4410
      $region110: #{tpu_custom_call.1} parent=5 // pred_check_branch
        %4413 = sbr.rel (%p4411) target = $region112
      $region111: #{tpu_custom_call.1} parent=5 // pred_region
        %s4414 = ssub.s32 %s36, 2
        // Predicated region
        $region113: #{tpu_custom_call.1} parent=111 // pred_check
          %p4415 = pneg %p306
        $region114: #{tpu_custom_call.1} parent=111 // pred_check_branch
          %4417 = sbr.rel (%p4415) target = $region116
        $region115: #{tpu_custom_call.1} parent=111 // pred_region
          %s4418 = sand.u32 %s291, 1
          %s4419 = scalar_lea.sflag [#allocation5], %s4418
          %s4420 = sand.u32 %s291, 1
          %s4421 = smul.addr %s4420, 64
          %s4422 = scalar_lea.vmem [#allocation17], %s4421
          %4423 = dma.done %s4419, 1024
        $region116: #{tpu_custom_call.1} parent=111 // pred_fallthru
          _
        // Predicated region
        $region117: #{tpu_custom_call.1} parent=111 // pred_check
          %p4424 = pneg %p332
        $region118: #{tpu_custom_call.1} parent=111 // pred_check_branch
          %4426 = sbr.rel (%p4424) target = $region120
        $region119: #{tpu_custom_call.1} parent=111 // pred_region
          %s4427 = sand.u32 %s42, 1
          %s4428 = scalar_lea.sflag [#allocation19], %s4427
          %s4429 = sand.u32 %s317, 1
          %s4430 = smul.addr %s4429, 64
          %s4431 = scalar_lea.vmem [#allocation18], %s4430
          %4432 = dma.done %s4428, 1024
        $region120: #{tpu_custom_call.1} parent=111 // pred_fallthru
          _
        // Predicated region
        $region121: #{tpu_custom_call.1} parent=111 // pred_check
          %p4433 = pneg %p358
        $region122: #{tpu_custom_call.1} parent=111 // pred_check_branch
          %4435 = sbr.rel (%p4433) target = $region124
        $region123: #{tpu_custom_call.1} parent=111 // pred_region
          %s4436 = sand.u32 %s42, 1
          %s4437 = scalar_lea.sflag [#allocation19], %s4436
          %s4438 = sand.u32 %s343, 1
          %s4439 = smul.addr %s4438, 64
          %s4440 = scalar_lea.vmem [#allocation20], %s4439
          %4441 = dma.done %s4437, 1024
        $region124: #{tpu_custom_call.1} parent=111 // pred_fallthru
          _
      $region112: #{tpu_custom_call.1} parent=5 // pred_fallthru
        _
    $region6: #{tpu_custom_call.1} parent=1 // loop_footer
      %s40 = sadd.s32 1, %s36
    $region7: #{tpu_custom_call.1} parent=1 // loop_footer_branch
      %35 = sbr.rel target = $region3
    $region8: #{tpu_custom_call.1} parent=1 // loop_exit
      _
    %4442 = vsyncpa [#allocation4], 1
    %s4443 = scalar_lea.sflag [#allocation4], 1
    %4444 = vsyncpa %s4443, 1
    %4445 = vsyncpa [#allocation7], 1
    %s4446 = scalar_lea.sflag [#allocation7], 1
    %4447 = vsyncpa %s4446, 1
    %4448 = vsyncpa [#allocation10], 1
    %4449 = vsyncpa [#allocation13], 1
    %4450 = vsyncpa [#allocation16], 1
    %4451 = vsyncpa [#allocation5], 1
    %s4452 = scalar_lea.sflag [#allocation5], 1
    %4453 = vsyncpa %s4452, 1
    %4454 = vsyncpa [#allocation19], 1
    %s4455 = scalar_lea.sflag [#allocation19], 1
    %4456 = vsyncpa %s4455, 1

</llo_original>
